<compile_context>
chip_gen: v6e
topology: v6e:2x2x1
jax: 0.10.0
libtpu: 0.0.40
codegen_flags: <defaults>
</compile_context>

<pallas_src>
import functools

import numpy as np
import jax
import jax.numpy as jnp
from jax import lax
from jax.experimental import pallas as pl
from jax.experimental.pallas import tpu as pltpu


def _upconv_band_kernel(x_ref, w_ref, b_ref, u_ref, o_ref, s_ref, *,
                        H, KW, TH, Wo, scale):
    # x_ref: (1, Cin, H, W)       original NCHW image of batch n (no upsample, no pad)
    # w_ref: (2, 2, Cout, KW*Cin) row-phase-merged, flattened weights
    # b_ref: (Cout, 1)
    # u_ref: (W, Wp)              one-hot column upsample + zero-pad operator
    # o_ref: (1, Cout, TH*Wo)     lane-dense output slab (output rows base..base+TH-1)
    # s_ref: (TR+2, KW*Cin, Wo)   VMEM scratch: per-source-row shift matrices
    jb = pl.program_id(1)
    TR = TH // scale
    i0 = jb * TR                       # first source row "i" of this band

    w00 = w_ref[0, 0]                  # even output rows, tap on source row i-1
    w01 = w_ref[0, 1]                  # even output rows, tap on source row i   (kh=1 + kh=2)
    w10 = w_ref[1, 0]                  # odd  output rows, tap on source row i   (kh=0 + kh=1)
    w11 = w_ref[1, 1]                  # odd  output rows, tap on source row i+1
    bias = b_ref[...]                  # (Cout, 1)
    upmat = u_ref[...]                 # (W, Wp)

    # Stage the TR+2 source rows this band touches (i0-1 .. i0+TR) as shift matrices:
    #   S_s[kw*Cin + ci, c] = upsampled_padded_row_s[ci, c + kw]   (all zeros if s is OOB).
    for t in range(TR + 2):
        s = i0 - 1 + t
        valid = jnp.logical_and(s >= 0, s <= H - 1)
        sc = jnp.clip(s, 0, H - 1)
        row = x_ref[0, :, pl.ds(sc, 1), :][:, 0, :]                       # (Cin, W) planar
        row = row * valid.astype(row.dtype)                               # zero OOB rows
        up = jnp.dot(row, upmat, preferred_element_type=jnp.float32)      # (Cin, Wp)
        s_ref[t] = jnp.concatenate(
            [up[:, kw:kw + Wo] for kw in range(KW)], axis=0)              # (KW*Cin, Wo)

    # Each output row = 2 merged-tap matmuls (K = KW*Cin) + bias, written lane-dense.
    for r in range(TH):
        il = r // scale                           # i - i0 (static)
        if r % scale == 0:                        # even output row: source rows i-1, i
            tA, tB, wA, wB = il, il + 1, w00, w01
        else:                                     # odd  output row: source rows i, i+1
            tA, tB, wA, wB = il + 1, il + 2, w10, w11
        acc = jnp.dot(wA, s_ref[tA], preferred_element_type=jnp.float32)
        acc = acc + jnp.dot(wB, s_ref[tB], preferred_element_type=jnp.float32)
        acc = acc + bias                                                   # (Cout, Wo)
        o_ref[0, :, pl.ds(r * Wo, Wo)] = acc.astype(o_ref.dtype)


def upsample_conv2d(x_nchw, weight_oihw, bias=None, *, scale=2, padding=1, stride=1):
    """Nearest-neighbor upsample by `scale`, then Conv2d (3x3, stride=1, pad=1, groups=1)."""
    # TODO(synk): only scale=2, 3x3 kernel, stride=1, padding=1, dilation=1, groups=1,
    # 'nearest' upsample and 'zeros' padding_mode are implemented by this kernel.
    N, Cin, H, W = x_nchw.shape
    Cout, Cin_w, KH, KW = weight_oihw.shape
    assert Cin_w == Cin and KH == 3 and KW == 3
    assert scale == 2 and stride == 1 and padding == 1

    Hup, Wup = H * scale, W * scale
    Ho = Hup + 2 * padding - KH + 1          # = 2H
    Wo = Wup + 2 * padding - KW + 1          # = 2W
    Wp = Wup + 2 * padding

    # Row-phase weight merge (nearest upsample duplicates rows, so kh taps collapse to 2).
    w_hw = jnp.transpose(weight_oihw, (2, 3, 1, 0)).astype(jnp.float32)   # (KH, KW, Cin, Cout)

    def _flat(g):                             # (KW, Cin, Cout) -> (Cout, KW*Cin)
        return jnp.transpose(g, (2, 0, 1)).reshape(Cout, KW * Cin)

    w_merged = jnp.stack([
        jnp.stack([_flat(w_hw[0]), _flat(w_hw[1] + w_hw[2])]),   # even output rows
        jnp.stack([_flat(w_hw[0] + w_hw[1]), _flat(w_hw[2])]),   # odd  output rows
    ])                                                            # (2, 2, Cout, KW*Cin)

    if bias is None:
        bias = jnp.zeros((Cout,), x_nchw.dtype)
    b2 = bias.reshape(Cout, 1).astype(jnp.float32)

    # One-hot column "nearest upsample + zero pad" operator: (Cin, W) @ upmat -> (Cin, Wp).
    q = np.arange(Wp)
    u = q - padding
    valid = (u >= 0) & (u < Wup)
    upmat = np.zeros((W, Wp), np.float32)
    upmat[(u[valid] // scale), q[valid]] = 1.0
    upmat = jnp.asarray(upmat)

    # Row-band size: largest convenient block whose lane extent (TH*Wo) stays 128-aligned.
    TH = Ho
    if Ho > 16:
        for cand in (16, 8, 4, 2):
            if Ho % cand == 0 and (cand * Wo) % 128 == 0:
                TH = cand
                break
    TR = TH // scale
    n_bands = Ho // TH

    # TODO(synk): for very large H*W*Cin the per-batch input block should be band-tiled
    # (halo fetch) so the double-buffered block fits v7x's 64 MiB VMEM.
    kern = functools.partial(_upconv_band_kernel, H=H, KW=KW, TH=TH, Wo=Wo, scale=scale)
    out_flat = pl.pallas_call(
        kern,
        out_shape=jax.ShapeDtypeStruct((N, Cout, Ho * Wo), x_nchw.dtype),
        grid=(N, n_bands),
        in_specs=[
            pl.BlockSpec((1, Cin, H, W), lambda n, jb: (n, 0, 0, 0)),
            pl.BlockSpec((2, 2, Cout, KW * Cin), lambda n, jb: (0, 0, 0, 0)),
            pl.BlockSpec((Cout, 1), lambda n, jb: (0, 0)),
            pl.BlockSpec((W, Wp), lambda n, jb: (0, 0)),
        ],
        out_specs=pl.BlockSpec((1, Cout, TH * Wo), lambda n, jb: (n, 0, jb)),
        scratch_shapes=[pltpu.VMEM((TR + 2, KW * Cin, Wo), jnp.float32)],
        compiler_params=pltpu.CompilerParams(
            dimension_semantics=("parallel", "parallel")),
    )(x_nchw, w_merged, b2, upmat)

    return out_flat.reshape(N, Cout, Ho, Wo)


if __name__ == "__main__":
    key = jax.random.PRNGKey(0)
    k_x, k_w, k_b = jax.random.split(key, 3)

    # Module config: in_channels=4, out_channels=8, kernel_size=3, stride=1,
    # padding=1, upsample_scale_factor=2, upsample_mode='nearest', bias=True.
    N, Cin, H, W = 2, 4, 16, 16
    Cout, KH, KW = 8, 3, 3

    x = jax.random.normal(k_x, (N, Cin, H, W), jnp.float32)
    fan_in = Cin * KH * KW
    bound = 1.0 / (fan_in ** 0.5)
    weight = jax.random.uniform(k_w, (Cout, Cin, KH, KW), jnp.float32, -bound, bound)
    bias = jax.random.uniform(k_b, (Cout,), jnp.float32, -bound, bound)

    out = upsample_conv2d(x, weight, bias, scale=2, padding=1, stride=1)
    out = jax.block_until_ready(out)

    # Reference (plain XLA) check of the same forward semantics.
    x_up = jnp.repeat(jnp.repeat(x, 2, axis=2), 2, axis=3)
    ref = lax.conv_general_dilated(
        x_up, weight, window_strides=(1, 1), padding=((1, 1), (1, 1)),
        dimension_numbers=("NCHW", "OIHW", "NCHW"))
    ref = ref + bias[None, :, None, None]

    assert out.shape == ref.shape == (N, Cout, 2 * H, 2 * W)
    assert jnp.allclose(out, ref, atol=1e-4, rtol=1e-4)
    print("KERNEL_OK")
</pallas_src>

<mosaic_0001>
module attributes {stable_mosaic.version = 11 : i64} {
  func.func @_upconv_band_kernel(%arg0: i32, %arg1: i32, %arg2: memref<1x4x16x16xf32, #tpu.memory_space<vmem>>, %arg3: memref<2x2x8x12xf32, #tpu.memory_space<vmem>>, %arg4: memref<8x1xf32, #tpu.memory_space<vmem>>, %arg5: memref<16x34xf32, #tpu.memory_space<vmem>>, %arg6: memref<1x8x512xf32, #tpu.memory_space<vmem>>, %arg7: memref<10x12x32xf32, #tpu.memory_space<vmem>>) attributes {dimension_semantics = [#tpu.dimension_semantics<parallel>, #tpu.dimension_semantics<parallel>], iteration_bounds = array<i64: 2, 2>, scalar_prefetch = 0 : i64, scratch_operands = 1 : i64, tpu.core_type = #tpu.core_type<tc>, window_params = [{transform_indices = @transform_0, window_bounds = array<i64: 1, 4, 16, 16>}, {pipeline_mode = #tpu.pipeline_mode<synchronous>, transform_indices = @transform_1, window_bounds = array<i64: 2, 2, 8, 12>}, {pipeline_mode = #tpu.pipeline_mode<synchronous>, transform_indices = @transform_2, window_bounds = array<i64: 8, 1>}, {pipeline_mode = #tpu.pipeline_mode<synchronous>, transform_indices = @transform_3, window_bounds = array<i64: 16, 34>}, {transform_indices = @transform_4, window_bounds = array<i64: 1, 8, 512>}]} {
    %c8_i32 = arith.constant 8 : i32
    %0 = arith.muli %arg1, %c8_i32 : i32
    %c0 = arith.constant 0 : index
    %c0_0 = arith.constant 0 : index
    %c0_1 = arith.constant 0 : index
    %c0_2 = arith.constant 0 : index
    %1 = vector.load %arg3[%c0, %c0_0, %c0_1, %c0_2] : memref<2x2x8x12xf32, #tpu.memory_space<vmem>>, vector<1x1x8x12xf32>
    %2 = vector.shape_cast %1 : vector<1x1x8x12xf32> to vector<8x12xf32>
    %c0_3 = arith.constant 0 : index
    %c1 = arith.constant 1 : index
    %c0_4 = arith.constant 0 : index
    %c0_5 = arith.constant 0 : index
    %3 = vector.load %arg3[%c0_3, %c1, %c0_4, %c0_5] : memref<2x2x8x12xf32, #tpu.memory_space<vmem>>, vector<1x1x8x12xf32>
    %4 = vector.shape_cast %3 : vector<1x1x8x12xf32> to vector<8x12xf32>
    %c1_6 = arith.constant 1 : index
    %c0_7 = arith.constant 0 : index
    %c0_8 = arith.constant 0 : index
    %c0_9 = arith.constant 0 : index
    %5 = vector.load %arg3[%c1_6, %c0_7, %c0_8, %c0_9] : memref<2x2x8x12xf32, #tpu.memory_space<vmem>>, vector<1x1x8x12xf32>
    %6 = vector.shape_cast %5 : vector<1x1x8x12xf32> to vector<8x12xf32>
    %c1_10 = arith.constant 1 : index
    %c1_11 = arith.constant 1 : index
    %c0_12 = arith.constant 0 : index
    %c0_13 = arith.constant 0 : index
    %7 = vector.load %arg3[%c1_10, %c1_11, %c0_12, %c0_13] : memref<2x2x8x12xf32, #tpu.memory_space<vmem>>, vector<1x1x8x12xf32>
    %8 = vector.shape_cast %7 : vector<1x1x8x12xf32> to vector<8x12xf32>
    %c0_14 = arith.constant 0 : index
    %c0_15 = arith.constant 0 : index
    %9 = vector.load %arg4[%c0_14, %c0_15] : memref<8x1xf32, #tpu.memory_space<vmem>>, vector<8x1xf32>
    %c0_16 = arith.constant 0 : index
    %c0_17 = arith.constant 0 : index
    %10 = vector.load %arg5[%c0_16, %c0_17] : memref<16x34xf32, #tpu.memory_space<vmem>>, vector<16x34xf32>
    %c1_i32 = arith.constant 1 : i32
    %11 = arith.subi %0, %c1_i32 : i32
    %c0_i32 = arith.constant 0 : i32
    %12 = arith.addi %11, %c0_i32 : i32
    %c0_i32_18 = arith.constant 0 : i32
    %13 = arith.cmpi sge, %12, %c0_i32_18 : i32
    %c15_i32 = arith.constant 15 : i32
    %14 = arith.cmpi sle, %12, %c15_i32 : i32
    %15 = arith.andi %13, %14 : i1
    %c0_i32_19 = arith.constant 0 : i32
    %c15_i32_20 = arith.constant 15 : i32
    %16 = arith.maxsi %c0_i32_19, %12 : i32
    %17 = arith.minsi %c15_i32_20, %16 : i32
    %c0_21 = arith.constant 0 : index
    %c0_22 = arith.constant 0 : index
    %18 = arith.index_cast %17 : i32 to index
    %c0_23 = arith.constant 0 : index
    %19 = vector.load %arg2[%c0_21, %c0_22, %18, %c0_23] : memref<1x4x16x16xf32, #tpu.memory_space<vmem>>, vector<1x4x1x16xf32>
    %20 = vector.shape_cast %19 : vector<1x4x1x16xf32> to vector<4x1x16xf32>
    %21 = vector.shape_cast %20 : vector<4x1x16xf32> to vector<4x16xf32>
    %22 = arith.extui %15 : i1 to i32
    %23 = arith.sitofp %22 : i32 to f32
    %24 = vector.broadcast %23 : f32 to vector<4x16xf32>
    %25 = arith.mulf %21, %24 : vector<4x16xf32>
    %cst = arith.constant dense<0.000000e+00> : vector<4x34xf32>
    %26 = tpu.matmul %25, %10, %cst {dimension_numbers = #tpu.dot_dimension_numbers<[1], [0], [0], [1], [0, 0, 1, 1], [], []>} : vector<4x16xf32>, vector<16x34xf32>, vector<4x34xf32> -> vector<4x34xf32>
    %27 = vector.extract_strided_slice %26 {offsets = [0, 0], sizes = [4, 32], strides = [1, 1]} : vector<4x34xf32> to vector<4x32xf32>
    %28 = vector.extract_strided_slice %26 {offsets = [0, 1], sizes = [4, 32], strides = [1, 1]} : vector<4x34xf32> to vector<4x32xf32>
    %29 = vector.extract_strided_slice %26 {offsets = [0, 2], sizes = [4, 32], strides = [1, 1]} : vector<4x34xf32> to vector<4x32xf32>
    %30 = tpu.concatenate %27, %28, %29 in 0 : vector<4x32xf32>, vector<4x32xf32>, vector<4x32xf32> -> vector<12x32xf32>
    %c0_24 = arith.constant 0 : index
    %c0_25 = arith.constant 0 : index
    %c0_26 = arith.constant 0 : index
    %31 = vector.load %arg7[%c0_24, %c0_25, %c0_26] : memref<10x12x32xf32, #tpu.memory_space<vmem>>, vector<1x12x32xf32>
    %32 = vector.shape_cast %31 : vector<1x12x32xf32> to vector<12x32xf32>
    %33 = vector.shape_cast %30 : vector<12x32xf32> to vector<1x12x32xf32>
    tpu.vector_store %arg7[%c0_24, %c0_25, %c0_26], %33 {strides = array<i32>} : memref<10x12x32xf32, #tpu.memory_space<vmem>>, vector<1x12x32xf32>,
    %c1_i32_27 = arith.constant 1 : i32
    %34 = arith.subi %0, %c1_i32_27 : i32
    %c1_i32_28 = arith.constant 1 : i32
    %35 = arith.addi %34, %c1_i32_28 : i32
    %c0_i32_29 = arith.constant 0 : i32
    %36 = arith.cmpi sge, %35, %c0_i32_29 : i32
    %c15_i32_30 = arith.constant 15 : i32
    %37 = arith.cmpi sle, %35, %c15_i32_30 : i32
    %38 = arith.andi %36, %37 : i1
    %c0_i32_31 = arith.constant 0 : i32
    %c15_i32_32 = arith.constant 15 : i32
    %39 = arith.maxsi %c0_i32_31, %35 : i32
    %40 = arith.minsi %c15_i32_32, %39 : i32
    %c0_33 = arith.constant 0 : index
    %c0_34 = arith.constant 0 : index
    %41 = arith.index_cast %40 : i32 to index
    %c0_35 = arith.constant 0 : index
    %42 = vector.load %arg2[%c0_33, %c0_34, %41, %c0_35] : memref<1x4x16x16xf32, #tpu.memory_space<vmem>>, vector<1x4x1x16xf32>
    %43 = vector.shape_cast %42 : vector<1x4x1x16xf32> to vector<4x1x16xf32>
    %44 = vector.shape_cast %43 : vector<4x1x16xf32> to vector<4x16xf32>
    %45 = arith.extui %38 : i1 to i32
    %46 = arith.sitofp %45 : i32 to f32
    %47 = vector.broadcast %46 : f32 to vector<4x16xf32>
    %48 = arith.mulf %44, %47 : vector<4x16xf32>
    %cst_36 = arith.constant dense<0.000000e+00> : vector<4x34xf32>
    %49 = tpu.matmul %48, %10, %cst_36 {dimension_numbers = #tpu.dot_dimension_numbers<[1], [0], [0], [1], [0, 0, 1, 1], [], []>} : vector<4x16xf32>, vector<16x34xf32>, vector<4x34xf32> -> vector<4x34xf32>
    %50 = vector.extract_strided_slice %49 {offsets = [0, 0], sizes = [4, 32], strides = [1, 1]} : vector<4x34xf32> to vector<4x32xf32>
    %51 = vector.extract_strided_slice %49 {offsets = [0, 1], sizes = [4, 32], strides = [1, 1]} : vector<4x34xf32> to vector<4x32xf32>
    %52 = vector.extract_strided_slice %49 {offsets = [0, 2], sizes = [4, 32], strides = [1, 1]} : vector<4x34xf32> to vector<4x32xf32>
    %53 = tpu.concatenate %50, %51, %52 in 0 : vector<4x32xf32>, vector<4x32xf32>, vector<4x32xf32> -> vector<12x32xf32>
    %c1_37 = arith.constant 1 : index
    %c0_38 = arith.constant 0 : index
    %c0_39 = arith.constant 0 : index
    %54 = vector.load %arg7[%c1_37, %c0_38, %c0_39] : memref<10x12x32xf32, #tpu.memory_space<vmem>>, vector<1x12x32xf32>
    %55 = vector.shape_cast %54 : vector<1x12x32xf32> to vector<12x32xf32>
    %56 = vector.shape_cast %53 : vector<12x32xf32> to vector<1x12x32xf32>
    tpu.vector_store %arg7[%c1_37, %c0_38, %c0_39], %56 {strides = array<i32>} : memref<10x12x32xf32, #tpu.memory_space<vmem>>, vector<1x12x32xf32>,
    %c1_i32_40 = arith.constant 1 : i32
    %57 = arith.subi %0, %c1_i32_40 : i32
    %c2_i32 = arith.constant 2 : i32
    %58 = arith.addi %57, %c2_i32 : i32
    %c0_i32_41 = arith.constant 0 : i32
    %59 = arith.cmpi sge, %58, %c0_i32_41 : i32
    %c15_i32_42 = arith.constant 15 : i32
    %60 = arith.cmpi sle, %58, %c15_i32_42 : i32
    %61 = arith.andi %59, %60 : i1
    %c0_i32_43 = arith.constant 0 : i32
    %c15_i32_44 = arith.constant 15 : i32
    %62 = arith.maxsi %c0_i32_43, %58 : i32
    %63 = arith.minsi %c15_i32_44, %62 : i32
    %c0_45 = arith.constant 0 : index
    %c0_46 = arith.constant 0 : index
    %64 = arith.index_cast %63 : i32 to index
    %c0_47 = arith.constant 0 : index
    %65 = vector.load %arg2[%c0_45, %c0_46, %64, %c0_47] : memref<1x4x16x16xf32, #tpu.memory_space<vmem>>, vector<1x4x1x16xf32>
    %66 = vector.shape_cast %65 : vector<1x4x1x16xf32> to vector<4x1x16xf32>
    %67 = vector.shape_cast %66 : vector<4x1x16xf32> to vector<4x16xf32>
    %68 = arith.extui %61 : i1 to i32
    %69 = arith.sitofp %68 : i32 to f32
    %70 = vector.broadcast %69 : f32 to vector<4x16xf32>
    %71 = arith.mulf %67, %70 : vector<4x16xf32>
    %cst_48 = arith.constant dense<0.000000e+00> : vector<4x34xf32>
    %72 = tpu.matmul %71, %10, %cst_48 {dimension_numbers = #tpu.dot_dimension_numbers<[1], [0], [0], [1], [0, 0, 1, 1], [], []>} : vector<4x16xf32>, vector<16x34xf32>, vector<4x34xf32> -> vector<4x34xf32>
    %73 = vector.extract_strided_slice %72 {offsets = [0, 0], sizes = [4, 32], strides = [1, 1]} : vector<4x34xf32> to vector<4x32xf32>
    %74 = vector.extract_strided_slice %72 {offsets = [0, 1], sizes = [4, 32], strides = [1, 1]} : vector<4x34xf32> to vector<4x32xf32>
    %75 = vector.extract_strided_slice %72 {offsets = [0, 2], sizes = [4, 32], strides = [1, 1]} : vector<4x34xf32> to vector<4x32xf32>
    %76 = tpu.concatenate %73, %74, %75 in 0 : vector<4x32xf32>, vector<4x32xf32>, vector<4x32xf32> -> vector<12x32xf32>
    %c2 = arith.constant 2 : index
    %c0_49 = arith.constant 0 : index
    %c0_50 = arith.constant 0 : index
    %77 = vector.load %arg7[%c2, %c0_49, %c0_50] : memref<10x12x32xf32, #tpu.memory_space<vmem>>, vector<1x12x32xf32>
    %78 = vector.shape_cast %77 : vector<1x12x32xf32> to vector<12x32xf32>
    %79 = vector.shape_cast %76 : vector<12x32xf32> to vector<1x12x32xf32>
    tpu.vector_store %arg7[%c2, %c0_49, %c0_50], %79 {strides = array<i32>} : memref<10x12x32xf32, #tpu.memory_space<vmem>>, vector<1x12x32xf32>,
    %c1_i32_51 = arith.constant 1 : i32
    %80 = arith.subi %0, %c1_i32_51 : i32
    %c3_i32 = arith.constant 3 : i32
    %81 = arith.addi %80, %c3_i32 : i32
    %c0_i32_52 = arith.constant 0 : i32
    %82 = arith.cmpi sge, %81, %c0_i32_52 : i32
    %c15_i32_53 = arith.constant 15 : i32
    %83 = arith.cmpi sle, %81, %c15_i32_53 : i32
    %84 = arith.andi %82, %83 : i1
    %c0_i32_54 = arith.constant 0 : i32
    %c15_i32_55 = arith.constant 15 : i32
    %85 = arith.maxsi %c0_i32_54, %81 : i32
    %86 = arith.minsi %c15_i32_55, %85 : i32
    %c0_56 = arith.constant 0 : index
    %c0_57 = arith.constant 0 : index
    %87 = arith.index_cast %86 : i32 to index
    %c0_58 = arith.constant 0 : index
    %88 = vector.load %arg2[%c0_56, %c0_57, %87, %c0_58] : memref<1x4x16x16xf32, #tpu.memory_space<vmem>>, vector<1x4x1x16xf32>
    %89 = vector.shape_cast %88 : vector<1x4x1x16xf32> to vector<4x1x16xf32>
    %90 = vector.shape_cast %89 : vector<4x1x16xf32> to vector<4x16xf32>
    %91 = arith.extui %84 : i1 to i32
    %92 = arith.sitofp %91 : i32 to f32
    %93 = vector.broadcast %92 : f32 to vector<4x16xf32>
    %94 = arith.mulf %90, %93 : vector<4x16xf32>
    %cst_59 = arith.constant dense<0.000000e+00> : vector<4x34xf32>
    %95 = tpu.matmul %94, %10, %cst_59 {dimension_numbers = #tpu.dot_dimension_numbers<[1], [0], [0], [1], [0, 0, 1, 1], [], []>} : vector<4x16xf32>, vector<16x34xf32>, vector<4x34xf32> -> vector<4x34xf32>
    %96 = vector.extract_strided_slice %95 {offsets = [0, 0], sizes = [4, 32], strides = [1, 1]} : vector<4x34xf32> to vector<4x32xf32>
    %97 = vector.extract_strided_slice %95 {offsets = [0, 1], sizes = [4, 32], strides = [1, 1]} : vector<4x34xf32> to vector<4x32xf32>
    %98 = vector.extract_strided_slice %95 {offsets = [0, 2], sizes = [4, 32], strides = [1, 1]} : vector<4x34xf32> to vector<4x32xf32>
    %99 = tpu.concatenate %96, %97, %98 in 0 : vector<4x32xf32>, vector<4x32xf32>, vector<4x32xf32> -> vector<12x32xf32>
    %c3 = arith.constant 3 : index
    %c0_60 = arith.constant 0 : index
    %c0_61 = arith.constant 0 : index
    %100 = vector.load %arg7[%c3, %c0_60, %c0_61] : memref<10x12x32xf32, #tpu.memory_space<vmem>>, vector<1x12x32xf32>
    %101 = vector.shape_cast %100 : vector<1x12x32xf32> to vector<12x32xf32>
    %102 = vector.shape_cast %99 : vector<12x32xf32> to vector<1x12x32xf32>
    tpu.vector_store %arg7[%c3, %c0_60, %c0_61], %102 {strides = array<i32>} : memref<10x12x32xf32, #tpu.memory_space<vmem>>, vector<1x12x32xf32>,
    %c1_i32_62 = arith.constant 1 : i32
    %103 = arith.subi %0, %c1_i32_62 : i32
    %c4_i32 = arith.constant 4 : i32
    %104 = arith.addi %103, %c4_i32 : i32
    %c0_i32_63 = arith.constant 0 : i32
    %105 = arith.cmpi sge, %104, %c0_i32_63 : i32
    %c15_i32_64 = arith.constant 15 : i32
    %106 = arith.cmpi sle, %104, %c15_i32_64 : i32
    %107 = arith.andi %105, %106 : i1
    %c0_i32_65 = arith.constant 0 : i32
    %c15_i32_66 = arith.constant 15 : i32
    %108 = arith.maxsi %c0_i32_65, %104 : i32
    %109 = arith.minsi %c15_i32_66, %108 : i32
    %c0_67 = arith.constant 0 : index
    %c0_68 = arith.constant 0 : index
    %110 = arith.index_cast %109 : i32 to index
    %c0_69 = arith.constant 0 : index
    %111 = vector.load %arg2[%c0_67, %c0_68, %110, %c0_69] : memref<1x4x16x16xf32, #tpu.memory_space<vmem>>, vector<1x4x1x16xf32>
    %112 = vector.shape_cast %111 : vector<1x4x1x16xf32> to vector<4x1x16xf32>
    %113 = vector.shape_cast %112 : vector<4x1x16xf32> to vector<4x16xf32>
    %114 = arith.extui %107 : i1 to i32
    %115 = arith.sitofp %114 : i32 to f32
    %116 = vector.broadcast %115 : f32 to vector<4x16xf32>
    %117 = arith.mulf %113, %116 : vector<4x16xf32>
    %cst_70 = arith.constant dense<0.000000e+00> : vector<4x34xf32>
    %118 = tpu.matmul %117, %10, %cst_70 {dimension_numbers = #tpu.dot_dimension_numbers<[1], [0], [0], [1], [0, 0, 1, 1], [], []>} : vector<4x16xf32>, vector<16x34xf32>, vector<4x34xf32> -> vector<4x34xf32>
    %119 = vector.extract_strided_slice %118 {offsets = [0, 0], sizes = [4, 32], strides = [1, 1]} : vector<4x34xf32> to vector<4x32xf32>
    %120 = vector.extract_strided_slice %118 {offsets = [0, 1], sizes = [4, 32], strides = [1, 1]} : vector<4x34xf32> to vector<4x32xf32>
    %121 = vector.extract_strided_slice %118 {offsets = [0, 2], sizes = [4, 32], strides = [1, 1]} : vector<4x34xf32> to vector<4x32xf32>
    %122 = tpu.concatenate %119, %120, %121 in 0 : vector<4x32xf32>, vector<4x32xf32>, vector<4x32xf32> -> vector<12x32xf32>
    %c4 = arith.constant 4 : index
    %c0_71 = arith.constant 0 : index
    %c0_72 = arith.constant 0 : index
    %123 = vector.load %arg7[%c4, %c0_71, %c0_72] : memref<10x12x32xf32, #tpu.memory_space<vmem>>, vector<1x12x32xf32>
    %124 = vector.shape_cast %123 : vector<1x12x32xf32> to vector<12x32xf32>
    %125 = vector.shape_cast %122 : vector<12x32xf32> to vector<1x12x32xf32>
    tpu.vector_store %arg7[%c4, %c0_71, %c0_72], %125 {strides = array<i32>} : memref<10x12x32xf32, #tpu.memory_space<vmem>>, vector<1x12x32xf32>,
    %c1_i32_73 = arith.constant 1 : i32
    %126 = arith.subi %0, %c1_i32_73 : i32
    %c5_i32 = arith.constant 5 : i32
    %127 = arith.addi %126, %c5_i32 : i32
    %c0_i32_74 = arith.constant 0 : i32
    %128 = arith.cmpi sge, %127, %c0_i32_74 : i32
    %c15_i32_75 = arith.constant 15 : i32
    %129 = arith.cmpi sle, %127, %c15_i32_75 : i32
    %130 = arith.andi %128, %129 : i1
    %c0_i32_76 = arith.constant 0 : i32
    %c15_i32_77 = arith.constant 15 : i32
    %131 = arith.maxsi %c0_i32_76, %127 : i32
    %132 = arith.minsi %c15_i32_77, %131 : i32
    %c0_78 = arith.constant 0 : index
    %c0_79 = arith.constant 0 : index
    %133 = arith.index_cast %132 : i32 to index
    %c0_80 = arith.constant 0 : index
    %134 = vector.load %arg2[%c0_78, %c0_79, %133, %c0_80] : memref<1x4x16x16xf32, #tpu.memory_space<vmem>>, vector<1x4x1x16xf32>
    %135 = vector.shape_cast %134 : vector<1x4x1x16xf32> to vector<4x1x16xf32>
    %136 = vector.shape_cast %135 : vector<4x1x16xf32> to vector<4x16xf32>
    %137 = arith.extui %130 : i1 to i32
    %138 = arith.sitofp %137 : i32 to f32
    %139 = vector.broadcast %138 : f32 to vector<4x16xf32>
    %140 = arith.mulf %136, %139 : vector<4x16xf32>
    %cst_81 = arith.constant dense<0.000000e+00> : vector<4x34xf32>
    %141 = tpu.matmul %140, %10, %cst_81 {dimension_numbers = #tpu.dot_dimension_numbers<[1], [0], [0], [1], [0, 0, 1, 1], [], []>} : vector<4x16xf32>, vector<16x34xf32>, vector<4x34xf32> -> vector<4x34xf32>
    %142 = vector.extract_strided_slice %141 {offsets = [0, 0], sizes = [4, 32], strides = [1, 1]} : vector<4x34xf32> to vector<4x32xf32>
    %143 = vector.extract_strided_slice %141 {offsets = [0, 1], sizes = [4, 32], strides = [1, 1]} : vector<4x34xf32> to vector<4x32xf32>
    %144 = vector.extract_strided_slice %141 {offsets = [0, 2], sizes = [4, 32], strides = [1, 1]} : vector<4x34xf32> to vector<4x32xf32>
    %145 = tpu.concatenate %142, %143, %144 in 0 : vector<4x32xf32>, vector<4x32xf32>, vector<4x32xf32> -> vector<12x32xf32>
    %c5 = arith.constant 5 : index
    %c0_82 = arith.constant 0 : index
    %c0_83 = arith.constant 0 : index
    %146 = vector.load %arg7[%c5, %c0_82, %c0_83] : memref<10x12x32xf32, #tpu.memory_space<vmem>>, vector<1x12x32xf32>
    %147 = vector.shape_cast %146 : vector<1x12x32xf32> to vector<12x32xf32>
    %148 = vector.shape_cast %145 : vector<12x32xf32> to vector<1x12x32xf32>
    tpu.vector_store %arg7[%c5, %c0_82, %c0_83], %148 {strides = array<i32>} : memref<10x12x32xf32, #tpu.memory_space<vmem>>, vector<1x12x32xf32>,
    %c1_i32_84 = arith.constant 1 : i32
    %149 = arith.subi %0, %c1_i32_84 : i32
    %c6_i32 = arith.constant 6 : i32
    %150 = arith.addi %149, %c6_i32 : i32
    %c0_i32_85 = arith.constant 0 : i32
    %151 = arith.cmpi sge, %150, %c0_i32_85 : i32
    %c15_i32_86 = arith.constant 15 : i32
    %152 = arith.cmpi sle, %150, %c15_i32_86 : i32
    %153 = arith.andi %151, %152 : i1
    %c0_i32_87 = arith.constant 0 : i32
    %c15_i32_88 = arith.constant 15 : i32
    %154 = arith.maxsi %c0_i32_87, %150 : i32
    %155 = arith.minsi %c15_i32_88, %154 : i32
    %c0_89 = arith.constant 0 : index
    %c0_90 = arith.constant 0 : index
    %156 = arith.index_cast %155 : i32 to index
    %c0_91 = arith.constant 0 : index
    %157 = vector.load %arg2[%c0_89, %c0_90, %156, %c0_91] : memref<1x4x16x16xf32, #tpu.memory_space<vmem>>, vector<1x4x1x16xf32>
    %158 = vector.shape_cast %157 : vector<1x4x1x16xf32> to vector<4x1x16xf32>
    %159 = vector.shape_cast %158 : vector<4x1x16xf32> to vector<4x16xf32>
    %160 = arith.extui %153 : i1 to i32
    %161 = arith.sitofp %160 : i32 to f32
    %162 = vector.broadcast %161 : f32 to vector<4x16xf32>
    %163 = arith.mulf %159, %162 : vector<4x16xf32>
    %cst_92 = arith.constant dense<0.000000e+00> : vector<4x34xf32>
    %164 = tpu.matmul %163, %10, %cst_92 {dimension_numbers = #tpu.dot_dimension_numbers<[1], [0], [0], [1], [0, 0, 1, 1], [], []>} : vector<4x16xf32>, vector<16x34xf32>, vector<4x34xf32> -> vector<4x34xf32>
    %165 = vector.extract_strided_slice %164 {offsets = [0, 0], sizes = [4, 32], strides = [1, 1]} : vector<4x34xf32> to vector<4x32xf32>
    %166 = vector.extract_strided_slice %164 {offsets = [0, 1], sizes = [4, 32], strides = [1, 1]} : vector<4x34xf32> to vector<4x32xf32>
    %167 = vector.extract_strided_slice %164 {offsets = [0, 2], sizes = [4, 32], strides = [1, 1]} : vector<4x34xf32> to vector<4x32xf32>
    %168 = tpu.concatenate %165, %166, %167 in 0 : vector<4x32xf32>, vector<4x32xf32>, vector<4x32xf32> -> vector<12x32xf32>
    %c6 = arith.constant 6 : index
    %c0_93 = arith.constant 0 : index
    %c0_94 = arith.constant 0 : index
    %169 = vector.load %arg7[%c6, %c0_93, %c0_94] : memref<10x12x32xf32, #tpu.memory_space<vmem>>, vector<1x12x32xf32>
    %170 = vector.shape_cast %169 : vector<1x12x32xf32> to vector<12x32xf32>
    %171 = vector.shape_cast %168 : vector<12x32xf32> to vector<1x12x32xf32>
    tpu.vector_store %arg7[%c6, %c0_93, %c0_94], %171 {strides = array<i32>} : memref<10x12x32xf32, #tpu.memory_space<vmem>>, vector<1x12x32xf32>,
    %c1_i32_95 = arith.constant 1 : i32
    %172 = arith.subi %0, %c1_i32_95 : i32
    %c7_i32 = arith.constant 7 : i32
    %173 = arith.addi %172, %c7_i32 : i32
    %c0_i32_96 = arith.constant 0 : i32
    %174 = arith.cmpi sge, %173, %c0_i32_96 : i32
    %c15_i32_97 = arith.constant 15 : i32
    %175 = arith.cmpi sle, %173, %c15_i32_97 : i32
    %176 = arith.andi %174, %175 : i1
    %c0_i32_98 = arith.constant 0 : i32
    %c15_i32_99 = arith.constant 15 : i32
    %177 = arith.maxsi %c0_i32_98, %173 : i32
    %178 = arith.minsi %c15_i32_99, %177 : i32
    %c0_100 = arith.constant 0 : index
    %c0_101 = arith.constant 0 : index
    %179 = arith.index_cast %178 : i32 to index
    %c0_102 = arith.constant 0 : index
    %180 = vector.load %arg2[%c0_100, %c0_101, %179, %c0_102] : memref<1x4x16x16xf32, #tpu.memory_space<vmem>>, vector<1x4x1x16xf32>
    %181 = vector.shape_cast %180 : vector<1x4x1x16xf32> to vector<4x1x16xf32>
    %182 = vector.shape_cast %181 : vector<4x1x16xf32> to vector<4x16xf32>
    %183 = arith.extui %176 : i1 to i32
    %184 = arith.sitofp %183 : i32 to f32
    %185 = vector.broadcast %184 : f32 to vector<4x16xf32>
    %186 = arith.mulf %182, %185 : vector<4x16xf32>
    %cst_103 = arith.constant dense<0.000000e+00> : vector<4x34xf32>
    %187 = tpu.matmul %186, %10, %cst_103 {dimension_numbers = #tpu.dot_dimension_numbers<[1], [0], [0], [1], [0, 0, 1, 1], [], []>} : vector<4x16xf32>, vector<16x34xf32>, vector<4x34xf32> -> vector<4x34xf32>
    %188 = vector.extract_strided_slice %187 {offsets = [0, 0], sizes = [4, 32], strides = [1, 1]} : vector<4x34xf32> to vector<4x32xf32>
    %189 = vector.extract_strided_slice %187 {offsets = [0, 1], sizes = [4, 32], strides = [1, 1]} : vector<4x34xf32> to vector<4x32xf32>
    %190 = vector.extract_strided_slice %187 {offsets = [0, 2], sizes = [4, 32], strides = [1, 1]} : vector<4x34xf32> to vector<4x32xf32>
    %191 = tpu.concatenate %188, %189, %190 in 0 : vector<4x32xf32>, vector<4x32xf32>, vector<4x32xf32> -> vector<12x32xf32>
    %c7 = arith.constant 7 : index
    %c0_104 = arith.constant 0 : index
    %c0_105 = arith.constant 0 : index
    %192 = vector.load %arg7[%c7, %c0_104, %c0_105] : memref<10x12x32xf32, #tpu.memory_space<vmem>>, vector<1x12x32xf32>
    %193 = vector.shape_cast %192 : vector<1x12x32xf32> to vector<12x32xf32>
    %194 = vector.shape_cast %191 : vector<12x32xf32> to vector<1x12x32xf32>
    tpu.vector_store %arg7[%c7, %c0_104, %c0_105], %194 {strides = array<i32>} : memref<10x12x32xf32, #tpu.memory_space<vmem>>, vector<1x12x32xf32>,
    %c1_i32_106 = arith.constant 1 : i32
    %195 = arith.subi %0, %c1_i32_106 : i32
    %c8_i32_107 = arith.constant 8 : i32
    %196 = arith.addi %195, %c8_i32_107 : i32
    %c0_i32_108 = arith.constant 0 : i32
    %197 = arith.cmpi sge, %196, %c0_i32_108 : i32
    %c15_i32_109 = arith.constant 15 : i32
    %198 = arith.cmpi sle, %196, %c15_i32_109 : i32
    %199 = arith.andi %197, %198 : i1
    %c0_i32_110 = arith.constant 0 : i32
    %c15_i32_111 = arith.constant 15 : i32
    %200 = arith.maxsi %c0_i32_110, %196 : i32
    %201 = arith.minsi %c15_i32_111, %200 : i32
    %c0_112 = arith.constant 0 : index
    %c0_113 = arith.constant 0 : index
    %202 = arith.index_cast %201 : i32 to index
    %c0_114 = arith.constant 0 : index
    %203 = vector.load %arg2[%c0_112, %c0_113, %202, %c0_114] : memref<1x4x16x16xf32, #tpu.memory_space<vmem>>, vector<1x4x1x16xf32>
    %204 = vector.shape_cast %203 : vector<1x4x1x16xf32> to vector<4x1x16xf32>
    %205 = vector.shape_cast %204 : vector<4x1x16xf32> to vector<4x16xf32>
    %206 = arith.extui %199 : i1 to i32
    %207 = arith.sitofp %206 : i32 to f32
    %208 = vector.broadcast %207 : f32 to vector<4x16xf32>
    %209 = arith.mulf %205, %208 : vector<4x16xf32>
    %cst_115 = arith.constant dense<0.000000e+00> : vector<4x34xf32>
    %210 = tpu.matmul %209, %10, %cst_115 {dimension_numbers = #tpu.dot_dimension_numbers<[1], [0], [0], [1], [0, 0, 1, 1], [], []>} : vector<4x16xf32>, vector<16x34xf32>, vector<4x34xf32> -> vector<4x34xf32>
    %211 = vector.extract_strided_slice %210 {offsets = [0, 0], sizes = [4, 32], strides = [1, 1]} : vector<4x34xf32> to vector<4x32xf32>
    %212 = vector.extract_strided_slice %210 {offsets = [0, 1], sizes = [4, 32], strides = [1, 1]} : vector<4x34xf32> to vector<4x32xf32>
    %213 = vector.extract_strided_slice %210 {offsets = [0, 2], sizes = [4, 32], strides = [1, 1]} : vector<4x34xf32> to vector<4x32xf32>
    %214 = tpu.concatenate %211, %212, %213 in 0 : vector<4x32xf32>, vector<4x32xf32>, vector<4x32xf32> -> vector<12x32xf32>
    %c8 = arith.constant 8 : index
    %c0_116 = arith.constant 0 : index
    %c0_117 = arith.constant 0 : index
    %215 = vector.load %arg7[%c8, %c0_116, %c0_117] : memref<10x12x32xf32, #tpu.memory_space<vmem>>, vector<1x12x32xf32>
    %216 = vector.shape_cast %215 : vector<1x12x32xf32> to vector<12x32xf32>
    %217 = vector.shape_cast %214 : vector<12x32xf32> to vector<1x12x32xf32>
    tpu.vector_store %arg7[%c8, %c0_116, %c0_117], %217 {strides = array<i32>} : memref<10x12x32xf32, #tpu.memory_space<vmem>>, vector<1x12x32xf32>,
    %c1_i32_118 = arith.constant 1 : i32
    %218 = arith.subi %0, %c1_i32_118 : i32
    %c9_i32 = arith.constant 9 : i32
    %219 = arith.addi %218, %c9_i32 : i32
    %c0_i32_119 = arith.constant 0 : i32
    %220 = arith.cmpi sge, %219, %c0_i32_119 : i32
    %c15_i32_120 = arith.constant 15 : i32
    %221 = arith.cmpi sle, %219, %c15_i32_120 : i32
    %222 = arith.andi %220, %221 : i1
    %c0_i32_121 = arith.constant 0 : i32
    %c15_i32_122 = arith.constant 15 : i32
    %223 = arith.maxsi %c0_i32_121, %219 : i32
    %224 = arith.minsi %c15_i32_122, %223 : i32
    %c0_123 = arith.constant 0 : index
    %c0_124 = arith.constant 0 : index
    %225 = arith.index_cast %224 : i32 to index
    %c0_125 = arith.constant 0 : index
    %226 = vector.load %arg2[%c0_123, %c0_124, %225, %c0_125] : memref<1x4x16x16xf32, #tpu.memory_space<vmem>>, vector<1x4x1x16xf32>
    %227 = vector.shape_cast %226 : vector<1x4x1x16xf32> to vector<4x1x16xf32>
    %228 = vector.shape_cast %227 : vector<4x1x16xf32> to vector<4x16xf32>
    %229 = arith.extui %222 : i1 to i32
    %230 = arith.sitofp %229 : i32 to f32
    %231 = vector.broadcast %230 : f32 to vector<4x16xf32>
    %232 = arith.mulf %228, %231 : vector<4x16xf32>
    %cst_126 = arith.constant dense<0.000000e+00> : vector<4x34xf32>
    %233 = tpu.matmul %232, %10, %cst_126 {dimension_numbers = #tpu.dot_dimension_numbers<[1], [0], [0], [1], [0, 0, 1, 1], [], []>} : vector<4x16xf32>, vector<16x34xf32>, vector<4x34xf32> -> vector<4x34xf32>
    %234 = vector.extract_strided_slice %233 {offsets = [0, 0], sizes = [4, 32], strides = [1, 1]} : vector<4x34xf32> to vector<4x32xf32>
    %235 = vector.extract_strided_slice %233 {offsets = [0, 1], sizes = [4, 32], strides = [1, 1]} : vector<4x34xf32> to vector<4x32xf32>
    %236 = vector.extract_strided_slice %233 {offsets = [0, 2], sizes = [4, 32], strides = [1, 1]} : vector<4x34xf32> to vector<4x32xf32>
    %237 = tpu.concatenate %234, %235, %236 in 0 : vector<4x32xf32>, vector<4x32xf32>, vector<4x32xf32> -> vector<12x32xf32>
    %c9 = arith.constant 9 : index
    %c0_127 = arith.constant 0 : index
    %c0_128 = arith.constant 0 : index
    %238 = vector.load %arg7[%c9, %c0_127, %c0_128] : memref<10x12x32xf32, #tpu.memory_space<vmem>>, vector<1x12x32xf32>
    %239 = vector.shape_cast %238 : vector<1x12x32xf32> to vector<12x32xf32>
    %240 = vector.shape_cast %237 : vector<12x32xf32> to vector<1x12x32xf32>
    tpu.vector_store %arg7[%c9, %c0_127, %c0_128], %240 {strides = array<i32>} : memref<10x12x32xf32, #tpu.memory_space<vmem>>, vector<1x12x32xf32>,
    %c0_129 = arith.constant 0 : index
    %c0_130 = arith.constant 0 : index
    %c0_131 = arith.constant 0 : index
    %241 = vector.load %arg7[%c0_129, %c0_130, %c0_131] : memref<10x12x32xf32, #tpu.memory_space<vmem>>, vector<1x12x32xf32>
    %242 = vector.shape_cast %241 : vector<1x12x32xf32> to vector<12x32xf32>
    %cst_132 = arith.constant dense<0.000000e+00> : vector<8x32xf32>
    %243 = tpu.matmul %2, %242, %cst_132 {dimension_numbers = #tpu.dot_dimension_numbers<[1], [0], [0], [1], [0, 0, 1, 1], [], []>} : vector<8x12xf32>, vector<12x32xf32>, vector<8x32xf32> -> vector<8x32xf32>
    %c1_133 = arith.constant 1 : index
    %c0_134 = arith.constant 0 : index
    %c0_135 = arith.constant 0 : index
    %244 = vector.load %arg7[%c1_133, %c0_134, %c0_135] : memref<10x12x32xf32, #tpu.memory_space<vmem>>, vector<1x12x32xf32>
    %245 = vector.shape_cast %244 : vector<1x12x32xf32> to vector<12x32xf32>
    %cst_136 = arith.constant dense<0.000000e+00> : vector<8x32xf32>
    %246 = tpu.matmul %4, %245, %cst_136 {dimension_numbers = #tpu.dot_dimension_numbers<[1], [0], [0], [1], [0, 0, 1, 1], [], []>} : vector<8x12xf32>, vector<12x32xf32>, vector<8x32xf32> -> vector<8x32xf32>
    %247 = arith.addf %243, %246 : vector<8x32xf32>
    %248 = vector.broadcast %9 : vector<8x1xf32> to vector<8x32xf32>
    %249 = arith.addf %247, %248 : vector<8x32xf32>
    %c0_137 = arith.constant 0 : index
    %c0_138 = arith.constant 0 : index
    %c0_139 = arith.constant 0 : index
    %250 = vector.load %arg6[%c0_137, %c0_138, %c0_139] : memref<1x8x512xf32, #tpu.memory_space<vmem>>, vector<1x8x32xf32>
    %251 = vector.shape_cast %250 : vector<1x8x32xf32> to vector<8x32xf32>
    %252 = vector.shape_cast %249 : vector<8x32xf32> to vector<1x8x32xf32>
    tpu.vector_store %arg6[%c0_137, %c0_138, %c0_139], %252 {strides = array<i32>} : memref<1x8x512xf32, #tpu.memory_space<vmem>>, vector<1x8x32xf32>,
    %c1_140 = arith.constant 1 : index
    %c0_141 = arith.constant 0 : index
    %c0_142 = arith.constant 0 : index
    %253 = vector.load %arg7[%c1_140, %c0_141, %c0_142] : memref<10x12x32xf32, #tpu.memory_space<vmem>>, vector<1x12x32xf32>
    %254 = vector.shape_cast %253 : vector<1x12x32xf32> to vector<12x32xf32>
    %cst_143 = arith.constant dense<0.000000e+00> : vector<8x32xf32>
    %255 = tpu.matmul %6, %254, %cst_143 {dimension_numbers = #tpu.dot_dimension_numbers<[1], [0], [0], [1], [0, 0, 1, 1], [], []>} : vector<8x12xf32>, vector<12x32xf32>, vector<8x32xf32> -> vector<8x32xf32>
    %c2_144 = arith.constant 2 : index
    %c0_145 = arith.constant 0 : index
    %c0_146 = arith.constant 0 : index
    %256 = vector.load %arg7[%c2_144, %c0_145, %c0_146] : memref<10x12x32xf32, #tpu.memory_space<vmem>>, vector<1x12x32xf32>
    %257 = vector.shape_cast %256 : vector<1x12x32xf32> to vector<12x32xf32>
    %cst_147 = arith.constant dense<0.000000e+00> : vector<8x32xf32>
    %258 = tpu.matmul %8, %257, %cst_147 {dimension_numbers = #tpu.dot_dimension_numbers<[1], [0], [0], [1], [0, 0, 1, 1], [], []>} : vector<8x12xf32>, vector<12x32xf32>, vector<8x32xf32> -> vector<8x32xf32>
    %259 = arith.addf %255, %258 : vector<8x32xf32>
    %260 = vector.broadcast %9 : vector<8x1xf32> to vector<8x32xf32>
    %261 = arith.addf %259, %260 : vector<8x32xf32>
    %c0_148 = arith.constant 0 : index
    %c0_149 = arith.constant 0 : index
    %c32 = arith.constant 32 : index
    %262 = vector.load %arg6[%c0_148, %c0_149, %c32] : memref<1x8x512xf32, #tpu.memory_space<vmem>>, vector<1x8x32xf32>
    %263 = vector.shape_cast %262 : vector<1x8x32xf32> to vector<8x32xf32>
    %264 = vector.shape_cast %261 : vector<8x32xf32> to vector<1x8x32xf32>
    tpu.vector_store %arg6[%c0_148, %c0_149, %c32], %264 {strides = array<i32>} : memref<1x8x512xf32, #tpu.memory_space<vmem>>, vector<1x8x32xf32>,
    %c1_150 = arith.constant 1 : index
    %c0_151 = arith.constant 0 : index
    %c0_152 = arith.constant 0 : index
    %265 = vector.load %arg7[%c1_150, %c0_151, %c0_152] : memref<10x12x32xf32, #tpu.memory_space<vmem>>, vector<1x12x32xf32>
    %266 = vector.shape_cast %265 : vector<1x12x32xf32> to vector<12x32xf32>
    %cst_153 = arith.constant dense<0.000000e+00> : vector<8x32xf32>
    %267 = tpu.matmul %2, %266, %cst_153 {dimension_numbers = #tpu.dot_dimension_numbers<[1], [0], [0], [1], [0, 0, 1, 1], [], []>} : vector<8x12xf32>, vector<12x32xf32>, vector<8x32xf32> -> vector<8x32xf32>
    %c2_154 = arith.constant 2 : index
    %c0_155 = arith.constant 0 : index
    %c0_156 = arith.constant 0 : index
    %268 = vector.load %arg7[%c2_154, %c0_155, %c0_156] : memref<10x12x32xf32, #tpu.memory_space<vmem>>, vector<1x12x32xf32>
    %269 = vector.shape_cast %268 : vector<1x12x32xf32> to vector<12x32xf32>
    %cst_157 = arith.constant dense<0.000000e+00> : vector<8x32xf32>
    %270 = tpu.matmul %4, %269, %cst_157 {dimension_numbers = #tpu.dot_dimension_numbers<[1], [0], [0], [1], [0, 0, 1, 1], [], []>} : vector<8x12xf32>, vector<12x32xf32>, vector<8x32xf32> -> vector<8x32xf32>
    %271 = arith.addf %267, %270 : vector<8x32xf32>
    %272 = vector.broadcast %9 : vector<8x1xf32> to vector<8x32xf32>
    %273 = arith.addf %271, %272 : vector<8x32xf32>
    %c0_158 = arith.constant 0 : index
    %c0_159 = arith.constant 0 : index
    %c64 = arith.constant 64 : index
    %274 = vector.load %arg6[%c0_158, %c0_159, %c64] : memref<1x8x512xf32, #tpu.memory_space<vmem>>, vector<1x8x32xf32>
    %275 = vector.shape_cast %274 : vector<1x8x32xf32> to vector<8x32xf32>
    %276 = vector.shape_cast %273 : vector<8x32xf32> to vector<1x8x32xf32>
    tpu.vector_store %arg6[%c0_158, %c0_159, %c64], %276 {strides = array<i32>} : memref<1x8x512xf32, #tpu.memory_space<vmem>>, vector<1x8x32xf32>,
    %c2_160 = arith.constant 2 : index
    %c0_161 = arith.constant 0 : index
    %c0_162 = arith.constant 0 : index
    %277 = vector.load %arg7[%c2_160, %c0_161, %c0_162] : memref<10x12x32xf32, #tpu.memory_space<vmem>>, vector<1x12x32xf32>
    %278 = vector.shape_cast %277 : vector<1x12x32xf32> to vector<12x32xf32>
    %cst_163 = arith.constant dense<0.000000e+00> : vector<8x32xf32>
    %279 = tpu.matmul %6, %278, %cst_163 {dimension_numbers = #tpu.dot_dimension_numbers<[1], [0], [0], [1], [0, 0, 1, 1], [], []>} : vector<8x12xf32>, vector<12x32xf32>, vector<8x32xf32> -> vector<8x32xf32>
    %c3_164 = arith.constant 3 : index
    %c0_165 = arith.constant 0 : index
    %c0_166 = arith.constant 0 : index
    %280 = vector.load %arg7[%c3_164, %c0_165, %c0_166] : memref<10x12x32xf32, #tpu.memory_space<vmem>>, vector<1x12x32xf32>
    %281 = vector.shape_cast %280 : vector<1x12x32xf32> to vector<12x32xf32>
    %cst_167 = arith.constant dense<0.000000e+00> : vector<8x32xf32>
    %282 = tpu.matmul %8, %281, %cst_167 {dimension_numbers = #tpu.dot_dimension_numbers<[1], [0], [0], [1], [0, 0, 1, 1], [], []>} : vector<8x12xf32>, vector<12x32xf32>, vector<8x32xf32> -> vector<8x32xf32>
    %283 = arith.addf %279, %282 : vector<8x32xf32>
    %284 = vector.broadcast %9 : vector<8x1xf32> to vector<8x32xf32>
    %285 = arith.addf %283, %284 : vector<8x32xf32>
    %c0_168 = arith.constant 0 : index
    %c0_169 = arith.constant 0 : index
    %c96 = arith.constant 96 : index
    %286 = vector.load %arg6[%c0_168, %c0_169, %c96] : memref<1x8x512xf32, #tpu.memory_space<vmem>>, vector<1x8x32xf32>
    %287 = vector.shape_cast %286 : vector<1x8x32xf32> to vector<8x32xf32>
    %288 = vector.shape_cast %285 : vector<8x32xf32> to vector<1x8x32xf32>
    tpu.vector_store %arg6[%c0_168, %c0_169, %c96], %288 {strides = array<i32>} : memref<1x8x512xf32, #tpu.memory_space<vmem>>, vector<1x8x32xf32>,
    %c2_170 = arith.constant 2 : index
    %c0_171 = arith.constant 0 : index
    %c0_172 = arith.constant 0 : index
    %289 = vector.load %arg7[%c2_170, %c0_171, %c0_172] : memref<10x12x32xf32, #tpu.memory_space<vmem>>, vector<1x12x32xf32>
    %290 = vector.shape_cast %289 : vector<1x12x32xf32> to vector<12x32xf32>
    %cst_173 = arith.constant dense<0.000000e+00> : vector<8x32xf32>
    %291 = tpu.matmul %2, %290, %cst_173 {dimension_numbers = #tpu.dot_dimension_numbers<[1], [0], [0], [1], [0, 0, 1, 1], [], []>} : vector<8x12xf32>, vector<12x32xf32>, vector<8x32xf32> -> vector<8x32xf32>
    %c3_174 = arith.constant 3 : index
    %c0_175 = arith.constant 0 : index
    %c0_176 = arith.constant 0 : index
    %292 = vector.load %arg7[%c3_174, %c0_175, %c0_176] : memref<10x12x32xf32, #tpu.memory_space<vmem>>, vector<1x12x32xf32>
    %293 = vector.shape_cast %292 : vector<1x12x32xf32> to vector<12x32xf32>
    %cst_177 = arith.constant dense<0.000000e+00> : vector<8x32xf32>
    %294 = tpu.matmul %4, %293, %cst_177 {dimension_numbers = #tpu.dot_dimension_numbers<[1], [0], [0], [1], [0, 0, 1, 1], [], []>} : vector<8x12xf32>, vector<12x32xf32>, vector<8x32xf32> -> vector<8x32xf32>
    %295 = arith.addf %291, %294 : vector<8x32xf32>
    %296 = vector.broadcast %9 : vector<8x1xf32> to vector<8x32xf32>
    %297 = arith.addf %295, %296 : vector<8x32xf32>
    %c0_178 = arith.constant 0 : index
    %c0_179 = arith.constant 0 : index
    %c128 = arith.constant 128 : index
    %298 = vector.load %arg6[%c0_178, %c0_179, %c128] : memref<1x8x512xf32, #tpu.memory_space<vmem>>, vector<1x8x32xf32>
    %299 = vector.shape_cast %298 : vector<1x8x32xf32> to vector<8x32xf32>
    %300 = vector.shape_cast %297 : vector<8x32xf32> to vector<1x8x32xf32>
    tpu.vector_store %arg6[%c0_178, %c0_179, %c128], %300 {strides = array<i32>} : memref<1x8x512xf32, #tpu.memory_space<vmem>>, vector<1x8x32xf32>,
    %c3_180 = arith.constant 3 : index
    %c0_181 = arith.constant 0 : index
    %c0_182 = arith.constant 0 : index
    %301 = vector.load %arg7[%c3_180, %c0_181, %c0_182] : memref<10x12x32xf32, #tpu.memory_space<vmem>>, vector<1x12x32xf32>
    %302 = vector.shape_cast %301 : vector<1x12x32xf32> to vector<12x32xf32>
    %cst_183 = arith.constant dense<0.000000e+00> : vector<8x32xf32>
    %303 = tpu.matmul %6, %302, %cst_183 {dimension_numbers = #tpu.dot_dimension_numbers<[1], [0], [0], [1], [0, 0, 1, 1], [], []>} : vector<8x12xf32>, vector<12x32xf32>, vector<8x32xf32> -> vector<8x32xf32>
    %c4_184 = arith.constant 4 : index
    %c0_185 = arith.constant 0 : index
    %c0_186 = arith.constant 0 : index
    %304 = vector.load %arg7[%c4_184, %c0_185, %c0_186] : memref<10x12x32xf32, #tpu.memory_space<vmem>>, vector<1x12x32xf32>
    %305 = vector.shape_cast %304 : vector<1x12x32xf32> to vector<12x32xf32>
    %cst_187 = arith.constant dense<0.000000e+00> : vector<8x32xf32>
    %306 = tpu.matmul %8, %305, %cst_187 {dimension_numbers = #tpu.dot_dimension_numbers<[1], [0], [0], [1], [0, 0, 1, 1], [], []>} : vector<8x12xf32>, vector<12x32xf32>, vector<8x32xf32> -> vector<8x32xf32>
    %307 = arith.addf %303, %306 : vector<8x32xf32>
    %308 = vector.broadcast %9 : vector<8x1xf32> to vector<8x32xf32>
    %309 = arith.addf %307, %308 : vector<8x32xf32>
    %c0_188 = arith.constant 0 : index
    %c0_189 = arith.constant 0 : index
    %c160 = arith.constant 160 : index
    %310 = vector.load %arg6[%c0_188, %c0_189, %c160] : memref<1x8x512xf32, #tpu.memory_space<vmem>>, vector<1x8x32xf32>
    %311 = vector.shape_cast %310 : vector<1x8x32xf32> to vector<8x32xf32>
    %312 = vector.shape_cast %309 : vector<8x32xf32> to vector<1x8x32xf32>
    tpu.vector_store %arg6[%c0_188, %c0_189, %c160], %312 {strides = array<i32>} : memref<1x8x512xf32, #tpu.memory_space<vmem>>, vector<1x8x32xf32>,
    %c3_190 = arith.constant 3 : index
    %c0_191 = arith.constant 0 : index
    %c0_192 = arith.constant 0 : index
    %313 = vector.load %arg7[%c3_190, %c0_191, %c0_192] : memref<10x12x32xf32, #tpu.memory_space<vmem>>, vector<1x12x32xf32>
    %314 = vector.shape_cast %313 : vector<1x12x32xf32> to vector<12x32xf32>
    %cst_193 = arith.constant dense<0.000000e+00> : vector<8x32xf32>
    %315 = tpu.matmul %2, %314, %cst_193 {dimension_numbers = #tpu.dot_dimension_numbers<[1], [0], [0], [1], [0, 0, 1, 1], [], []>} : vector<8x12xf32>, vector<12x32xf32>, vector<8x32xf32> -> vector<8x32xf32>
    %c4_194 = arith.constant 4 : index
    %c0_195 = arith.constant 0 : index
    %c0_196 = arith.constant 0 : index
    %316 = vector.load %arg7[%c4_194, %c0_195, %c0_196] : memref<10x12x32xf32, #tpu.memory_space<vmem>>, vector<1x12x32xf32>
    %317 = vector.shape_cast %316 : vector<1x12x32xf32> to vector<12x32xf32>
    %cst_197 = arith.constant dense<0.000000e+00> : vector<8x32xf32>
    %318 = tpu.matmul %4, %317, %cst_197 {dimension_numbers = #tpu.dot_dimension_numbers<[1], [0], [0], [1], [0, 0, 1, 1], [], []>} : vector<8x12xf32>, vector<12x32xf32>, vector<8x32xf32> -> vector<8x32xf32>
    %319 = arith.addf %315, %318 : vector<8x32xf32>
    %320 = vector.broadcast %9 : vector<8x1xf32> to vector<8x32xf32>
    %321 = arith.addf %319, %320 : vector<8x32xf32>
    %c0_198 = arith.constant 0 : index
    %c0_199 = arith.constant 0 : index
    %c192 = arith.constant 192 : index
    %322 = vector.load %arg6[%c0_198, %c0_199, %c192] : memref<1x8x512xf32, #tpu.memory_space<vmem>>, vector<1x8x32xf32>
    %323 = vector.shape_cast %322 : vector<1x8x32xf32> to vector<8x32xf32>
    %324 = vector.shape_cast %321 : vector<8x32xf32> to vector<1x8x32xf32>
    tpu.vector_store %arg6[%c0_198, %c0_199, %c192], %324 {strides = array<i32>} : memref<1x8x512xf32, #tpu.memory_space<vmem>>, vector<1x8x32xf32>,
    %c4_200 = arith.constant 4 : index
    %c0_201 = arith.constant 0 : index
    %c0_202 = arith.constant 0 : index
    %325 = vector.load %arg7[%c4_200, %c0_201, %c0_202] : memref<10x12x32xf32, #tpu.memory_space<vmem>>, vector<1x12x32xf32>
    %326 = vector.shape_cast %325 : vector<1x12x32xf32> to vector<12x32xf32>
    %cst_203 = arith.constant dense<0.000000e+00> : vector<8x32xf32>
    %327 = tpu.matmul %6, %326, %cst_203 {dimension_numbers = #tpu.dot_dimension_numbers<[1], [0], [0], [1], [0, 0, 1, 1], [], []>} : vector<8x12xf32>, vector<12x32xf32>, vector<8x32xf32> -> vector<8x32xf32>
    %c5_204 = arith.constant 5 : index
    %c0_205 = arith.constant 0 : index
    %c0_206 = arith.constant 0 : index
    %328 = vector.load %arg7[%c5_204, %c0_205, %c0_206] : memref<10x12x32xf32, #tpu.memory_space<vmem>>, vector<1x12x32xf32>
    %329 = vector.shape_cast %328 : vector<1x12x32xf32> to vector<12x32xf32>
    %cst_207 = arith.constant dense<0.000000e+00> : vector<8x32xf32>
    %330 = tpu.matmul %8, %329, %cst_207 {dimension_numbers = #tpu.dot_dimension_numbers<[1], [0], [0], [1], [0, 0, 1, 1], [], []>} : vector<8x12xf32>, vector<12x32xf32>, vector<8x32xf32> -> vector<8x32xf32>
    %331 = arith.addf %327, %330 : vector<8x32xf32>
    %332 = vector.broadcast %9 : vector<8x1xf32> to vector<8x32xf32>
    %333 = arith.addf %331, %332 : vector<8x32xf32>
    %c0_208 = arith.constant 0 : index
    %c0_209 = arith.constant 0 : index
    %c224 = arith.constant 224 : index
    %334 = vector.load %arg6[%c0_208, %c0_209, %c224] : memref<1x8x512xf32, #tpu.memory_space<vmem>>, vector<1x8x32xf32>
    %335 = vector.shape_cast %334 : vector<1x8x32xf32> to vector<8x32xf32>
    %336 = vector.shape_cast %333 : vector<8x32xf32> to vector<1x8x32xf32>
    tpu.vector_store %arg6[%c0_208, %c0_209, %c224], %336 {strides = array<i32>} : memref<1x8x512xf32, #tpu.memory_space<vmem>>, vector<1x8x32xf32>,
    %c4_210 = arith.constant 4 : index
    %c0_211 = arith.constant 0 : index
    %c0_212 = arith.constant 0 : index
    %337 = vector.load %arg7[%c4_210, %c0_211, %c0_212] : memref<10x12x32xf32, #tpu.memory_space<vmem>>, vector<1x12x32xf32>
    %338 = vector.shape_cast %337 : vector<1x12x32xf32> to vector<12x32xf32>
    %cst_213 = arith.constant dense<0.000000e+00> : vector<8x32xf32>
    %339 = tpu.matmul %2, %338, %cst_213 {dimension_numbers = #tpu.dot_dimension_numbers<[1], [0], [0], [1], [0, 0, 1, 1], [], []>} : vector<8x12xf32>, vector<12x32xf32>, vector<8x32xf32> -> vector<8x32xf32>
    %c5_214 = arith.constant 5 : index
    %c0_215 = arith.constant 0 : index
    %c0_216 = arith.constant 0 : index
    %340 = vector.load %arg7[%c5_214, %c0_215, %c0_216] : memref<10x12x32xf32, #tpu.memory_space<vmem>>, vector<1x12x32xf32>
    %341 = vector.shape_cast %340 : vector<1x12x32xf32> to vector<12x32xf32>
    %cst_217 = arith.constant dense<0.000000e+00> : vector<8x32xf32>
    %342 = tpu.matmul %4, %341, %cst_217 {dimension_numbers = #tpu.dot_dimension_numbers<[1], [0], [0], [1], [0, 0, 1, 1], [], []>} : vector<8x12xf32>, vector<12x32xf32>, vector<8x32xf32> -> vector<8x32xf32>
    %343 = arith.addf %339, %342 : vector<8x32xf32>
    %344 = vector.broadcast %9 : vector<8x1xf32> to vector<8x32xf32>
    %345 = arith.addf %343, %344 : vector<8x32xf32>
    %c0_218 = arith.constant 0 : index
    %c0_219 = arith.constant 0 : index
    %c256 = arith.constant 256 : index
    %346 = vector.load %arg6[%c0_218, %c0_219, %c256] : memref<1x8x512xf32, #tpu.memory_space<vmem>>, vector<1x8x32xf32>
    %347 = vector.shape_cast %346 : vector<1x8x32xf32> to vector<8x32xf32>
    %348 = vector.shape_cast %345 : vector<8x32xf32> to vector<1x8x32xf32>
    tpu.vector_store %arg6[%c0_218, %c0_219, %c256], %348 {strides = array<i32>} : memref<1x8x512xf32, #tpu.memory_space<vmem>>, vector<1x8x32xf32>,
    %c5_220 = arith.constant 5 : index
    %c0_221 = arith.constant 0 : index
    %c0_222 = arith.constant 0 : index
    %349 = vector.load %arg7[%c5_220, %c0_221, %c0_222] : memref<10x12x32xf32, #tpu.memory_space<vmem>>, vector<1x12x32xf32>
    %350 = vector.shape_cast %349 : vector<1x12x32xf32> to vector<12x32xf32>
    %cst_223 = arith.constant dense<0.000000e+00> : vector<8x32xf32>
    %351 = tpu.matmul %6, %350, %cst_223 {dimension_numbers = #tpu.dot_dimension_numbers<[1], [0], [0], [1], [0, 0, 1, 1], [], []>} : vector<8x12xf32>, vector<12x32xf32>, vector<8x32xf32> -> vector<8x32xf32>
    %c6_224 = arith.constant 6 : index
    %c0_225 = arith.constant 0 : index
    %c0_226 = arith.constant 0 : index
    %352 = vector.load %arg7[%c6_224, %c0_225, %c0_226] : memref<10x12x32xf32, #tpu.memory_space<vmem>>, vector<1x12x32xf32>
    %353 = vector.shape_cast %352 : vector<1x12x32xf32> to vector<12x32xf32>
    %cst_227 = arith.constant dense<0.000000e+00> : vector<8x32xf32>
    %354 = tpu.matmul %8, %353, %cst_227 {dimension_numbers = #tpu.dot_dimension_numbers<[1], [0], [0], [1], [0, 0, 1, 1], [], []>} : vector<8x12xf32>, vector<12x32xf32>, vector<8x32xf32> -> vector<8x32xf32>
    %355 = arith.addf %351, %354 : vector<8x32xf32>
    %356 = vector.broadcast %9 : vector<8x1xf32> to vector<8x32xf32>
    %357 = arith.addf %355, %356 : vector<8x32xf32>
    %c0_228 = arith.constant 0 : index
    %c0_229 = arith.constant 0 : index
    %c288 = arith.constant 288 : index
    %358 = vector.load %arg6[%c0_228, %c0_229, %c288] : memref<1x8x512xf32, #tpu.memory_space<vmem>>, vector<1x8x32xf32>
    %359 = vector.shape_cast %358 : vector<1x8x32xf32> to vector<8x32xf32>
    %360 = vector.shape_cast %357 : vector<8x32xf32> to vector<1x8x32xf32>
    tpu.vector_store %arg6[%c0_228, %c0_229, %c288], %360 {strides = array<i32>} : memref<1x8x512xf32, #tpu.memory_space<vmem>>, vector<1x8x32xf32>,
    %c5_230 = arith.constant 5 : index
    %c0_231 = arith.constant 0 : index
    %c0_232 = arith.constant 0 : index
    %361 = vector.load %arg7[%c5_230, %c0_231, %c0_232] : memref<10x12x32xf32, #tpu.memory_space<vmem>>, vector<1x12x32xf32>
    %362 = vector.shape_cast %361 : vector<1x12x32xf32> to vector<12x32xf32>
    %cst_233 = arith.constant dense<0.000000e+00> : vector<8x32xf32>
    %363 = tpu.matmul %2, %362, %cst_233 {dimension_numbers = #tpu.dot_dimension_numbers<[1], [0], [0], [1], [0, 0, 1, 1], [], []>} : vector<8x12xf32>, vector<12x32xf32>, vector<8x32xf32> -> vector<8x32xf32>
    %c6_234 = arith.constant 6 : index
    %c0_235 = arith.constant 0 : index
    %c0_236 = arith.constant 0 : index
    %364 = vector.load %arg7[%c6_234, %c0_235, %c0_236] : memref<10x12x32xf32, #tpu.memory_space<vmem>>, vector<1x12x32xf32>
    %365 = vector.shape_cast %364 : vector<1x12x32xf32> to vector<12x32xf32>
    %cst_237 = arith.constant dense<0.000000e+00> : vector<8x32xf32>
    %366 = tpu.matmul %4, %365, %cst_237 {dimension_numbers = #tpu.dot_dimension_numbers<[1], [0], [0], [1], [0, 0, 1, 1], [], []>} : vector<8x12xf32>, vector<12x32xf32>, vector<8x32xf32> -> vector<8x32xf32>
    %367 = arith.addf %363, %366 : vector<8x32xf32>
    %368 = vector.broadcast %9 : vector<8x1xf32> to vector<8x32xf32>
    %369 = arith.addf %367, %368 : vector<8x32xf32>
    %c0_238 = arith.constant 0 : index
    %c0_239 = arith.constant 0 : index
    %c320 = arith.constant 320 : index
    %370 = vector.load %arg6[%c0_238, %c0_239, %c320] : memref<1x8x512xf32, #tpu.memory_space<vmem>>, vector<1x8x32xf32>
    %371 = vector.shape_cast %370 : vector<1x8x32xf32> to vector<8x32xf32>
    %372 = vector.shape_cast %369 : vector<8x32xf32> to vector<1x8x32xf32>
    tpu.vector_store %arg6[%c0_238, %c0_239, %c320], %372 {strides = array<i32>} : memref<1x8x512xf32, #tpu.memory_space<vmem>>, vector<1x8x32xf32>,
    %c6_240 = arith.constant 6 : index
    %c0_241 = arith.constant 0 : index
    %c0_242 = arith.constant 0 : index
    %373 = vector.load %arg7[%c6_240, %c0_241, %c0_242] : memref<10x12x32xf32, #tpu.memory_space<vmem>>, vector<1x12x32xf32>
    %374 = vector.shape_cast %373 : vector<1x12x32xf32> to vector<12x32xf32>
    %cst_243 = arith.constant dense<0.000000e+00> : vector<8x32xf32>
    %375 = tpu.matmul %6, %374, %cst_243 {dimension_numbers = #tpu.dot_dimension_numbers<[1], [0], [0], [1], [0, 0, 1, 1], [], []>} : vector<8x12xf32>, vector<12x32xf32>, vector<8x32xf32> -> vector<8x32xf32>
    %c7_244 = arith.constant 7 : index
    %c0_245 = arith.constant 0 : index
    %c0_246 = arith.constant 0 : index
    %376 = vector.load %arg7[%c7_244, %c0_245, %c0_246] : memref<10x12x32xf32, #tpu.memory_space<vmem>>, vector<1x12x32xf32>
    %377 = vector.shape_cast %376 : vector<1x12x32xf32> to vector<12x32xf32>
    %cst_247 = arith.constant dense<0.000000e+00> : vector<8x32xf32>
    %378 = tpu.matmul %8, %377, %cst_247 {dimension_numbers = #tpu.dot_dimension_numbers<[1], [0], [0], [1], [0, 0, 1, 1], [], []>} : vector<8x12xf32>, vector<12x32xf32>, vector<8x32xf32> -> vector<8x32xf32>
    %379 = arith.addf %375, %378 : vector<8x32xf32>
    %380 = vector.broadcast %9 : vector<8x1xf32> to vector<8x32xf32>
    %381 = arith.addf %379, %380 : vector<8x32xf32>
    %c0_248 = arith.constant 0 : index
    %c0_249 = arith.constant 0 : index
    %c352 = arith.constant 352 : index
    %382 = vector.load %arg6[%c0_248, %c0_249, %c352] : memref<1x8x512xf32, #tpu.memory_space<vmem>>, vector<1x8x32xf32>
    %383 = vector.shape_cast %382 : vector<1x8x32xf32> to vector<8x32xf32>
    %384 = vector.shape_cast %381 : vector<8x32xf32> to vector<1x8x32xf32>
    tpu.vector_store %arg6[%c0_248, %c0_249, %c352], %384 {strides = array<i32>} : memref<1x8x512xf32, #tpu.memory_space<vmem>>, vector<1x8x32xf32>,
    %c6_250 = arith.constant 6 : index
    %c0_251 = arith.constant 0 : index
    %c0_252 = arith.constant 0 : index
    %385 = vector.load %arg7[%c6_250, %c0_251, %c0_252] : memref<10x12x32xf32, #tpu.memory_space<vmem>>, vector<1x12x32xf32>
    %386 = vector.shape_cast %385 : vector<1x12x32xf32> to vector<12x32xf32>
    %cst_253 = arith.constant dense<0.000000e+00> : vector<8x32xf32>
    %387 = tpu.matmul %2, %386, %cst_253 {dimension_numbers = #tpu.dot_dimension_numbers<[1], [0], [0], [1], [0, 0, 1, 1], [], []>} : vector<8x12xf32>, vector<12x32xf32>, vector<8x32xf32> -> vector<8x32xf32>
    %c7_254 = arith.constant 7 : index
    %c0_255 = arith.constant 0 : index
    %c0_256 = arith.constant 0 : index
    %388 = vector.load %arg7[%c7_254, %c0_255, %c0_256] : memref<10x12x32xf32, #tpu.memory_space<vmem>>, vector<1x12x32xf32>
    %389 = vector.shape_cast %388 : vector<1x12x32xf32> to vector<12x32xf32>
    %cst_257 = arith.constant dense<0.000000e+00> : vector<8x32xf32>
    %390 = tpu.matmul %4, %389, %cst_257 {dimension_numbers = #tpu.dot_dimension_numbers<[1], [0], [0], [1], [0, 0, 1, 1], [], []>} : vector<8x12xf32>, vector<12x32xf32>, vector<8x32xf32> -> vector<8x32xf32>
    %391 = arith.addf %387, %390 : vector<8x32xf32>
    %392 = vector.broadcast %9 : vector<8x1xf32> to vector<8x32xf32>
    %393 = arith.addf %391, %392 : vector<8x32xf32>
    %c0_258 = arith.constant 0 : index
    %c0_259 = arith.constant 0 : index
    %c384 = arith.constant 384 : index
    %394 = vector.load %arg6[%c0_258, %c0_259, %c384] : memref<1x8x512xf32, #tpu.memory_space<vmem>>, vector<1x8x32xf32>
    %395 = vector.shape_cast %394 : vector<1x8x32xf32> to vector<8x32xf32>
    %396 = vector.shape_cast %393 : vector<8x32xf32> to vector<1x8x32xf32>
    tpu.vector_store %arg6[%c0_258, %c0_259, %c384], %396 {strides = array<i32>} : memref<1x8x512xf32, #tpu.memory_space<vmem>>, vector<1x8x32xf32>,
    %c7_260 = arith.constant 7 : index
    %c0_261 = arith.constant 0 : index
    %c0_262 = arith.constant 0 : index
    %397 = vector.load %arg7[%c7_260, %c0_261, %c0_262] : memref<10x12x32xf32, #tpu.memory_space<vmem>>, vector<1x12x32xf32>
    %398 = vector.shape_cast %397 : vector<1x12x32xf32> to vector<12x32xf32>
    %cst_263 = arith.constant dense<0.000000e+00> : vector<8x32xf32>
    %399 = tpu.matmul %6, %398, %cst_263 {dimension_numbers = #tpu.dot_dimension_numbers<[1], [0], [0], [1], [0, 0, 1, 1], [], []>} : vector<8x12xf32>, vector<12x32xf32>, vector<8x32xf32> -> vector<8x32xf32>
    %c8_264 = arith.constant 8 : index
    %c0_265 = arith.constant 0 : index
    %c0_266 = arith.constant 0 : index
    %400 = vector.load %arg7[%c8_264, %c0_265, %c0_266] : memref<10x12x32xf32, #tpu.memory_space<vmem>>, vector<1x12x32xf32>
    %401 = vector.shape_cast %400 : vector<1x12x32xf32> to vector<12x32xf32>
    %cst_267 = arith.constant dense<0.000000e+00> : vector<8x32xf32>
    %402 = tpu.matmul %8, %401, %cst_267 {dimension_numbers = #tpu.dot_dimension_numbers<[1], [0], [0], [1], [0, 0, 1, 1], [], []>} : vector<8x12xf32>, vector<12x32xf32>, vector<8x32xf32> -> vector<8x32xf32>
    %403 = arith.addf %399, %402 : vector<8x32xf32>
    %404 = vector.broadcast %9 : vector<8x1xf32> to vector<8x32xf32>
    %405 = arith.addf %403, %404 : vector<8x32xf32>
    %c0_268 = arith.constant 0 : index
    %c0_269 = arith.constant 0 : index
    %c416 = arith.constant 416 : index
    %406 = vector.load %arg6[%c0_268, %c0_269, %c416] : memref<1x8x512xf32, #tpu.memory_space<vmem>>, vector<1x8x32xf32>
    %407 = vector.shape_cast %406 : vector<1x8x32xf32> to vector<8x32xf32>
    %408 = vector.shape_cast %405 : vector<8x32xf32> to vector<1x8x32xf32>
    tpu.vector_store %arg6[%c0_268, %c0_269, %c416], %408 {strides = array<i32>} : memref<1x8x512xf32, #tpu.memory_space<vmem>>, vector<1x8x32xf32>,
    %c7_270 = arith.constant 7 : index
    %c0_271 = arith.constant 0 : index
    %c0_272 = arith.constant 0 : index
    %409 = vector.load %arg7[%c7_270, %c0_271, %c0_272] : memref<10x12x32xf32, #tpu.memory_space<vmem>>, vector<1x12x32xf32>
    %410 = vector.shape_cast %409 : vector<1x12x32xf32> to vector<12x32xf32>
    %cst_273 = arith.constant dense<0.000000e+00> : vector<8x32xf32>
    %411 = tpu.matmul %2, %410, %cst_273 {dimension_numbers = #tpu.dot_dimension_numbers<[1], [0], [0], [1], [0, 0, 1, 1], [], []>} : vector<8x12xf32>, vector<12x32xf32>, vector<8x32xf32> -> vector<8x32xf32>
    %c8_274 = arith.constant 8 : index
    %c0_275 = arith.constant 0 : index
    %c0_276 = arith.constant 0 : index
    %412 = vector.load %arg7[%c8_274, %c0_275, %c0_276] : memref<10x12x32xf32, #tpu.memory_space<vmem>>, vector<1x12x32xf32>
    %413 = vector.shape_cast %412 : vector<1x12x32xf32> to vector<12x32xf32>
    %cst_277 = arith.constant dense<0.000000e+00> : vector<8x32xf32>
    %414 = tpu.matmul %4, %413, %cst_277 {dimension_numbers = #tpu.dot_dimension_numbers<[1], [0], [0], [1], [0, 0, 1, 1], [], []>} : vector<8x12xf32>, vector<12x32xf32>, vector<8x32xf32> -> vector<8x32xf32>
    %415 = arith.addf %411, %414 : vector<8x32xf32>
    %416 = vector.broadcast %9 : vector<8x1xf32> to vector<8x32xf32>
    %417 = arith.addf %415, %416 : vector<8x32xf32>
    %c0_278 = arith.constant 0 : index
    %c0_279 = arith.constant 0 : index
    %c448 = arith.constant 448 : index
    %418 = vector.load %arg6[%c0_278, %c0_279, %c448] : memref<1x8x512xf32, #tpu.memory_space<vmem>>, vector<1x8x32xf32>
    %419 = vector.shape_cast %418 : vector<1x8x32xf32> to vector<8x32xf32>
    %420 = vector.shape_cast %417 : vector<8x32xf32> to vector<1x8x32xf32>
    tpu.vector_store %arg6[%c0_278, %c0_279, %c448], %420 {strides = array<i32>} : memref<1x8x512xf32, #tpu.memory_space<vmem>>, vector<1x8x32xf32>,
    %c8_280 = arith.constant 8 : index
    %c0_281 = arith.constant 0 : index
    %c0_282 = arith.constant 0 : index
    %421 = vector.load %arg7[%c8_280, %c0_281, %c0_282] : memref<10x12x32xf32, #tpu.memory_space<vmem>>, vector<1x12x32xf32>
    %422 = vector.shape_cast %421 : vector<1x12x32xf32> to vector<12x32xf32>
    %cst_283 = arith.constant dense<0.000000e+00> : vector<8x32xf32>
    %423 = tpu.matmul %6, %422, %cst_283 {dimension_numbers = #tpu.dot_dimension_numbers<[1], [0], [0], [1], [0, 0, 1, 1], [], []>} : vector<8x12xf32>, vector<12x32xf32>, vector<8x32xf32> -> vector<8x32xf32>
    %c9_284 = arith.constant 9 : index
    %c0_285 = arith.constant 0 : index
    %c0_286 = arith.constant 0 : index
    %424 = vector.load %arg7[%c9_284, %c0_285, %c0_286] : memref<10x12x32xf32, #tpu.memory_space<vmem>>, vector<1x12x32xf32>
    %425 = vector.shape_cast %424 : vector<1x12x32xf32> to vector<12x32xf32>
    %cst_287 = arith.constant dense<0.000000e+00> : vector<8x32xf32>
    %426 = tpu.matmul %8, %425, %cst_287 {dimension_numbers = #tpu.dot_dimension_numbers<[1], [0], [0], [1], [0, 0, 1, 1], [], []>} : vector<8x12xf32>, vector<12x32xf32>, vector<8x32xf32> -> vector<8x32xf32>
    %427 = arith.addf %423, %426 : vector<8x32xf32>
    %428 = vector.broadcast %9 : vector<8x1xf32> to vector<8x32xf32>
    %429 = arith.addf %427, %428 : vector<8x32xf32>
    %c0_288 = arith.constant 0 : index
    %c0_289 = arith.constant 0 : index
    %c480 = arith.constant 480 : index
    %430 = vector.load %arg6[%c0_288, %c0_289, %c480] : memref<1x8x512xf32, #tpu.memory_space<vmem>>, vector<1x8x32xf32>
    %431 = vector.shape_cast %430 : vector<1x8x32xf32> to vector<8x32xf32>
    %432 = vector.shape_cast %429 : vector<8x32xf32> to vector<1x8x32xf32>
    tpu.vector_store %arg6[%c0_288, %c0_289, %c480], %432 {strides = array<i32>} : memref<1x8x512xf32, #tpu.memory_space<vmem>>, vector<1x8x32xf32>,
    return
  }
  func.func @transform_0(%arg0: i32, %arg1: i32) -> (i32, i32, i32, i32) {
    %c0_i32 = arith.constant 0 : i32
    %c0_i32_0 = arith.constant 0 : i32
    %c0_i32_1 = arith.constant 0 : i32
    %c0_i32_2 = arith.constant 0 : i32
    return %arg0, %c0_i32, %c0_i32_0, %c0_i32_1 : i32, i32, i32, i32
  }
  func.func @transform_1(%arg0: i32, %arg1: i32) -> (i32, i32, i32, i32) {
    %c0_i32 = arith.constant 0 : i32
    %c0_i32_0 = arith.constant 0 : i32
    %c0_i32_1 = arith.constant 0 : i32
    %c0_i32_2 = arith.constant 0 : i32
    %c0_i32_3 = arith.constant 0 : i32
    return %c0_i32, %c0_i32_0, %c0_i32_1, %c0_i32_2 : i32, i32, i32, i32
  }
  func.func @transform_2(%arg0: i32, %arg1: i32) -> (i32, i32) {
    %c0_i32 = arith.constant 0 : i32
    %c0_i32_0 = arith.constant 0 : i32
    %c0_i32_1 = arith.constant 0 : i32
    return %c0_i32, %c0_i32_0 : i32, i32
  }
  func.func @transform_3(%arg0: i32, %arg1: i32) -> (i32, i32) {
    %c0_i32 = arith.constant 0 : i32
    %c0_i32_0 = arith.constant 0 : i32
    %c0_i32_1 = arith.constant 0 : i32
    return %c0_i32, %c0_i32_0 : i32, i32
  }
  func.func @transform_4(%arg0: i32, %arg1: i32) -> (i32, i32, i32) {
    %c0_i32 = arith.constant 0 : i32
    %c0_i32_0 = arith.constant 0 : i32
    return %arg0, %c0_i32, %arg1 : i32, i32, i32
  }
}

</mosaic_0001>

<llo_original>
// kernel: tpu_custom_call.1
$region0: #{tpu_custom_call.1}
  #allocation0 [shape = 'u32[]', space=smem, size = 0x4, offset = 0x4, fixed_abs, tag = 'smem constant byte address 0x4 - core index']
  #allocation1 [shape = 'u32[144,128]{1,0:T(1,128)}', space=vmem, size = 0x12000, scoped, tag = 'internal scratch']
  #allocation2 [shape = 'f32[10,12,32]{2,1,0:T(8,128)}', space=vmem, size = 0x14000, scoped, tag = 'scratch operand']
  %s0 = inlined_call_operand.hbm [shape: f32[2,4,16,16], index: 0, kind: input, shape index: {}]
  %s1 = inlined_call_operand.hbm [shape: f32[2,2,8,12], index: 1, kind: input, shape index: {}]
  %s2 = inlined_call_operand.vmem [shape: f32[8,1], index: 2, kind: input, shape index: {}]
  %s3 = inlined_call_operand.hbm [shape: f32[16,34], index: 3, kind: input, shape index: {}]
  %s4 = inlined_call_operand.hbm [shape: f32[2,8,1024], index: 4, kind: output, shape index: {}]
  %s5 = sld [smem:[#allocation0]]
  $region61: #{tpu_custom_call.1} parent=0
    _
  %s7 = ssub.s32 1, %s5
  %s8 = scalar_select 0, %s7, %s5
  $region1: #{tpu_custom_call.1} parent=0
    #allocation3 [shape = 'u8[65536]{0}', space=vmem, size = 0x10000, scoped, tag = 'input window, operand 0']
    #allocation4 [shape = 's32[2]{0}', space=sflag, size = 0x8, scoped, tag = 'scoped memory for tpu_custom_call.1']
    #allocation5 [shape = 's32[2]{0}', space=sflag, size = 0x8, scoped, tag = 'scoped memory for tpu_custom_call.1']
    #allocation6 [shape = 'u8[16384]{0}', space=vmem, size = 0x4000, scoped, tag = 'input window, operand 1, single buffered']
    #allocation7 [shape = 's32[1]{0}', space=sflag, size = 0x4, scoped, tag = 'scoped memory for tpu_custom_call.1']
    #allocation8 [shape = 'u8[8192]{0}', space=vmem, size = 0x2000, scoped, tag = 'input window, operand 3, single buffered']
    #allocation9 [shape = 'u8[32768]{0}', space=vmem, size = 0x8000, scoped, tag = 'output window, operand 0']
    %9 = vsyncpa [#allocation4], 0
    %s10 = scalar_lea.sflag [#allocation4], 1
    %11 = vsyncpa %s10, 0
    %12 = vsyncpa [#allocation7], 0
    %13 = vsyncpa [#allocation5], 0
    %s14 = scalar_lea.sflag [#allocation5], 1
    %15 = vsyncpa %s14, 0
    loop: start=0, step=1, limit=6
    $region2: #{tpu_custom_call.1} parent=1 // loop_pre_header
      _
    $region3: #{tpu_custom_call.1} parent=1 // loop_header
      %s17 = sphi 0, %s21
      %p18 = scmp.ge.s32.totalorder %s17, 6
      %s24 = sphi 0, %s36
      %s25 = sphi 0, %s32
      %s26 = sphi 0, %s24
      %s27 = sphi 0, %s25
      %s28 = sphi 0, %s26
      %s29 = sphi 0, %s27
      %s39 = sphi 0, %s41
      %s42 = sphi 0, %s39
      %s43 = sphi 0, %s42
      %s59 = sphi 0, %s43
      %s63 = sphi 0, %s63
      %s65 = sphi 0, %s63
      %s66 = sphi 0, %s65
      %s80 = sphi 0, %s66
      %s84 = sphi 0, %s84
      %s86 = sphi 0, %s84
      %s87 = sphi 0, %s86
      %s101 = sphi 0, %s87
      %s105 = sphi 0, %s105
      %s107 = sphi 0, %s105
      %s108 = sphi 0, %s107
      %s122 = sphi 0, %s108
      %s130 = sphi 0, %s132
      %s133 = sphi 0, %s130
      %s134 = sphi 0, %s133
      %s150 = sphi 0, %s134
    $region4: #{tpu_custom_call.1} parent=1 // loop_header_branch
      %20 = sbr.rel (%p18) target = $region8
    $region5: #{tpu_custom_call.1} parent=1 // loop_body
      %s22 = ssub.s32 %s17, 1
      %s23 = ssub.s32 %s17, 2
      %s30 = sadd.s32 1, %s25
      %p31 = scmp.ge.s32.totalorder %s30, 2
      %s32 = scalar_select %p31, 0, %s30
      %s33 = sadd.s32 1, %s24
      %s34 = scalar_select %p31, %s33, %s24
      %p35 = scmp.ge.s32.totalorder %s34, 2
      %s36 = scalar_select %p35, 0, %s34
      %s37 = ssub.s32 %s24, %s36
      %p38 = scmp.eq.s32.totalorder %s37, 0
      %s40 = sadd.s32 %s39, 1
      %s41 = scalar_select %p38, %s39, %s40
      %p44 = pneg %p38
      %p45 = scmp.eq.s32.totalorder %s17, 3
      %p46 = por %p44, %p45
      %p47 = scmp.ne.s32.totalorder %s39, %s42
      %p48 = scmp.eq.s32.totalorder %s17, 0
      %p49 = por %p47, %p48
      %p50 = scmp.ne.s32.totalorder %s39, %s42
      %p51 = scmp.eq.s32.totalorder %s22, 3
      %p52 = por %p50, %p51
      %p53 = scmp.ne.s32.totalorder %s42, %s43
      %p54 = scmp.eq.s32.totalorder %s22, 0
      %p55 = por %p53, %p54
      %p56 = scmp.ne.s32.totalorder %s42, %s43
      %p57 = scmp.eq.s32.totalorder %s23, 3
      %p58 = por %p56, %p57
      %p60 = scmp.ne.s32.totalorder %s43, %s59
      %p61 = scmp.eq.s32.totalorder %s23, 0
      %p62 = por %p60, %p61
      %s64 = sadd.s32 %s63, 1
      %p67 = scmp.eq.s32.totalorder %s17, 3
      %p68 = scmp.ne.s32.totalorder %s63, %s65
      %p69 = scmp.eq.s32.totalorder %s17, 0
      %p70 = por %p68, %p69
      %p71 = scmp.ne.s32.totalorder %s63, %s65
      %p72 = scmp.eq.s32.totalorder %s22, 3
      %p73 = por %p71, %p72
      %p74 = scmp.ne.s32.totalorder %s65, %s66
      %p75 = scmp.eq.s32.totalorder %s22, 0
      %p76 = por %p74, %p75
      %p77 = scmp.ne.s32.totalorder %s65, %s66
      %p78 = scmp.eq.s32.totalorder %s23, 3
      %p79 = por %p77, %p78
      %p81 = scmp.ne.s32.totalorder %s66, %s80
      %p82 = scmp.eq.s32.totalorder %s23, 0
      %p83 = por %p81, %p82
      %s85 = sadd.s32 %s84, 1
      %p88 = scmp.eq.s32.totalorder %s17, 3
      %p89 = scmp.ne.s32.totalorder %s84, %s86
      %p90 = scmp.eq.s32.totalorder %s17, 0
      %p91 = por %p89, %p90
      %p92 = scmp.ne.s32.totalorder %s84, %s86
      %p93 = scmp.eq.s32.totalorder %s22, 3
      %p94 = por %p92, %p93
      %p95 = scmp.ne.s32.totalorder %s86, %s87
      %p96 = scmp.eq.s32.totalorder %s22, 0
      %p97 = por %p95, %p96
      %p98 = scmp.ne.s32.totalorder %s86, %s87
      %p99 = scmp.eq.s32.totalorder %s23, 3
      %p100 = por %p98, %p99
      %p102 = scmp.ne.s32.totalorder %s87, %s101
      %p103 = scmp.eq.s32.totalorder %s23, 0
      %p104 = por %p102, %p103
      %s106 = sadd.s32 %s105, 1
      %p109 = scmp.eq.s32.totalorder %s17, 3
      %p110 = scmp.ne.s32.totalorder %s105, %s107
      %p111 = scmp.eq.s32.totalorder %s17, 0
      %p112 = por %p110, %p111
      %p113 = scmp.ne.s32.totalorder %s105, %s107
      %p114 = scmp.eq.s32.totalorder %s22, 3
      %p115 = por %p113, %p114
      %p116 = scmp.ne.s32.totalorder %s107, %s108
      %p117 = scmp.eq.s32.totalorder %s22, 0
      %p118 = por %p116, %p117
      %p119 = scmp.ne.s32.totalorder %s107, %s108
      %p120 = scmp.eq.s32.totalorder %s23, 3
      %p121 = por %p119, %p120
      %p123 = scmp.ne.s32.totalorder %s108, %s122
      %p124 = scmp.eq.s32.totalorder %s23, 0
      %p125 = por %p123, %p124
      %s126 = ssub.s32 %s24, %s36
      %s127 = ssub.s32 %s25, %s32
      %s128 = sor.u32 %s126, %s127
      %p129 = scmp.eq.s32.totalorder %s128, 0
      %s131 = sadd.s32 %s130, 1
      %s132 = scalar_select %p129, %s130, %s131
      %p135 = pneg %p129
      %p136 = scmp.eq.s32.totalorder %s17, 3
      %p137 = por %p135, %p136
      %p138 = scmp.ne.s32.totalorder %s130, %s133
      %p139 = scmp.eq.s32.totalorder %s17, 0
      %p140 = por %p138, %p139
      %p141 = scmp.ne.s32.totalorder %s130, %s133
      %p142 = scmp.eq.s32.totalorder %s22, 3
      %p143 = por %p141, %p142
      %p144 = scmp.ne.s32.totalorder %s133, %s134
      %p145 = scmp.eq.s32.totalorder %s22, 0
      %p146 = por %p144, %p145
      %p147 = scmp.ne.s32.totalorder %s133, %s134
      %p148 = scmp.eq.s32.totalorder %s23, 3
      %p149 = por %p147, %p148
      %p151 = scmp.ne.s32.totalorder %s134, %s150
      %p152 = scmp.eq.s32.totalorder %s23, 0
      %p153 = por %p151, %p152
      %p154 = scmp.le.s32.totalorder 1, %s17
      %p155 = scmp.lt.s32.totalorder %s17, 5
      %p156 = pnand %p154, %p155
      %p157 = pneg %p156
      // Predicated region
      $region9: #{tpu_custom_call.1} parent=5 // pred_check
        _
      $region10: #{tpu_custom_call.1} parent=5 // pred_check_branch
        %159 = sbr.rel (%p156) target = $region12
      $region11: #{tpu_custom_call.1} parent=5 // pred_region
        %s160 = ssub.s32 %s17, 1
        // Predicated region
        $region13: #{tpu_custom_call.1} parent=11 // pred_check
          %p161 = pneg %p76
        $region14: #{tpu_custom_call.1} parent=11 // pred_check_branch
          %163 = sbr.rel (%p161) target = $region16
        $region15: #{tpu_custom_call.1} parent=11 // pred_region
          %s165 = ssub.s32 512, 512
          %166 = vsyncadd [#allocation7], %s165
          %s167 = sshll.u32 [#allocation6], 4
          %s168 = int_to_ptr.vmem [resolvable:$true] %s167
          %173 = dma.hbm_to_vmem [thread:$0]  %s1, 512, %s168, [#allocation7], 128, 128, 8
        $region16: #{tpu_custom_call.1} parent=11 // pred_fallthru
          _
        // Predicated region
        $region17: #{tpu_custom_call.1} parent=11 // pred_check
          %p174 = pneg %p97
        $region18: #{tpu_custom_call.1} parent=11 // pred_check_branch
          %176 = sbr.rel (%p174) target = $region20
        $region19: #{tpu_custom_call.1} parent=11 // pred_region
          _
        $region20: #{tpu_custom_call.1} parent=11 // pred_fallthru
          _
        // Predicated region
        $region21: #{tpu_custom_call.1} parent=11 // pred_check
          %p177 = pneg %p118
        $region22: #{tpu_custom_call.1} parent=11 // pred_check_branch
          %179 = sbr.rel (%p177) target = $region24
        $region23: #{tpu_custom_call.1} parent=11 // pred_region
          %s181 = ssub.s32 256, 256
          %182 = vsyncadd [#allocation7], %s181
          %s183 = sshll.u32 [#allocation8], 4
          %s184 = int_to_ptr.vmem [resolvable:$true] %s183
          %189 = dma.hbm_to_vmem [thread:$0]  %s3, 256, %s184, [#allocation7], 128, 128, 8
        $region24: #{tpu_custom_call.1} parent=11 // pred_fallthru
          _
      $region12: #{tpu_custom_call.1} parent=5 // pred_fallthru
        _
      %p190 = scmp.lt.s32.totalorder %s17, 4
      // Predicated region
      $region25: #{tpu_custom_call.1} parent=5 // pred_check
        %p191 = pneg %p190
      $region26: #{tpu_custom_call.1} parent=5 // pred_check_branch
        %193 = sbr.rel (%p191) target = $region28
      $region27: #{tpu_custom_call.1} parent=5 // pred_region
        // Predicated region
        $region29: #{tpu_custom_call.1} parent=27 // pred_check
          %p194 = pneg %p49
        $region30: #{tpu_custom_call.1} parent=27 // pred_check_branch
          %196 = sbr.rel (%p194) target = $region32
        $region31: #{tpu_custom_call.1} parent=27 // pred_region
          %s197 = sand.u32 %s39, 1
          %s198 = scalar_lea.sflag [#allocation4], %s197
          %s199 = sand.u32 %s39, 1
          %s200 = smul.addr %s199, 64
          %s201 = scalar_lea.vmem [#allocation3], %s200
          %s203 = ssub.s32 1024, 1024
          %204 = vsyncadd %s198, %s203
          %s205 = smul.addr %s24, 8
          %s206 = smul.addr %s205, 128
          %s207 = scalar_lea.hbm %s0, %s206
          %s208 = sshll.u32 %s201, 4
          %s209 = int_to_ptr.vmem [resolvable:$true] %s208
          %214 = dma.hbm_to_vmem [thread:$0]  %s207, 1024, %s209, %s198, 128, 128, 8
        $region32: #{tpu_custom_call.1} parent=27 // pred_fallthru
          _
      $region28: #{tpu_custom_call.1} parent=5 // pred_fallthru
        _
      %p215 = scmp.le.s32.totalorder 1, %s17
      %p216 = scmp.lt.s32.totalorder %s17, 5
      %p217 = pnand %p215, %p216
      %p218 = pneg %p217
      // Predicated region
      $region33: #{tpu_custom_call.1} parent=5 // pred_check
        _
      $region34: #{tpu_custom_call.1} parent=5 // pred_check_branch
        %220 = sbr.rel (%p217) target = $region36
      $region35: #{tpu_custom_call.1} parent=5 // pred_region
        %s221 = ssub.s32 %s17, 1
        %s222 = sand.u32 %s42, 1
        %s223 = scalar_lea.sflag [#allocation4], %s222
        %s224 = sand.u32 %s42, 1
        %s225 = smul.addr %s224, 64
        %s226 = scalar_lea.vmem [#allocation3], %s225
        // Predicated region
        $region37: #{tpu_custom_call.1} parent=35 // pred_check
          %p227 = pneg %p55
        $region38: #{tpu_custom_call.1} parent=35 // pred_check_branch
          %229 = sbr.rel (%p227) target = $region40
        $region39: #{tpu_custom_call.1} parent=35 // pred_region
          %230 = dma.done %s223, 1024
        $region40: #{tpu_custom_call.1} parent=35 // pred_fallthru
          _
        // Predicated region
        $region41: #{tpu_custom_call.1} parent=35 // pred_check
          %p231 = pneg %p76
        $region42: #{tpu_custom_call.1} parent=35 // pred_check_branch
          %233 = sbr.rel (%p231) target = $region44
        $region43: #{tpu_custom_call.1} parent=35 // pred_region
          %234 = dma.done [#allocation7], 512
        $region44: #{tpu_custom_call.1} parent=35 // pred_fallthru
          _
        // Predicated region
        $region45: #{tpu_custom_call.1} parent=35 // pred_check
          %p235 = pneg %p118
        $region46: #{tpu_custom_call.1} parent=35 // pred_check_branch
          %237 = sbr.rel (%p235) target = $region48
        $region47: #{tpu_custom_call.1} parent=35 // pred_region
          %238 = dma.done [#allocation7], 256
        $region48: #{tpu_custom_call.1} parent=35 // pred_fallthru
          _
        %s239 = sand.u32 %s42, 1
        %s240 = scalar_lea.sflag [#allocation4], %s239
        %s241 = sand.u32 %s42, 1
        %s242 = smul.addr %s241, 64
        %s243 = scalar_lea.vmem [#allocation3], %s242
        %p244 = pneg %p55
        %p245 = pneg %p52
        %p246 = pneg %p76
        %p247 = pneg %p73
        %p248 = pneg %p97
        %p249 = pneg %p94
        %p250 = pneg %p118
        %p251 = pneg %p115
        %p252 = pneg %p146
        %p253 = pneg %p143
        %s254 = sand.u32 %s133, 1
        %s255 = scalar_lea.sflag [#allocation5], %s254
        %s256 = sand.u32 %s133, 1
        %s257 = smul.addr %s256, 32
        %s258 = scalar_lea.vmem [#allocation9], %s257
        %s259 = smul.u32 4, %s27
        %s260 = smul.u32 %s27, 8
        %v261 = vld [vmem:[#allocation6] sm:$0xff]
        %s262 = scalar_lea.vmem [#allocation6], 8
        %v263 = vld [vmem:[%s262] sm:$0xff]
        %s264 = scalar_lea.vmem [#allocation6], 16
        %v265 = vld [vmem:[%s264] sm:$0xff]
        %s266 = scalar_lea.vmem [#allocation6], 24
        %v267 = vld [vmem:[%s266] sm:$0xff]
        %v268 = vld [vmem:[%s2] sm:$0xff]
        %v269 = vld [vmem:[#allocation8] sm:$0xff]
        %v270 = vld [vmem:[#allocation8 + $0x8] sm:$0xff]
        %s271 = ssub.s32 %s260, 1
        %p272 = scmp.ge.s32.totalorder %s271, 0
        %p273 = scmp.le.s32.totalorder %s271, 15
        %p274 = pnand %p272, %p273
        %p275 = pneg %p274
        %p276 = scmp.gt.s32.totalorder %s271, 0
        %s277 = scalar_select %p276, %s271, 0
        %p278 = scmp.lt.s32.totalorder %s277, 15
        %s279 = scalar_select %p278, %s277, 15
        %s280 = scalar_lea.vmem %s226, %s279 [#allocation3]
        %v281 = vld [vmem:[%s280] sm:$0x1]
        %v282 = vld [vmem:[%s280 + $0x10] sm:$0x1]
        %v283 = vld [vmem:[%s280 + $0x20] sm:$0x1]
        %v284 = vld [vmem:[%s280 + $0x30] sm:$0x1]
        %s285 = scalar_select %p275, 1, 0
        %s286 = scvt.s32.f32 %s285
        %v287 = vstv %s286
        %v288 = vmul.f32 %v281, %v287
        %v289 = vmul.f32 %v282, %v287
        %v290 = vmul.f32 %v283, %v287
        %v291 = vmul.f32 %v284, %v287
        %v296 = vrot.slane %v289, 7
        %vm297 = vcmask 1041409
        %v298 = vsel %vm297, %v296, %v288
        %v299 = vrot.slane %v290, 6
        %vm300 = vcmask 1042434
        %v301 = vsel %vm300, %v299, %v298
        %v302 = vrot.slane %v291, 5
        %vm303 = vcmask 1043459
        %v304 = vsel %vm303, %v302, %v301
        %vm305 = vcmask 130048
        %v306 = vsel %vm305, %v304, 0
        %308 = vmatprep.subr.mxu0 0.0
        %309 = vmatpush1.msra.mxu0 0.0
        %310 = vmatprep.subr.mxu0 0.0
        %311 = vmatpush1.msra.mxu0 0.0
        %312 = vmatprep.subr.mxu0 0.0
        %313 = vmatpush1.msra.mxu0 0.0
        %314 = vmatprep.subr.mxu0 0.0
        %315 = vmatpush1.msra.mxu0 0.0
        %316 = vmatprep.subr.mxu0 0.0
        %317 = vmatpush1.msra.mxu0 0.0
        %318 = vmatprep.subr.mxu0 0.0
        %319 = vmatpush1.msra.mxu0 0.0
        %320 = vmatprep.subr.mxu0 0.0
        %321 = vmatpush1.msra.mxu0 0.0
        %322 = vmatprep.subr.mxu0 0.0
        %323 = vmatpush1.msra.mxu0 0.0
        %324 = vmatprep.subr.mxu0 0.0
        %325 = vmatpush1.msra.mxu0 0.0
        %326 = vmatprep.subr.mxu0 0.0
        %327 = vmatpush1.msra.mxu0 0.0
        %328 = vmatprep.subr.mxu0 0.0
        %329 = vmatpush1.msra.mxu0 0.0
        %330 = vmatprep.subr.mxu0 0.0
        %331 = vmatpush1.msra.mxu0 0.0
        %332 = vmatprep.subr.mxu0 0.0
        %333 = vmatpush1.msra.mxu0 0.0
        %334 = vmatprep.subr.mxu0 0.0
        %335 = vmatpush1.msra.mxu0 0.0
        %336 = vmatprep.subr.mxu0 0.0
        %337 = vmatpush1.msra.mxu0 %v270
        %338 = vmatprep.subr.mxu0 0.0
        %339 = vmatpush1.msra.mxu0 %v269
        %340 = vmatprep.subr.mxu0 0.0
        %341 = vmatpush2.msra.mxu0 0.0
        %342 = vmatprep.subr.mxu0 0.0
        %343 = vmatpush2.msra.mxu0 0.0
        %344 = vmatprep.subr.mxu0 0.0
        %345 = vmatpush2.msra.mxu0 0.0
        %346 = vmatprep.subr.mxu0 0.0
        %347 = vmatpush2.msra.mxu0 0.0
        %348 = vmatprep.subr.mxu0 0.0
        %349 = vmatpush2.msra.mxu0 0.0
        %350 = vmatprep.subr.mxu0 0.0
        %351 = vmatpush2.msra.mxu0 0.0
        %352 = vmatprep.subr.mxu0 0.0
        %353 = vmatpush2.msra.mxu0 0.0
        %354 = vmatprep.subr.mxu0 0.0
        %355 = vmatpush2.msra.mxu0 0.0
        %356 = vmatprep.subr.mxu0 0.0
        %357 = vmatpush2.msra.mxu0 0.0
        %358 = vmatprep.subr.mxu0 0.0
        %359 = vmatpush2.msra.mxu0 0.0
        %360 = vmatprep.subr.mxu0 0.0
        %361 = vmatpush2.msra.mxu0 0.0
        %362 = vmatprep.subr.mxu0 0.0
        %363 = vmatpush2.msra.mxu0 0.0
        %364 = vmatprep.subr.mxu0 0.0
        %365 = vmatpush2.msra.mxu0 0.0
        %366 = vmatprep.subr.mxu0 0.0
        %367 = vmatpush2.msra.mxu0 0.0
        %368 = vmatprep.subr.mxu0 0.0
        %369 = vmatpush2.msra.mxu0 0.0
        %370 = vmatprep.subr.mxu0 0.0
        %371 = vmatpush2.msra.mxu0 0.0
        %372 = vmatprep.mubr.f32.mxu0 0.0
        %373 = vmatmul.mubr.f32.gmra.mxu0 %v306
        %v374 = vpop.f32.mrf.mxu0
        %v375 = vadd.f32 0.0, %v374
        %v376 = vpop.f32.mrf.mxu0
        %377 = vdwg.mxu0
        %v379 = vrot.slane %v375, 4
        %380 = vrot.lane.b32.xlu0 %v379, 127
        %v381 = vpop.permute.xlu0 %380
        %383 = vrot.lane.b32.xlu0 %v375, 126
        %v384 = vpop.permute.xlu0 %383
        %vm386 = vcmask 1043456
        %v387 = vsel %vm386, %v375, %v381
        %vm388 = vcmask 261120
        %389 = vst.msk [vmem:[#allocation2] sm:$0xff] %vm388, %v387
        %vm390 = vcmask 257024
        %391 = vst.msk [vmem:[#allocation2 + $0x8] sm:$0xf] %vm390, %v384
        %p392 = scmp.ge.s32.totalorder %s260, 0
        %p393 = scmp.le.s32.totalorder %s260, 15
        %p394 = pnand %p392, %p393
        %p395 = pneg %p394
        %p396 = scmp.gt.s32.totalorder %s260, 0
        %s397 = scalar_select %p396, %s260, 0
        %p398 = scmp.lt.s32.totalorder %s397, 15
        %s399 = scalar_select %p398, %s397, 15
        %s400 = scalar_lea.vmem %s226, %s399 [#allocation3]
        %v401 = vld [vmem:[%s400] sm:$0x1]
        %v402 = vld [vmem:[%s400 + $0x10] sm:$0x1]
        %v403 = vld [vmem:[%s400 + $0x20] sm:$0x1]
        %v404 = vld [vmem:[%s400 + $0x30] sm:$0x1]
        %s405 = scalar_select %p395, 1, 0
        %s406 = scvt.s32.f32 %s405
        %v407 = vstv %s406
        %v408 = vmul.f32 %v401, %v407
        %v409 = vmul.f32 %v402, %v407
        %v410 = vmul.f32 %v403, %v407
        %v411 = vmul.f32 %v404, %v407
        %v416 = vrot.slane %v409, 7
        %v417 = vsel %vm297, %v416, %v408
        %v418 = vrot.slane %v410, 6
        %v419 = vsel %vm300, %v418, %v417
        %v420 = vrot.slane %v411, 5
        %v421 = vsel %vm303, %v420, %v419
        %v422 = vsel %vm305, %v421, 0
        %424 = vmatprep.subr.mxu0 0.0
        %425 = vmatpush1.msra.mxu0 0.0
        %426 = vmatprep.subr.mxu0 0.0
        %427 = vmatpush1.msra.mxu0 0.0
        %428 = vmatprep.subr.mxu0 0.0
        %429 = vmatpush1.msra.mxu0 0.0
        %430 = vmatprep.subr.mxu0 0.0
        %431 = vmatpush1.msra.mxu0 0.0
        %432 = vmatprep.subr.mxu0 0.0
        %433 = vmatpush1.msra.mxu0 0.0
        %434 = vmatprep.subr.mxu0 0.0
        %435 = vmatpush1.msra.mxu0 0.0
        %436 = vmatprep.subr.mxu0 0.0
        %437 = vmatpush1.msra.mxu0 0.0
        %438 = vmatprep.subr.mxu0 0.0
        %439 = vmatpush1.msra.mxu0 0.0
        %440 = vmatprep.subr.mxu0 0.0
        %441 = vmatpush1.msra.mxu0 0.0
        %442 = vmatprep.subr.mxu0 0.0
        %443 = vmatpush1.msra.mxu0 0.0
        %444 = vmatprep.subr.mxu0 0.0
        %445 = vmatpush1.msra.mxu0 0.0
        %446 = vmatprep.subr.mxu0 0.0
        %447 = vmatpush1.msra.mxu0 0.0
        %448 = vmatprep.subr.mxu0 0.0
        %449 = vmatpush1.msra.mxu0 0.0
        %450 = vmatprep.subr.mxu0 0.0
        %451 = vmatpush1.msra.mxu0 0.0
        %452 = vmatprep.subr.mxu0 0.0
        %453 = vmatpush1.msra.mxu0 %v270
        %454 = vmatprep.subr.mxu0 0.0
        %455 = vmatpush1.msra.mxu0 %v269
        %456 = vmatprep.subr.mxu0 0.0
        %457 = vmatpush2.msra.mxu0 0.0
        %458 = vmatprep.subr.mxu0 0.0
        %459 = vmatpush2.msra.mxu0 0.0
        %460 = vmatprep.subr.mxu0 0.0
        %461 = vmatpush2.msra.mxu0 0.0
        %462 = vmatprep.subr.mxu0 0.0
        %463 = vmatpush2.msra.mxu0 0.0
        %464 = vmatprep.subr.mxu0 0.0
        %465 = vmatpush2.msra.mxu0 0.0
        %466 = vmatprep.subr.mxu0 0.0
        %467 = vmatpush2.msra.mxu0 0.0
        %468 = vmatprep.subr.mxu0 0.0
        %469 = vmatpush2.msra.mxu0 0.0
        %470 = vmatprep.subr.mxu0 0.0
        %471 = vmatpush2.msra.mxu0 0.0
        %472 = vmatprep.subr.mxu0 0.0
        %473 = vmatpush2.msra.mxu0 0.0
        %474 = vmatprep.subr.mxu0 0.0
        %475 = vmatpush2.msra.mxu0 0.0
        %476 = vmatprep.subr.mxu0 0.0
        %477 = vmatpush2.msra.mxu0 0.0
        %478 = vmatprep.subr.mxu0 0.0
        %479 = vmatpush2.msra.mxu0 0.0
        %480 = vmatprep.subr.mxu0 0.0
        %481 = vmatpush2.msra.mxu0 0.0
        %482 = vmatprep.subr.mxu0 0.0
        %483 = vmatpush2.msra.mxu0 0.0
        %484 = vmatprep.subr.mxu0 0.0
        %485 = vmatpush2.msra.mxu0 0.0
        %486 = vmatprep.subr.mxu0 0.0
        %487 = vmatpush2.msra.mxu0 0.0
        %488 = vmatprep.mubr.f32.mxu0 0.0
        %489 = vmatmul.mubr.f32.gmra.mxu0 %v422
        %v490 = vpop.f32.mrf.mxu0
        %v491 = vadd.f32 0.0, %v490
        %v492 = vpop.f32.mrf.mxu0
        %493 = vdwg.mxu0
        %v495 = vrot.slane %v491, 4
        %496 = vrot.lane.b32.xlu0 %v495, 127
        %v497 = vpop.permute.xlu0 %496
        %499 = vrot.lane.b32.xlu0 %v491, 126
        %v500 = vpop.permute.xlu0 %499
        %v502 = vsel %vm386, %v491, %v497
        %s503 = scalar_lea.vmem [#allocation2], 16
        %504 = vst.msk [vmem:[%s503] sm:$0xff] %vm388, %v502
        %505 = vst.msk [vmem:[%s503 + $0x8] sm:$0xf] %vm390, %v500
        %s506 = sadd.s32 %s260, 1
        %p507 = scmp.ge.s32.totalorder %s506, 0
        %p508 = scmp.le.s32.totalorder %s506, 15
        %p509 = pnand %p507, %p508
        %p510 = pneg %p509
        %p511 = scmp.gt.s32.totalorder %s506, 0
        %s512 = scalar_select %p511, %s506, 0
        %p513 = scmp.lt.s32.totalorder %s512, 15
        %s514 = scalar_select %p513, %s512, 15
        %s515 = scalar_lea.vmem %s226, %s514 [#allocation3]
        %v516 = vld [vmem:[%s515] sm:$0x1]
        %v517 = vld [vmem:[%s515 + $0x10] sm:$0x1]
        %v518 = vld [vmem:[%s515 + $0x20] sm:$0x1]
        %v519 = vld [vmem:[%s515 + $0x30] sm:$0x1]
        %s520 = scalar_select %p510, 1, 0
        %s521 = scvt.s32.f32 %s520
        %v522 = vstv %s521
        %v523 = vmul.f32 %v516, %v522
        %v524 = vmul.f32 %v517, %v522
        %v525 = vmul.f32 %v518, %v522
        %v526 = vmul.f32 %v519, %v522
        %v531 = vrot.slane %v524, 7
        %v532 = vsel %vm297, %v531, %v523
        %v533 = vrot.slane %v525, 6
        %v534 = vsel %vm300, %v533, %v532
        %v535 = vrot.slane %v526, 5
        %v536 = vsel %vm303, %v535, %v534
        %v537 = vsel %vm305, %v536, 0
        %539 = vmatprep.subr.mxu0 0.0
        %540 = vmatpush1.msra.mxu0 0.0
        %541 = vmatprep.subr.mxu0 0.0
        %542 = vmatpush1.msra.mxu0 0.0
        %543 = vmatprep.subr.mxu0 0.0
        %544 = vmatpush1.msra.mxu0 0.0
        %545 = vmatprep.subr.mxu0 0.0
        %546 = vmatpush1.msra.mxu0 0.0
        %547 = vmatprep.subr.mxu0 0.0
        %548 = vmatpush1.msra.mxu0 0.0
        %549 = vmatprep.subr.mxu0 0.0
        %550 = vmatpush1.msra.mxu0 0.0
        %551 = vmatprep.subr.mxu0 0.0
        %552 = vmatpush1.msra.mxu0 0.0
        %553 = vmatprep.subr.mxu0 0.0
        %554 = vmatpush1.msra.mxu0 0.0
        %555 = vmatprep.subr.mxu0 0.0
        %556 = vmatpush1.msra.mxu0 0.0
        %557 = vmatprep.subr.mxu0 0.0
        %558 = vmatpush1.msra.mxu0 0.0
        %559 = vmatprep.subr.mxu0 0.0
        %560 = vmatpush1.msra.mxu0 0.0
        %561 = vmatprep.subr.mxu0 0.0
        %562 = vmatpush1.msra.mxu0 0.0
        %563 = vmatprep.subr.mxu0 0.0
        %564 = vmatpush1.msra.mxu0 0.0
        %565 = vmatprep.subr.mxu0 0.0
        %566 = vmatpush1.msra.mxu0 0.0
        %567 = vmatprep.subr.mxu0 0.0
        %568 = vmatpush1.msra.mxu0 %v270
        %569 = vmatprep.subr.mxu0 0.0
        %570 = vmatpush1.msra.mxu0 %v269
        %571 = vmatprep.subr.mxu0 0.0
        %572 = vmatpush2.msra.mxu0 0.0
        %573 = vmatprep.subr.mxu0 0.0
        %574 = vmatpush2.msra.mxu0 0.0
        %575 = vmatprep.subr.mxu0 0.0
        %576 = vmatpush2.msra.mxu0 0.0
        %577 = vmatprep.subr.mxu0 0.0
        %578 = vmatpush2.msra.mxu0 0.0
        %579 = vmatprep.subr.mxu0 0.0
        %580 = vmatpush2.msra.mxu0 0.0
        %581 = vmatprep.subr.mxu0 0.0
        %582 = vmatpush2.msra.mxu0 0.0
        %583 = vmatprep.subr.mxu0 0.0
        %584 = vmatpush2.msra.mxu0 0.0
        %585 = vmatprep.subr.mxu0 0.0
        %586 = vmatpush2.msra.mxu0 0.0
        %587 = vmatprep.subr.mxu0 0.0
        %588 = vmatpush2.msra.mxu0 0.0
        %589 = vmatprep.subr.mxu0 0.0
        %590 = vmatpush2.msra.mxu0 0.0
        %591 = vmatprep.subr.mxu0 0.0
        %592 = vmatpush2.msra.mxu0 0.0
        %593 = vmatprep.subr.mxu0 0.0
        %594 = vmatpush2.msra.mxu0 0.0
        %595 = vmatprep.subr.mxu0 0.0
        %596 = vmatpush2.msra.mxu0 0.0
        %597 = vmatprep.subr.mxu0 0.0
        %598 = vmatpush2.msra.mxu0 0.0
        %599 = vmatprep.subr.mxu0 0.0
        %600 = vmatpush2.msra.mxu0 0.0
        %601 = vmatprep.subr.mxu0 0.0
        %602 = vmatpush2.msra.mxu0 0.0
        %603 = vmatprep.mubr.f32.mxu0 0.0
        %604 = vmatmul.mubr.f32.gmra.mxu0 %v537
        %v605 = vpop.f32.mrf.mxu0
        %v606 = vadd.f32 0.0, %v605
        %v607 = vpop.f32.mrf.mxu0
        %608 = vdwg.mxu0
        %v610 = vrot.slane %v606, 4
        %611 = vrot.lane.b32.xlu0 %v610, 127
        %v612 = vpop.permute.xlu0 %611
        %614 = vrot.lane.b32.xlu0 %v606, 126
        %v615 = vpop.permute.xlu0 %614
        %v617 = vsel %vm386, %v606, %v612
        %s618 = scalar_lea.vmem [#allocation2], 32
        %619 = vst.msk [vmem:[%s618] sm:$0xff] %vm388, %v617
        %620 = vst.msk [vmem:[%s618 + $0x8] sm:$0xf] %vm390, %v615
        %s621 = sadd.s32 %s260, 2
        %p622 = scmp.ge.s32.totalorder %s621, 0
        %p623 = scmp.le.s32.totalorder %s621, 15
        %p624 = pnand %p622, %p623
        %p625 = pneg %p624
        %p626 = scmp.gt.s32.totalorder %s621, 0
        %s627 = scalar_select %p626, %s621, 0
        %p628 = scmp.lt.s32.totalorder %s627, 15
        %s629 = scalar_select %p628, %s627, 15
        %s630 = scalar_lea.vmem %s226, %s629 [#allocation3]
        %v631 = vld [vmem:[%s630] sm:$0x1]
        %v632 = vld [vmem:[%s630 + $0x10] sm:$0x1]
        %v633 = vld [vmem:[%s630 + $0x20] sm:$0x1]
        %v634 = vld [vmem:[%s630 + $0x30] sm:$0x1]
        %s635 = scalar_select %p625, 1, 0
        %s636 = scvt.s32.f32 %s635
        %v637 = vstv %s636
        %v638 = vmul.f32 %v631, %v637
        %v639 = vmul.f32 %v632, %v637
        %v640 = vmul.f32 %v633, %v637
        %v641 = vmul.f32 %v634, %v637
        %v646 = vrot.slane %v639, 7
        %v647 = vsel %vm297, %v646, %v638
        %v648 = vrot.slane %v640, 6
        %v649 = vsel %vm300, %v648, %v647
        %v650 = vrot.slane %v641, 5
        %v651 = vsel %vm303, %v650, %v649
        %v652 = vsel %vm305, %v651, 0
        %654 = vmatprep.subr.mxu0 0.0
        %655 = vmatpush1.msra.mxu0 0.0
        %656 = vmatprep.subr.mxu0 0.0
        %657 = vmatpush1.msra.mxu0 0.0
        %658 = vmatprep.subr.mxu0 0.0
        %659 = vmatpush1.msra.mxu0 0.0
        %660 = vmatprep.subr.mxu0 0.0
        %661 = vmatpush1.msra.mxu0 0.0
        %662 = vmatprep.subr.mxu0 0.0
        %663 = vmatpush1.msra.mxu0 0.0
        %664 = vmatprep.subr.mxu0 0.0
        %665 = vmatpush1.msra.mxu0 0.0
        %666 = vmatprep.subr.mxu0 0.0
        %667 = vmatpush1.msra.mxu0 0.0
        %668 = vmatprep.subr.mxu0 0.0
        %669 = vmatpush1.msra.mxu0 0.0
        %670 = vmatprep.subr.mxu0 0.0
        %671 = vmatpush1.msra.mxu0 0.0
        %672 = vmatprep.subr.mxu0 0.0
        %673 = vmatpush1.msra.mxu0 0.0
        %674 = vmatprep.subr.mxu0 0.0
        %675 = vmatpush1.msra.mxu0 0.0
        %676 = vmatprep.subr.mxu0 0.0
        %677 = vmatpush1.msra.mxu0 0.0
        %678 = vmatprep.subr.mxu0 0.0
        %679 = vmatpush1.msra.mxu0 0.0
        %680 = vmatprep.subr.mxu0 0.0
        %681 = vmatpush1.msra.mxu0 0.0
        %682 = vmatprep.subr.mxu0 0.0
        %683 = vmatpush1.msra.mxu0 %v270
        %684 = vmatprep.subr.mxu0 0.0
        %685 = vmatpush1.msra.mxu0 %v269
        %686 = vmatprep.subr.mxu0 0.0
        %687 = vmatpush2.msra.mxu0 0.0
        %688 = vmatprep.subr.mxu0 0.0
        %689 = vmatpush2.msra.mxu0 0.0
        %690 = vmatprep.subr.mxu0 0.0
        %691 = vmatpush2.msra.mxu0 0.0
        %692 = vmatprep.subr.mxu0 0.0
        %693 = vmatpush2.msra.mxu0 0.0
        %694 = vmatprep.subr.mxu0 0.0
        %695 = vmatpush2.msra.mxu0 0.0
        %696 = vmatprep.subr.mxu0 0.0
        %697 = vmatpush2.msra.mxu0 0.0
        %698 = vmatprep.subr.mxu0 0.0
        %699 = vmatpush2.msra.mxu0 0.0
        %700 = vmatprep.subr.mxu0 0.0
        %701 = vmatpush2.msra.mxu0 0.0
        %702 = vmatprep.subr.mxu0 0.0
        %703 = vmatpush2.msra.mxu0 0.0
        %704 = vmatprep.subr.mxu0 0.0
        %705 = vmatpush2.msra.mxu0 0.0
        %706 = vmatprep.subr.mxu0 0.0
        %707 = vmatpush2.msra.mxu0 0.0
        %708 = vmatprep.subr.mxu0 0.0
        %709 = vmatpush2.msra.mxu0 0.0
        %710 = vmatprep.subr.mxu0 0.0
        %711 = vmatpush2.msra.mxu0 0.0
        %712 = vmatprep.subr.mxu0 0.0
        %713 = vmatpush2.msra.mxu0 0.0
        %714 = vmatprep.subr.mxu0 0.0
        %715 = vmatpush2.msra.mxu0 0.0
        %716 = vmatprep.subr.mxu0 0.0
        %717 = vmatpush2.msra.mxu0 0.0
        %718 = vmatprep.mubr.f32.mxu0 0.0
        %719 = vmatmul.mubr.f32.gmra.mxu0 %v652
        %v720 = vpop.f32.mrf.mxu0
        %v721 = vadd.f32 0.0, %v720
        %v722 = vpop.f32.mrf.mxu0
        %723 = vdwg.mxu0
        %v725 = vrot.slane %v721, 4
        %726 = vrot.lane.b32.xlu0 %v725, 127
        %v727 = vpop.permute.xlu0 %726
        %729 = vrot.lane.b32.xlu0 %v721, 126
        %v730 = vpop.permute.xlu0 %729
        %v732 = vsel %vm386, %v721, %v727
        %s733 = scalar_lea.vmem [#allocation2], 48
        %734 = vst.msk [vmem:[%s733] sm:$0xff] %vm388, %v732
        %735 = vst.msk [vmem:[%s733 + $0x8] sm:$0xf] %vm390, %v730
        %s736 = sadd.s32 %s260, 3
        %p737 = scmp.ge.s32.totalorder %s736, 0
        %p738 = scmp.le.s32.totalorder %s736, 15
        %p739 = pnand %p737, %p738
        %p740 = pneg %p739
        %p741 = scmp.gt.s32.totalorder %s736, 0
        %s742 = scalar_select %p741, %s736, 0
        %p743 = scmp.lt.s32.totalorder %s742, 15
        %s744 = scalar_select %p743, %s742, 15
        %s745 = scalar_lea.vmem %s226, %s744 [#allocation3]
        %v746 = vld [vmem:[%s745] sm:$0x1]
        %v747 = vld [vmem:[%s745 + $0x10] sm:$0x1]
        %v748 = vld [vmem:[%s745 + $0x20] sm:$0x1]
        %v749 = vld [vmem:[%s745 + $0x30] sm:$0x1]
        %s750 = scalar_select %p740, 1, 0
        %s751 = scvt.s32.f32 %s750
        %v752 = vstv %s751
        %v753 = vmul.f32 %v746, %v752
        %v754 = vmul.f32 %v747, %v752
        %v755 = vmul.f32 %v748, %v752
        %v756 = vmul.f32 %v749, %v752
        %v761 = vrot.slane %v754, 7
        %v762 = vsel %vm297, %v761, %v753
        %v763 = vrot.slane %v755, 6
        %v764 = vsel %vm300, %v763, %v762
        %v765 = vrot.slane %v756, 5
        %v766 = vsel %vm303, %v765, %v764
        %v767 = vsel %vm305, %v766, 0
        %769 = vmatprep.subr.mxu0 0.0
        %770 = vmatpush1.msra.mxu0 0.0
        %771 = vmatprep.subr.mxu0 0.0
        %772 = vmatpush1.msra.mxu0 0.0
        %773 = vmatprep.subr.mxu0 0.0
        %774 = vmatpush1.msra.mxu0 0.0
        %775 = vmatprep.subr.mxu0 0.0
        %776 = vmatpush1.msra.mxu0 0.0
        %777 = vmatprep.subr.mxu0 0.0
        %778 = vmatpush1.msra.mxu0 0.0
        %779 = vmatprep.subr.mxu0 0.0
        %780 = vmatpush1.msra.mxu0 0.0
        %781 = vmatprep.subr.mxu0 0.0
        %782 = vmatpush1.msra.mxu0 0.0
        %783 = vmatprep.subr.mxu0 0.0
        %784 = vmatpush1.msra.mxu0 0.0
        %785 = vmatprep.subr.mxu0 0.0
        %786 = vmatpush1.msra.mxu0 0.0
        %787 = vmatprep.subr.mxu0 0.0
        %788 = vmatpush1.msra.mxu0 0.0
        %789 = vmatprep.subr.mxu0 0.0
        %790 = vmatpush1.msra.mxu0 0.0
        %791 = vmatprep.subr.mxu0 0.0
        %792 = vmatpush1.msra.mxu0 0.0
        %793 = vmatprep.subr.mxu0 0.0
        %794 = vmatpush1.msra.mxu0 0.0
        %795 = vmatprep.subr.mxu0 0.0
        %796 = vmatpush1.msra.mxu0 0.0
        %797 = vmatprep.subr.mxu0 0.0
        %798 = vmatpush1.msra.mxu0 %v270
        %799 = vmatprep.subr.mxu0 0.0
        %800 = vmatpush1.msra.mxu0 %v269
        %801 = vmatprep.subr.mxu0 0.0
        %802 = vmatpush2.msra.mxu0 0.0
        %803 = vmatprep.subr.mxu0 0.0
        %804 = vmatpush2.msra.mxu0 0.0
        %805 = vmatprep.subr.mxu0 0.0
        %806 = vmatpush2.msra.mxu0 0.0
        %807 = vmatprep.subr.mxu0 0.0
        %808 = vmatpush2.msra.mxu0 0.0
        %809 = vmatprep.subr.mxu0 0.0
        %810 = vmatpush2.msra.mxu0 0.0
        %811 = vmatprep.subr.mxu0 0.0
        %812 = vmatpush2.msra.mxu0 0.0
        %813 = vmatprep.subr.mxu0 0.0
        %814 = vmatpush2.msra.mxu0 0.0
        %815 = vmatprep.subr.mxu0 0.0
        %816 = vmatpush2.msra.mxu0 0.0
        %817 = vmatprep.subr.mxu0 0.0
        %818 = vmatpush2.msra.mxu0 0.0
        %819 = vmatprep.subr.mxu0 0.0
        %820 = vmatpush2.msra.mxu0 0.0
        %821 = vmatprep.subr.mxu0 0.0
        %822 = vmatpush2.msra.mxu0 0.0
        %823 = vmatprep.subr.mxu0 0.0
        %824 = vmatpush2.msra.mxu0 0.0
        %825 = vmatprep.subr.mxu0 0.0
        %826 = vmatpush2.msra.mxu0 0.0
        %827 = vmatprep.subr.mxu0 0.0
        %828 = vmatpush2.msra.mxu0 0.0
        %829 = vmatprep.subr.mxu0 0.0
        %830 = vmatpush2.msra.mxu0 0.0
        %831 = vmatprep.subr.mxu0 0.0
        %832 = vmatpush2.msra.mxu0 0.0
        %833 = vmatprep.mubr.f32.mxu0 0.0
        %834 = vmatmul.mubr.f32.gmra.mxu0 %v767
        %v835 = vpop.f32.mrf.mxu0
        %v836 = vadd.f32 0.0, %v835
        %v837 = vpop.f32.mrf.mxu0
        %838 = vdwg.mxu0
        %v840 = vrot.slane %v836, 4
        %841 = vrot.lane.b32.xlu0 %v840, 127
        %v842 = vpop.permute.xlu0 %841
        %844 = vrot.lane.b32.xlu0 %v836, 126
        %v845 = vpop.permute.xlu0 %844
        %v847 = vsel %vm386, %v836, %v842
        %s848 = scalar_lea.vmem [#allocation2], 64
        %849 = vst.msk [vmem:[%s848] sm:$0xff] %vm388, %v847
        %850 = vst.msk [vmem:[%s848 + $0x8] sm:$0xf] %vm390, %v845
        %s851 = sadd.s32 %s260, 4
        %p852 = scmp.ge.s32.totalorder %s851, 0
        %p853 = scmp.le.s32.totalorder %s851, 15
        %p854 = pnand %p852, %p853
        %p855 = pneg %p854
        %p856 = scmp.gt.s32.totalorder %s851, 0
        %s857 = scalar_select %p856, %s851, 0
        %p858 = scmp.lt.s32.totalorder %s857, 15
        %s859 = scalar_select %p858, %s857, 15
        %s860 = scalar_lea.vmem %s226, %s859 [#allocation3]
        %v861 = vld [vmem:[%s860] sm:$0x1]
        %v862 = vld [vmem:[%s860 + $0x10] sm:$0x1]
        %v863 = vld [vmem:[%s860 + $0x20] sm:$0x1]
        %v864 = vld [vmem:[%s860 + $0x30] sm:$0x1]
        %s865 = scalar_select %p855, 1, 0
        %s866 = scvt.s32.f32 %s865
        %v867 = vstv %s866
        %v868 = vmul.f32 %v861, %v867
        %v869 = vmul.f32 %v862, %v867
        %v870 = vmul.f32 %v863, %v867
        %v871 = vmul.f32 %v864, %v867
        %v876 = vrot.slane %v869, 7
        %v877 = vsel %vm297, %v876, %v868
        %v878 = vrot.slane %v870, 6
        %v879 = vsel %vm300, %v878, %v877
        %v880 = vrot.slane %v871, 5
        %v881 = vsel %vm303, %v880, %v879
        %v882 = vsel %vm305, %v881, 0
        %884 = vmatprep.subr.mxu0 0.0
        %885 = vmatpush1.msra.mxu0 0.0
        %886 = vmatprep.subr.mxu0 0.0
        %887 = vmatpush1.msra.mxu0 0.0
        %888 = vmatprep.subr.mxu0 0.0
        %889 = vmatpush1.msra.mxu0 0.0
        %890 = vmatprep.subr.mxu0 0.0
        %891 = vmatpush1.msra.mxu0 0.0
        %892 = vmatprep.subr.mxu0 0.0
        %893 = vmatpush1.msra.mxu0 0.0
        %894 = vmatprep.subr.mxu0 0.0
        %895 = vmatpush1.msra.mxu0 0.0
        %896 = vmatprep.subr.mxu0 0.0
        %897 = vmatpush1.msra.mxu0 0.0
        %898 = vmatprep.subr.mxu0 0.0
        %899 = vmatpush1.msra.mxu0 0.0
        %900 = vmatprep.subr.mxu0 0.0
        %901 = vmatpush1.msra.mxu0 0.0
        %902 = vmatprep.subr.mxu0 0.0
        %903 = vmatpush1.msra.mxu0 0.0
        %904 = vmatprep.subr.mxu0 0.0
        %905 = vmatpush1.msra.mxu0 0.0
        %906 = vmatprep.subr.mxu0 0.0
        %907 = vmatpush1.msra.mxu0 0.0
        %908 = vmatprep.subr.mxu0 0.0
        %909 = vmatpush1.msra.mxu0 0.0
        %910 = vmatprep.subr.mxu0 0.0
        %911 = vmatpush1.msra.mxu0 0.0
        %912 = vmatprep.subr.mxu0 0.0
        %913 = vmatpush1.msra.mxu0 %v270
        %914 = vmatprep.subr.mxu0 0.0
        %915 = vmatpush1.msra.mxu0 %v269
        %916 = vmatprep.subr.mxu0 0.0
        %917 = vmatpush2.msra.mxu0 0.0
        %918 = vmatprep.subr.mxu0 0.0
        %919 = vmatpush2.msra.mxu0 0.0
        %920 = vmatprep.subr.mxu0 0.0
        %921 = vmatpush2.msra.mxu0 0.0
        %922 = vmatprep.subr.mxu0 0.0
        %923 = vmatpush2.msra.mxu0 0.0
        %924 = vmatprep.subr.mxu0 0.0
        %925 = vmatpush2.msra.mxu0 0.0
        %926 = vmatprep.subr.mxu0 0.0
        %927 = vmatpush2.msra.mxu0 0.0
        %928 = vmatprep.subr.mxu0 0.0
        %929 = vmatpush2.msra.mxu0 0.0
        %930 = vmatprep.subr.mxu0 0.0
        %931 = vmatpush2.msra.mxu0 0.0
        %932 = vmatprep.subr.mxu0 0.0
        %933 = vmatpush2.msra.mxu0 0.0
        %934 = vmatprep.subr.mxu0 0.0
        %935 = vmatpush2.msra.mxu0 0.0
        %936 = vmatprep.subr.mxu0 0.0
        %937 = vmatpush2.msra.mxu0 0.0
        %938 = vmatprep.subr.mxu0 0.0
        %939 = vmatpush2.msra.mxu0 0.0
        %940 = vmatprep.subr.mxu0 0.0
        %941 = vmatpush2.msra.mxu0 0.0
        %942 = vmatprep.subr.mxu0 0.0
        %943 = vmatpush2.msra.mxu0 0.0
        %944 = vmatprep.subr.mxu0 0.0
        %945 = vmatpush2.msra.mxu0 0.0
        %946 = vmatprep.subr.mxu0 0.0
        %947 = vmatpush2.msra.mxu0 0.0
        %948 = vmatprep.mubr.f32.mxu0 0.0
        %949 = vmatmul.mubr.f32.gmra.mxu0 %v882
        %v950 = vpop.f32.mrf.mxu0
        %v951 = vadd.f32 0.0, %v950
        %v952 = vpop.f32.mrf.mxu0
        %953 = vdwg.mxu0
        %v955 = vrot.slane %v951, 4
        %956 = vrot.lane.b32.xlu0 %v955, 127
        %v957 = vpop.permute.xlu0 %956
        %959 = vrot.lane.b32.xlu0 %v951, 126
        %v960 = vpop.permute.xlu0 %959
        %v962 = vsel %vm386, %v951, %v957
        %s963 = scalar_lea.vmem [#allocation2], 80
        %964 = vst.msk [vmem:[%s963] sm:$0xff] %vm388, %v962
        %965 = vst.msk [vmem:[%s963 + $0x8] sm:$0xf] %vm390, %v960
        %s966 = sadd.s32 %s260, 5
        %p967 = scmp.ge.s32.totalorder %s966, 0
        %p968 = scmp.le.s32.totalorder %s966, 15
        %p969 = pnand %p967, %p968
        %p970 = pneg %p969
        %p971 = scmp.gt.s32.totalorder %s966, 0
        %s972 = scalar_select %p971, %s966, 0
        %p973 = scmp.lt.s32.totalorder %s972, 15
        %s974 = scalar_select %p973, %s972, 15
        %s975 = scalar_lea.vmem %s226, %s974 [#allocation3]
        %v976 = vld [vmem:[%s975] sm:$0x1]
        %v977 = vld [vmem:[%s975 + $0x10] sm:$0x1]
        %v978 = vld [vmem:[%s975 + $0x20] sm:$0x1]
        %v979 = vld [vmem:[%s975 + $0x30] sm:$0x1]
        %s980 = scalar_select %p970, 1, 0
        %s981 = scvt.s32.f32 %s980
        %v982 = vstv %s981
        %v983 = vmul.f32 %v976, %v982
        %v984 = vmul.f32 %v977, %v982
        %v985 = vmul.f32 %v978, %v982
        %v986 = vmul.f32 %v979, %v982
        %v991 = vrot.slane %v984, 7
        %v992 = vsel %vm297, %v991, %v983
        %v993 = vrot.slane %v985, 6
        %v994 = vsel %vm300, %v993, %v992
        %v995 = vrot.slane %v986, 5
        %v996 = vsel %vm303, %v995, %v994
        %v997 = vsel %vm305, %v996, 0
        %999 = vmatprep.subr.mxu0 0.0
        %1000 = vmatpush1.msra.mxu0 0.0
        %1001 = vmatprep.subr.mxu0 0.0
        %1002 = vmatpush1.msra.mxu0 0.0
        %1003 = vmatprep.subr.mxu0 0.0
        %1004 = vmatpush1.msra.mxu0 0.0
        %1005 = vmatprep.subr.mxu0 0.0
        %1006 = vmatpush1.msra.mxu0 0.0
        %1007 = vmatprep.subr.mxu0 0.0
        %1008 = vmatpush1.msra.mxu0 0.0
        %1009 = vmatprep.subr.mxu0 0.0
        %1010 = vmatpush1.msra.mxu0 0.0
        %1011 = vmatprep.subr.mxu0 0.0
        %1012 = vmatpush1.msra.mxu0 0.0
        %1013 = vmatprep.subr.mxu0 0.0
        %1014 = vmatpush1.msra.mxu0 0.0
        %1015 = vmatprep.subr.mxu0 0.0
        %1016 = vmatpush1.msra.mxu0 0.0
        %1017 = vmatprep.subr.mxu0 0.0
        %1018 = vmatpush1.msra.mxu0 0.0
        %1019 = vmatprep.subr.mxu0 0.0
        %1020 = vmatpush1.msra.mxu0 0.0
        %1021 = vmatprep.subr.mxu0 0.0
        %1022 = vmatpush1.msra.mxu0 0.0
        %1023 = vmatprep.subr.mxu0 0.0
        %1024 = vmatpush1.msra.mxu0 0.0
        %1025 = vmatprep.subr.mxu0 0.0
        %1026 = vmatpush1.msra.mxu0 0.0
        %1027 = vmatprep.subr.mxu0 0.0
        %1028 = vmatpush1.msra.mxu0 %v270
        %1029 = vmatprep.subr.mxu0 0.0
        %1030 = vmatpush1.msra.mxu0 %v269
        %1031 = vmatprep.subr.mxu0 0.0
        %1032 = vmatpush2.msra.mxu0 0.0
        %1033 = vmatprep.subr.mxu0 0.0
        %1034 = vmatpush2.msra.mxu0 0.0
        %1035 = vmatprep.subr.mxu0 0.0
        %1036 = vmatpush2.msra.mxu0 0.0
        %1037 = vmatprep.subr.mxu0 0.0
        %1038 = vmatpush2.msra.mxu0 0.0
        %1039 = vmatprep.subr.mxu0 0.0
        %1040 = vmatpush2.msra.mxu0 0.0
        %1041 = vmatprep.subr.mxu0 0.0
        %1042 = vmatpush2.msra.mxu0 0.0
        %1043 = vmatprep.subr.mxu0 0.0
        %1044 = vmatpush2.msra.mxu0 0.0
        %1045 = vmatprep.subr.mxu0 0.0
        %1046 = vmatpush2.msra.mxu0 0.0
        %1047 = vmatprep.subr.mxu0 0.0
        %1048 = vmatpush2.msra.mxu0 0.0
        %1049 = vmatprep.subr.mxu0 0.0
        %1050 = vmatpush2.msra.mxu0 0.0
        %1051 = vmatprep.subr.mxu0 0.0
        %1052 = vmatpush2.msra.mxu0 0.0
        %1053 = vmatprep.subr.mxu0 0.0
        %1054 = vmatpush2.msra.mxu0 0.0
        %1055 = vmatprep.subr.mxu0 0.0
        %1056 = vmatpush2.msra.mxu0 0.0
        %1057 = vmatprep.subr.mxu0 0.0
        %1058 = vmatpush2.msra.mxu0 0.0
        %1059 = vmatprep.subr.mxu0 0.0
        %1060 = vmatpush2.msra.mxu0 0.0
        %1061 = vmatprep.subr.mxu0 0.0
        %1062 = vmatpush2.msra.mxu0 0.0
        %1063 = vmatprep.mubr.f32.mxu0 0.0
        %1064 = vmatmul.mubr.f32.gmra.mxu0 %v997
        %v1065 = vpop.f32.mrf.mxu0
        %v1066 = vadd.f32 0.0, %v1065
        %v1067 = vpop.f32.mrf.mxu0
        %1068 = vdwg.mxu0
        %v1070 = vrot.slane %v1066, 4
        %1071 = vrot.lane.b32.xlu0 %v1070, 127
        %v1072 = vpop.permute.xlu0 %1071
        %1074 = vrot.lane.b32.xlu0 %v1066, 126
        %v1075 = vpop.permute.xlu0 %1074
        %v1077 = vsel %vm386, %v1066, %v1072
        %s1078 = scalar_lea.vmem [#allocation2], 96
        %1079 = vst.msk [vmem:[%s1078] sm:$0xff] %vm388, %v1077
        %1080 = vst.msk [vmem:[%s1078 + $0x8] sm:$0xf] %vm390, %v1075
        %s1081 = sadd.s32 %s260, 6
        %p1082 = scmp.ge.s32.totalorder %s1081, 0
        %p1083 = scmp.le.s32.totalorder %s1081, 15
        %p1084 = pnand %p1082, %p1083
        %p1085 = pneg %p1084
        %p1086 = scmp.gt.s32.totalorder %s1081, 0
        %s1087 = scalar_select %p1086, %s1081, 0
        %p1088 = scmp.lt.s32.totalorder %s1087, 15
        %s1089 = scalar_select %p1088, %s1087, 15
        %s1090 = scalar_lea.vmem %s226, %s1089 [#allocation3]
        %v1091 = vld [vmem:[%s1090] sm:$0x1]
        %v1092 = vld [vmem:[%s1090 + $0x10] sm:$0x1]
        %v1093 = vld [vmem:[%s1090 + $0x20] sm:$0x1]
        %v1094 = vld [vmem:[%s1090 + $0x30] sm:$0x1]
        %s1095 = scalar_select %p1085, 1, 0
        %s1096 = scvt.s32.f32 %s1095
        %v1097 = vstv %s1096
        %v1098 = vmul.f32 %v1091, %v1097
        %v1099 = vmul.f32 %v1092, %v1097
        %v1100 = vmul.f32 %v1093, %v1097
        %v1101 = vmul.f32 %v1094, %v1097
        %v1106 = vrot.slane %v1099, 7
        %v1107 = vsel %vm297, %v1106, %v1098
        %v1108 = vrot.slane %v1100, 6
        %v1109 = vsel %vm300, %v1108, %v1107
        %v1110 = vrot.slane %v1101, 5
        %v1111 = vsel %vm303, %v1110, %v1109
        %v1112 = vsel %vm305, %v1111, 0
        %1114 = vmatprep.subr.mxu0 0.0
        %1115 = vmatpush1.msra.mxu0 0.0
        %1116 = vmatprep.subr.mxu0 0.0
        %1117 = vmatpush1.msra.mxu0 0.0
        %1118 = vmatprep.subr.mxu0 0.0
        %1119 = vmatpush1.msra.mxu0 0.0
        %1120 = vmatprep.subr.mxu0 0.0
        %1121 = vmatpush1.msra.mxu0 0.0
        %1122 = vmatprep.subr.mxu0 0.0
        %1123 = vmatpush1.msra.mxu0 0.0
        %1124 = vmatprep.subr.mxu0 0.0
        %1125 = vmatpush1.msra.mxu0 0.0
        %1126 = vmatprep.subr.mxu0 0.0
        %1127 = vmatpush1.msra.mxu0 0.0
        %1128 = vmatprep.subr.mxu0 0.0
        %1129 = vmatpush1.msra.mxu0 0.0
        %1130 = vmatprep.subr.mxu0 0.0
        %1131 = vmatpush1.msra.mxu0 0.0
        %1132 = vmatprep.subr.mxu0 0.0
        %1133 = vmatpush1.msra.mxu0 0.0
        %1134 = vmatprep.subr.mxu0 0.0
        %1135 = vmatpush1.msra.mxu0 0.0
        %1136 = vmatprep.subr.mxu0 0.0
        %1137 = vmatpush1.msra.mxu0 0.0
        %1138 = vmatprep.subr.mxu0 0.0
        %1139 = vmatpush1.msra.mxu0 0.0
        %1140 = vmatprep.subr.mxu0 0.0
        %1141 = vmatpush1.msra.mxu0 0.0
        %1142 = vmatprep.subr.mxu0 0.0
        %1143 = vmatpush1.msra.mxu0 %v270
        %1144 = vmatprep.subr.mxu0 0.0
        %1145 = vmatpush1.msra.mxu0 %v269
        %1146 = vmatprep.subr.mxu0 0.0
        %1147 = vmatpush2.msra.mxu0 0.0
        %1148 = vmatprep.subr.mxu0 0.0
        %1149 = vmatpush2.msra.mxu0 0.0
        %1150 = vmatprep.subr.mxu0 0.0
        %1151 = vmatpush2.msra.mxu0 0.0
        %1152 = vmatprep.subr.mxu0 0.0
        %1153 = vmatpush2.msra.mxu0 0.0
        %1154 = vmatprep.subr.mxu0 0.0
        %1155 = vmatpush2.msra.mxu0 0.0
        %1156 = vmatprep.subr.mxu0 0.0
        %1157 = vmatpush2.msra.mxu0 0.0
        %1158 = vmatprep.subr.mxu0 0.0
        %1159 = vmatpush2.msra.mxu0 0.0
        %1160 = vmatprep.subr.mxu0 0.0
        %1161 = vmatpush2.msra.mxu0 0.0
        %1162 = vmatprep.subr.mxu0 0.0
        %1163 = vmatpush2.msra.mxu0 0.0
        %1164 = vmatprep.subr.mxu0 0.0
        %1165 = vmatpush2.msra.mxu0 0.0
        %1166 = vmatprep.subr.mxu0 0.0
        %1167 = vmatpush2.msra.mxu0 0.0
        %1168 = vmatprep.subr.mxu0 0.0
        %1169 = vmatpush2.msra.mxu0 0.0
        %1170 = vmatprep.subr.mxu0 0.0
        %1171 = vmatpush2.msra.mxu0 0.0
        %1172 = vmatprep.subr.mxu0 0.0
        %1173 = vmatpush2.msra.mxu0 0.0
        %1174 = vmatprep.subr.mxu0 0.0
        %1175 = vmatpush2.msra.mxu0 0.0
        %1176 = vmatprep.subr.mxu0 0.0
        %1177 = vmatpush2.msra.mxu0 0.0
        %1178 = vmatprep.mubr.f32.mxu0 0.0
        %1179 = vmatmul.mubr.f32.gmra.mxu0 %v1112
        %v1180 = vpop.f32.mrf.mxu0
        %v1181 = vadd.f32 0.0, %v1180
        %v1182 = vpop.f32.mrf.mxu0
        %1183 = vdwg.mxu0
        %v1185 = vrot.slane %v1181, 4
        %1186 = vrot.lane.b32.xlu0 %v1185, 127
        %v1187 = vpop.permute.xlu0 %1186
        %1189 = vrot.lane.b32.xlu0 %v1181, 126
        %v1190 = vpop.permute.xlu0 %1189
        %v1192 = vsel %vm386, %v1181, %v1187
        %s1193 = scalar_lea.vmem [#allocation2], 112
        %1194 = vst.msk [vmem:[%s1193] sm:$0xff] %vm388, %v1192
        %1195 = vst.msk [vmem:[%s1193 + $0x8] sm:$0xf] %vm390, %v1190
        %s1196 = sadd.s32 %s260, 7
        %p1197 = scmp.ge.s32.totalorder %s1196, 0
        %p1198 = scmp.le.s32.totalorder %s1196, 15
        %p1199 = pnand %p1197, %p1198
        %p1200 = pneg %p1199
        %p1201 = scmp.gt.s32.totalorder %s1196, 0
        %s1202 = scalar_select %p1201, %s1196, 0
        %p1203 = scmp.lt.s32.totalorder %s1202, 15
        %s1204 = scalar_select %p1203, %s1202, 15
        %s1205 = scalar_lea.vmem %s226, %s1204 [#allocation3]
        %v1206 = vld [vmem:[%s1205] sm:$0x1]
        %v1207 = vld [vmem:[%s1205 + $0x10] sm:$0x1]
        %v1208 = vld [vmem:[%s1205 + $0x20] sm:$0x1]
        %v1209 = vld [vmem:[%s1205 + $0x30] sm:$0x1]
        %s1210 = scalar_select %p1200, 1, 0
        %s1211 = scvt.s32.f32 %s1210
        %v1212 = vstv %s1211
        %v1213 = vmul.f32 %v1206, %v1212
        %v1214 = vmul.f32 %v1207, %v1212
        %v1215 = vmul.f32 %v1208, %v1212
        %v1216 = vmul.f32 %v1209, %v1212
        %v1221 = vrot.slane %v1214, 7
        %v1222 = vsel %vm297, %v1221, %v1213
        %v1223 = vrot.slane %v1215, 6
        %v1224 = vsel %vm300, %v1223, %v1222
        %v1225 = vrot.slane %v1216, 5
        %v1226 = vsel %vm303, %v1225, %v1224
        %v1227 = vsel %vm305, %v1226, 0
        %1229 = vmatprep.subr.mxu0 0.0
        %1230 = vmatpush1.msra.mxu0 0.0
        %1231 = vmatprep.subr.mxu0 0.0
        %1232 = vmatpush1.msra.mxu0 0.0
        %1233 = vmatprep.subr.mxu0 0.0
        %1234 = vmatpush1.msra.mxu0 0.0
        %1235 = vmatprep.subr.mxu0 0.0
        %1236 = vmatpush1.msra.mxu0 0.0
        %1237 = vmatprep.subr.mxu0 0.0
        %1238 = vmatpush1.msra.mxu0 0.0
        %1239 = vmatprep.subr.mxu0 0.0
        %1240 = vmatpush1.msra.mxu0 0.0
        %1241 = vmatprep.subr.mxu0 0.0
        %1242 = vmatpush1.msra.mxu0 0.0
        %1243 = vmatprep.subr.mxu0 0.0
        %1244 = vmatpush1.msra.mxu0 0.0
        %1245 = vmatprep.subr.mxu0 0.0
        %1246 = vmatpush1.msra.mxu0 0.0
        %1247 = vmatprep.subr.mxu0 0.0
        %1248 = vmatpush1.msra.mxu0 0.0
        %1249 = vmatprep.subr.mxu0 0.0
        %1250 = vmatpush1.msra.mxu0 0.0
        %1251 = vmatprep.subr.mxu0 0.0
        %1252 = vmatpush1.msra.mxu0 0.0
        %1253 = vmatprep.subr.mxu0 0.0
        %1254 = vmatpush1.msra.mxu0 0.0
        %1255 = vmatprep.subr.mxu0 0.0
        %1256 = vmatpush1.msra.mxu0 0.0
        %1257 = vmatprep.subr.mxu0 0.0
        %1258 = vmatpush1.msra.mxu0 %v270
        %1259 = vmatprep.subr.mxu0 0.0
        %1260 = vmatpush1.msra.mxu0 %v269
        %1261 = vmatprep.subr.mxu0 0.0
        %1262 = vmatpush2.msra.mxu0 0.0
        %1263 = vmatprep.subr.mxu0 0.0
        %1264 = vmatpush2.msra.mxu0 0.0
        %1265 = vmatprep.subr.mxu0 0.0
        %1266 = vmatpush2.msra.mxu0 0.0
        %1267 = vmatprep.subr.mxu0 0.0
        %1268 = vmatpush2.msra.mxu0 0.0
        %1269 = vmatprep.subr.mxu0 0.0
        %1270 = vmatpush2.msra.mxu0 0.0
        %1271 = vmatprep.subr.mxu0 0.0
        %1272 = vmatpush2.msra.mxu0 0.0
        %1273 = vmatprep.subr.mxu0 0.0
        %1274 = vmatpush2.msra.mxu0 0.0
        %1275 = vmatprep.subr.mxu0 0.0
        %1276 = vmatpush2.msra.mxu0 0.0
        %1277 = vmatprep.subr.mxu0 0.0
        %1278 = vmatpush2.msra.mxu0 0.0
        %1279 = vmatprep.subr.mxu0 0.0
        %1280 = vmatpush2.msra.mxu0 0.0
        %1281 = vmatprep.subr.mxu0 0.0
        %1282 = vmatpush2.msra.mxu0 0.0
        %1283 = vmatprep.subr.mxu0 0.0
        %1284 = vmatpush2.msra.mxu0 0.0
        %1285 = vmatprep.subr.mxu0 0.0
        %1286 = vmatpush2.msra.mxu0 0.0
        %1287 = vmatprep.subr.mxu0 0.0
        %1288 = vmatpush2.msra.mxu0 0.0
        %1289 = vmatprep.subr.mxu0 0.0
        %1290 = vmatpush2.msra.mxu0 0.0
        %1291 = vmatprep.subr.mxu0 0.0
        %1292 = vmatpush2.msra.mxu0 0.0
        %1293 = vmatprep.mubr.f32.mxu0 0.0
        %1294 = vmatmul.mubr.f32.gmra.mxu0 %v1227
        %v1295 = vpop.f32.mrf.mxu0
        %v1296 = vadd.f32 0.0, %v1295
        %v1297 = vpop.f32.mrf.mxu0
        %1298 = vdwg.mxu0
        %v1300 = vrot.slane %v1296, 4
        %1301 = vrot.lane.b32.xlu0 %v1300, 127
        %v1302 = vpop.permute.xlu0 %1301
        %1304 = vrot.lane.b32.xlu0 %v1296, 126
        %v1305 = vpop.permute.xlu0 %1304
        %v1307 = vsel %vm386, %v1296, %v1302
        %s1308 = scalar_lea.vmem [#allocation2], 128
        %1309 = vst.msk [vmem:[%s1308] sm:$0xff] %vm388, %v1307
        %1310 = vst.msk [vmem:[%s1308 + $0x8] sm:$0xf] %vm390, %v1305
        %s1311 = sadd.s32 %s260, 8
        %p1312 = scmp.ge.s32.totalorder %s1311, 0
        %p1313 = scmp.le.s32.totalorder %s1311, 15
        %p1314 = pnand %p1312, %p1313
        %p1315 = pneg %p1314
        %p1316 = scmp.gt.s32.totalorder %s1311, 0
        %s1317 = scalar_select %p1316, %s1311, 0
        %p1318 = scmp.lt.s32.totalorder %s1317, 15
        %s1319 = scalar_select %p1318, %s1317, 15
        %s1320 = scalar_lea.vmem %s226, %s1319 [#allocation3]
        %v1321 = vld [vmem:[%s1320] sm:$0x1]
        %v1322 = vld [vmem:[%s1320 + $0x10] sm:$0x1]
        %v1323 = vld [vmem:[%s1320 + $0x20] sm:$0x1]
        %v1324 = vld [vmem:[%s1320 + $0x30] sm:$0x1]
        %s1325 = scalar_select %p1315, 1, 0
        %s1326 = scvt.s32.f32 %s1325
        %v1327 = vstv %s1326
        %v1328 = vmul.f32 %v1321, %v1327
        %v1329 = vmul.f32 %v1322, %v1327
        %v1330 = vmul.f32 %v1323, %v1327
        %v1331 = vmul.f32 %v1324, %v1327
        %v1336 = vrot.slane %v1329, 7
        %v1337 = vsel %vm297, %v1336, %v1328
        %v1338 = vrot.slane %v1330, 6
        %v1339 = vsel %vm300, %v1338, %v1337
        %v1340 = vrot.slane %v1331, 5
        %v1341 = vsel %vm303, %v1340, %v1339
        %v1342 = vsel %vm305, %v1341, 0
        %1344 = vmatprep.subr.mxu0 0.0
        %1345 = vmatpush1.msra.mxu0 0.0
        %1346 = vmatprep.subr.mxu0 0.0
        %1347 = vmatpush1.msra.mxu0 0.0
        %1348 = vmatprep.subr.mxu0 0.0
        %1349 = vmatpush1.msra.mxu0 0.0
        %1350 = vmatprep.subr.mxu0 0.0
        %1351 = vmatpush1.msra.mxu0 0.0
        %1352 = vmatprep.subr.mxu0 0.0
        %1353 = vmatpush1.msra.mxu0 0.0
        %1354 = vmatprep.subr.mxu0 0.0
        %1355 = vmatpush1.msra.mxu0 0.0
        %1356 = vmatprep.subr.mxu0 0.0
        %1357 = vmatpush1.msra.mxu0 0.0
        %1358 = vmatprep.subr.mxu0 0.0
        %1359 = vmatpush1.msra.mxu0 0.0
        %1360 = vmatprep.subr.mxu0 0.0
        %1361 = vmatpush1.msra.mxu0 0.0
        %1362 = vmatprep.subr.mxu0 0.0
        %1363 = vmatpush1.msra.mxu0 0.0
        %1364 = vmatprep.subr.mxu0 0.0
        %1365 = vmatpush1.msra.mxu0 0.0
        %1366 = vmatprep.subr.mxu0 0.0
        %1367 = vmatpush1.msra.mxu0 0.0
        %1368 = vmatprep.subr.mxu0 0.0
        %1369 = vmatpush1.msra.mxu0 0.0
        %1370 = vmatprep.subr.mxu0 0.0
        %1371 = vmatpush1.msra.mxu0 0.0
        %1372 = vmatprep.subr.mxu0 0.0
        %1373 = vmatpush1.msra.mxu0 %v270
        %1374 = vmatprep.subr.mxu0 0.0
        %1375 = vmatpush1.msra.mxu0 %v269
        %1376 = vmatprep.subr.mxu0 0.0
        %1377 = vmatpush2.msra.mxu0 0.0
        %1378 = vmatprep.subr.mxu0 0.0
        %1379 = vmatpush2.msra.mxu0 0.0
        %1380 = vmatprep.subr.mxu0 0.0
        %1381 = vmatpush2.msra.mxu0 0.0
        %1382 = vmatprep.subr.mxu0 0.0
        %1383 = vmatpush2.msra.mxu0 0.0
        %1384 = vmatprep.subr.mxu0 0.0
        %1385 = vmatpush2.msra.mxu0 0.0
        %1386 = vmatprep.subr.mxu0 0.0
        %1387 = vmatpush2.msra.mxu0 0.0
        %1388 = vmatprep.subr.mxu0 0.0
        %1389 = vmatpush2.msra.mxu0 0.0
        %1390 = vmatprep.subr.mxu0 0.0
        %1391 = vmatpush2.msra.mxu0 0.0
        %1392 = vmatprep.subr.mxu0 0.0
        %1393 = vmatpush2.msra.mxu0 0.0
        %1394 = vmatprep.subr.mxu0 0.0
        %1395 = vmatpush2.msra.mxu0 0.0
        %1396 = vmatprep.subr.mxu0 0.0
        %1397 = vmatpush2.msra.mxu0 0.0
        %1398 = vmatprep.subr.mxu0 0.0
        %1399 = vmatpush2.msra.mxu0 0.0
        %1400 = vmatprep.subr.mxu0 0.0
        %1401 = vmatpush2.msra.mxu0 0.0
        %1402 = vmatprep.subr.mxu0 0.0
        %1403 = vmatpush2.msra.mxu0 0.0
        %1404 = vmatprep.subr.mxu0 0.0
        %1405 = vmatpush2.msra.mxu0 0.0
        %1406 = vmatprep.subr.mxu0 0.0
        %1407 = vmatpush2.msra.mxu0 0.0
        %1408 = vmatprep.mubr.f32.mxu0 0.0
        %1409 = vmatmul.mubr.f32.gmra.mxu0 %v1342
        %v1410 = vpop.f32.mrf.mxu0
        %v1411 = vadd.f32 0.0, %v1410
        %v1412 = vpop.f32.mrf.mxu0
        %1413 = vdwg.mxu0
        %v1415 = vrot.slane %v1411, 4
        %1416 = vrot.lane.b32.xlu0 %v1415, 127
        %v1417 = vpop.permute.xlu0 %1416
        %1419 = vrot.lane.b32.xlu0 %v1411, 126
        %v1420 = vpop.permute.xlu0 %1419
        %v1422 = vsel %vm386, %v1411, %v1417
        %s1423 = scalar_lea.vmem [#allocation2], 144
        %1424 = vst.msk [vmem:[%s1423] sm:$0xff] %vm388, %v1422
        %1425 = vst.msk [vmem:[%s1423 + $0x8] sm:$0xf] %vm390, %v1420
        %v1426 = vld [vmem:[#allocation2] sm:$0xff]
        %v1427 = vld [vmem:[#allocation2 + $0x8] sm:$0xf]
        %v1428 = vld [vmem:[%s503] sm:$0xff]
        %v1429 = vld [vmem:[%s503 + $0x8] sm:$0xf]
        %vm1430 = vcmask 97280
        %v1432 = vsel %vm1430, %v263, 0
        %v1435 = vsel %vm386, %v1429, 0
        %1437 = vmatprep.subr.mxu0 0.0
        %1438 = vmatpush1.msra.mxu0 0.0
        %1439 = vmatprep.subr.mxu0 0.0
        %1440 = vmatpush1.msra.mxu0 0.0
        %1441 = vmatprep.subr.mxu0 0.0
        %1442 = vmatpush1.msra.mxu0 0.0
        %1443 = vmatprep.subr.mxu0 0.0
        %1444 = vmatpush1.msra.mxu0 0.0
        %1445 = vmatprep.subr.mxu0 0.0
        %1446 = vmatpush1.msra.mxu0 0.0
        %1447 = vmatprep.subr.mxu0 0.0
        %1448 = vmatpush1.msra.mxu0 0.0
        %1449 = vmatprep.subr.mxu0 0.0
        %1450 = vmatpush1.msra.mxu0 0.0
        %1451 = vmatprep.subr.mxu0 0.0
        %1452 = vmatpush1.msra.mxu0 0.0
        %1453 = vmatprep.subr.mxu0 0.0
        %1454 = vmatpush1.msra.mxu0 0.0
        %1455 = vmatprep.subr.mxu0 0.0
        %1456 = vmatpush1.msra.mxu0 0.0
        %1457 = vmatprep.subr.mxu0 0.0
        %1458 = vmatpush1.msra.mxu0 0.0
        %1459 = vmatprep.subr.mxu0 0.0
        %1460 = vmatpush1.msra.mxu0 0.0
        %1461 = vmatprep.subr.mxu0 0.0
        %1462 = vmatpush1.msra.mxu0 0.0
        %1463 = vmatprep.subr.mxu0 0.0
        %1464 = vmatpush1.msra.mxu0 0.0
        %1465 = vmatprep.subr.mxu0 0.0
        %1466 = vmatpush1.msra.mxu0 %v1435
        %1467 = vmatprep.subr.mxu0 0.0
        %1468 = vmatpush1.msra.mxu0 %v1428
        %1469 = vmatprep.subr.mxu0 0.0
        %1470 = vmatpush2.msra.mxu0 0.0
        %1471 = vmatprep.subr.mxu0 0.0
        %1472 = vmatpush2.msra.mxu0 0.0
        %1473 = vmatprep.subr.mxu0 0.0
        %1474 = vmatpush2.msra.mxu0 0.0
        %1475 = vmatprep.subr.mxu0 0.0
        %1476 = vmatpush2.msra.mxu0 0.0
        %1477 = vmatprep.subr.mxu0 0.0
        %1478 = vmatpush2.msra.mxu0 0.0
        %1479 = vmatprep.subr.mxu0 0.0
        %1480 = vmatpush2.msra.mxu0 0.0
        %1481 = vmatprep.subr.mxu0 0.0
        %1482 = vmatpush2.msra.mxu0 0.0
        %1483 = vmatprep.subr.mxu0 0.0
        %1484 = vmatpush2.msra.mxu0 0.0
        %1485 = vmatprep.subr.mxu0 0.0
        %1486 = vmatpush2.msra.mxu0 0.0
        %1487 = vmatprep.subr.mxu0 0.0
        %1488 = vmatpush2.msra.mxu0 0.0
        %1489 = vmatprep.subr.mxu0 0.0
        %1490 = vmatpush2.msra.mxu0 0.0
        %1491 = vmatprep.subr.mxu0 0.0
        %1492 = vmatpush2.msra.mxu0 0.0
        %1493 = vmatprep.subr.mxu0 0.0
        %1494 = vmatpush2.msra.mxu0 0.0
        %1495 = vmatprep.subr.mxu0 0.0
        %1496 = vmatpush2.msra.mxu0 0.0
        %1497 = vmatprep.subr.mxu0 0.0
        %1498 = vmatpush2.msra.mxu0 0.0
        %1499 = vmatprep.subr.mxu0 0.0
        %1500 = vmatpush2.msra.mxu0 0.0
        %1501 = vmatprep.mubr.f32.mxu0 0.0
        %1502 = vmatmul.mubr.f32.gmra.mxu0 %v1432
        %v1503 = vpop.f32.mrf.mxu0
        %v1504 = vadd.f32 0.0, %v1503
        %v1505 = vpop.f32.mrf.mxu0
        %1506 = vdwg.mxu0
        %v1508 = vsel %vm1430, %v261, 0
        %v1511 = vsel %vm386, %v1427, 0
        %1513 = vmatprep.subr.mxu0 0.0
        %1514 = vmatpush1.msra.mxu0 0.0
        %1515 = vmatprep.subr.mxu0 0.0
        %1516 = vmatpush1.msra.mxu0 0.0
        %1517 = vmatprep.subr.mxu0 0.0
        %1518 = vmatpush1.msra.mxu0 0.0
        %1519 = vmatprep.subr.mxu0 0.0
        %1520 = vmatpush1.msra.mxu0 0.0
        %1521 = vmatprep.subr.mxu0 0.0
        %1522 = vmatpush1.msra.mxu0 0.0
        %1523 = vmatprep.subr.mxu0 0.0
        %1524 = vmatpush1.msra.mxu0 0.0
        %1525 = vmatprep.subr.mxu0 0.0
        %1526 = vmatpush1.msra.mxu0 0.0
        %1527 = vmatprep.subr.mxu0 0.0
        %1528 = vmatpush1.msra.mxu0 0.0
        %1529 = vmatprep.subr.mxu0 0.0
        %1530 = vmatpush1.msra.mxu0 0.0
        %1531 = vmatprep.subr.mxu0 0.0
        %1532 = vmatpush1.msra.mxu0 0.0
        %1533 = vmatprep.subr.mxu0 0.0
        %1534 = vmatpush1.msra.mxu0 0.0
        %1535 = vmatprep.subr.mxu0 0.0
        %1536 = vmatpush1.msra.mxu0 0.0
        %1537 = vmatprep.subr.mxu0 0.0
        %1538 = vmatpush1.msra.mxu0 0.0
        %1539 = vmatprep.subr.mxu0 0.0
        %1540 = vmatpush1.msra.mxu0 0.0
        %1541 = vmatprep.subr.mxu0 0.0
        %1542 = vmatpush1.msra.mxu0 %v1511
        %1543 = vmatprep.subr.mxu0 0.0
        %1544 = vmatpush1.msra.mxu0 %v1426
        %1545 = vmatprep.subr.mxu0 0.0
        %1546 = vmatpush2.msra.mxu0 0.0
        %1547 = vmatprep.subr.mxu0 0.0
        %1548 = vmatpush2.msra.mxu0 0.0
        %1549 = vmatprep.subr.mxu0 0.0
        %1550 = vmatpush2.msra.mxu0 0.0
        %1551 = vmatprep.subr.mxu0 0.0
        %1552 = vmatpush2.msra.mxu0 0.0
        %1553 = vmatprep.subr.mxu0 0.0
        %1554 = vmatpush2.msra.mxu0 0.0
        %1555 = vmatprep.subr.mxu0 0.0
        %1556 = vmatpush2.msra.mxu0 0.0
        %1557 = vmatprep.subr.mxu0 0.0
        %1558 = vmatpush2.msra.mxu0 0.0
        %1559 = vmatprep.subr.mxu0 0.0
        %1560 = vmatpush2.msra.mxu0 0.0
        %1561 = vmatprep.subr.mxu0 0.0
        %1562 = vmatpush2.msra.mxu0 0.0
        %1563 = vmatprep.subr.mxu0 0.0
        %1564 = vmatpush2.msra.mxu0 0.0
        %1565 = vmatprep.subr.mxu0 0.0
        %1566 = vmatpush2.msra.mxu0 0.0
        %1567 = vmatprep.subr.mxu0 0.0
        %1568 = vmatpush2.msra.mxu0 0.0
        %1569 = vmatprep.subr.mxu0 0.0
        %1570 = vmatpush2.msra.mxu0 0.0
        %1571 = vmatprep.subr.mxu0 0.0
        %1572 = vmatpush2.msra.mxu0 0.0
        %1573 = vmatprep.subr.mxu0 0.0
        %1574 = vmatpush2.msra.mxu0 0.0
        %1575 = vmatprep.subr.mxu0 0.0
        %1576 = vmatpush2.msra.mxu0 0.0
        %1577 = vmatprep.mubr.f32.mxu0 0.0
        %1578 = vmatmul.mubr.f32.gmra.mxu0 %v1508
        %v1579 = vpop.f32.mrf.mxu0
        %v1580 = vadd.f32 %v1504, %v1579
        %v1581 = vpop.f32.mrf.mxu0
        %1582 = vdwg.mxu0
        %1584 = vset.pattern.permute.xlu0 0
        %1585 = vperm.xlu0 %1584, %v268
        %v1586 = vpop.permute.xlu0 %1585
        %v1588 = vadd.f32 %v1580, %v1586
        %1589 = vst.msk [vmem:[%s258] sm:$0xff] %vm388, %v1588
        %v1590 = vld [vmem:[%s503] sm:$0xff]
        %v1591 = vld [vmem:[%s503 + $0x8] sm:$0xf]
        %v1592 = vld [vmem:[%s618] sm:$0xff]
        %v1593 = vld [vmem:[%s618 + $0x8] sm:$0xf]
        %v1595 = vsel %vm1430, %v267, 0
        %v1598 = vsel %vm386, %v1593, 0
        %1600 = vmatprep.subr.mxu0 0.0
        %1601 = vmatpush1.msra.mxu0 0.0
        %1602 = vmatprep.subr.mxu0 0.0
        %1603 = vmatpush1.msra.mxu0 0.0
        %1604 = vmatprep.subr.mxu0 0.0
        %1605 = vmatpush1.msra.mxu0 0.0
        %1606 = vmatprep.subr.mxu0 0.0
        %1607 = vmatpush1.msra.mxu0 0.0
        %1608 = vmatprep.subr.mxu0 0.0
        %1609 = vmatpush1.msra.mxu0 0.0
        %1610 = vmatprep.subr.mxu0 0.0
        %1611 = vmatpush1.msra.mxu0 0.0
        %1612 = vmatprep.subr.mxu0 0.0
        %1613 = vmatpush1.msra.mxu0 0.0
        %1614 = vmatprep.subr.mxu0 0.0
        %1615 = vmatpush1.msra.mxu0 0.0
        %1616 = vmatprep.subr.mxu0 0.0
        %1617 = vmatpush1.msra.mxu0 0.0
        %1618 = vmatprep.subr.mxu0 0.0
        %1619 = vmatpush1.msra.mxu0 0.0
        %1620 = vmatprep.subr.mxu0 0.0
        %1621 = vmatpush1.msra.mxu0 0.0
        %1622 = vmatprep.subr.mxu0 0.0
        %1623 = vmatpush1.msra.mxu0 0.0
        %1624 = vmatprep.subr.mxu0 0.0
        %1625 = vmatpush1.msra.mxu0 0.0
        %1626 = vmatprep.subr.mxu0 0.0
        %1627 = vmatpush1.msra.mxu0 0.0
        %1628 = vmatprep.subr.mxu0 0.0
        %1629 = vmatpush1.msra.mxu0 %v1598
        %1630 = vmatprep.subr.mxu0 0.0
        %1631 = vmatpush1.msra.mxu0 %v1592
        %1632 = vmatprep.subr.mxu0 0.0
        %1633 = vmatpush2.msra.mxu0 0.0
        %1634 = vmatprep.subr.mxu0 0.0
        %1635 = vmatpush2.msra.mxu0 0.0
        %1636 = vmatprep.subr.mxu0 0.0
        %1637 = vmatpush2.msra.mxu0 0.0
        %1638 = vmatprep.subr.mxu0 0.0
        %1639 = vmatpush2.msra.mxu0 0.0
        %1640 = vmatprep.subr.mxu0 0.0
        %1641 = vmatpush2.msra.mxu0 0.0
        %1642 = vmatprep.subr.mxu0 0.0
        %1643 = vmatpush2.msra.mxu0 0.0
        %1644 = vmatprep.subr.mxu0 0.0
        %1645 = vmatpush2.msra.mxu0 0.0
        %1646 = vmatprep.subr.mxu0 0.0
        %1647 = vmatpush2.msra.mxu0 0.0
        %1648 = vmatprep.subr.mxu0 0.0
        %1649 = vmatpush2.msra.mxu0 0.0
        %1650 = vmatprep.subr.mxu0 0.0
        %1651 = vmatpush2.msra.mxu0 0.0
        %1652 = vmatprep.subr.mxu0 0.0
        %1653 = vmatpush2.msra.mxu0 0.0
        %1654 = vmatprep.subr.mxu0 0.0
        %1655 = vmatpush2.msra.mxu0 0.0
        %1656 = vmatprep.subr.mxu0 0.0
        %1657 = vmatpush2.msra.mxu0 0.0
        %1658 = vmatprep.subr.mxu0 0.0
        %1659 = vmatpush2.msra.mxu0 0.0
        %1660 = vmatprep.subr.mxu0 0.0
        %1661 = vmatpush2.msra.mxu0 0.0
        %1662 = vmatprep.subr.mxu0 0.0
        %1663 = vmatpush2.msra.mxu0 0.0
        %1664 = vmatprep.mubr.f32.mxu0 0.0
        %1665 = vmatmul.mubr.f32.gmra.mxu0 %v1595
        %v1666 = vpop.f32.mrf.mxu0
        %v1667 = vadd.f32 0.0, %v1666
        %v1668 = vpop.f32.mrf.mxu0
        %1669 = vdwg.mxu0
        %v1671 = vsel %vm1430, %v265, 0
        %v1674 = vsel %vm386, %v1591, 0
        %1676 = vmatprep.subr.mxu0 0.0
        %1677 = vmatpush1.msra.mxu0 0.0
        %1678 = vmatprep.subr.mxu0 0.0
        %1679 = vmatpush1.msra.mxu0 0.0
        %1680 = vmatprep.subr.mxu0 0.0
        %1681 = vmatpush1.msra.mxu0 0.0
        %1682 = vmatprep.subr.mxu0 0.0
        %1683 = vmatpush1.msra.mxu0 0.0
        %1684 = vmatprep.subr.mxu0 0.0
        %1685 = vmatpush1.msra.mxu0 0.0
        %1686 = vmatprep.subr.mxu0 0.0
        %1687 = vmatpush1.msra.mxu0 0.0
        %1688 = vmatprep.subr.mxu0 0.0
        %1689 = vmatpush1.msra.mxu0 0.0
        %1690 = vmatprep.subr.mxu0 0.0
        %1691 = vmatpush1.msra.mxu0 0.0
        %1692 = vmatprep.subr.mxu0 0.0
        %1693 = vmatpush1.msra.mxu0 0.0
        %1694 = vmatprep.subr.mxu0 0.0
        %1695 = vmatpush1.msra.mxu0 0.0
        %1696 = vmatprep.subr.mxu0 0.0
        %1697 = vmatpush1.msra.mxu0 0.0
        %1698 = vmatprep.subr.mxu0 0.0
        %1699 = vmatpush1.msra.mxu0 0.0
        %1700 = vmatprep.subr.mxu0 0.0
        %1701 = vmatpush1.msra.mxu0 0.0
        %1702 = vmatprep.subr.mxu0 0.0
        %1703 = vmatpush1.msra.mxu0 0.0
        %1704 = vmatprep.subr.mxu0 0.0
        %1705 = vmatpush1.msra.mxu0 %v1674
        %1706 = vmatprep.subr.mxu0 0.0
        %1707 = vmatpush1.msra.mxu0 %v1590
        %1708 = vmatprep.subr.mxu0 0.0
        %1709 = vmatpush2.msra.mxu0 0.0
        %1710 = vmatprep.subr.mxu0 0.0
        %1711 = vmatpush2.msra.mxu0 0.0
        %1712 = vmatprep.subr.mxu0 0.0
        %1713 = vmatpush2.msra.mxu0 0.0
        %1714 = vmatprep.subr.mxu0 0.0
        %1715 = vmatpush2.msra.mxu0 0.0
        %1716 = vmatprep.subr.mxu0 0.0
        %1717 = vmatpush2.msra.mxu0 0.0
        %1718 = vmatprep.subr.mxu0 0.0
        %1719 = vmatpush2.msra.mxu0 0.0
        %1720 = vmatprep.subr.mxu0 0.0
        %1721 = vmatpush2.msra.mxu0 0.0
        %1722 = vmatprep.subr.mxu0 0.0
        %1723 = vmatpush2.msra.mxu0 0.0
        %1724 = vmatprep.subr.mxu0 0.0
        %1725 = vmatpush2.msra.mxu0 0.0
        %1726 = vmatprep.subr.mxu0 0.0
        %1727 = vmatpush2.msra.mxu0 0.0
        %1728 = vmatprep.subr.mxu0 0.0
        %1729 = vmatpush2.msra.mxu0 0.0
        %1730 = vmatprep.subr.mxu0 0.0
        %1731 = vmatpush2.msra.mxu0 0.0
        %1732 = vmatprep.subr.mxu0 0.0
        %1733 = vmatpush2.msra.mxu0 0.0
        %1734 = vmatprep.subr.mxu0 0.0
        %1735 = vmatpush2.msra.mxu0 0.0
        %1736 = vmatprep.subr.mxu0 0.0
        %1737 = vmatpush2.msra.mxu0 0.0
        %1738 = vmatprep.subr.mxu0 0.0
        %1739 = vmatpush2.msra.mxu0 0.0
        %1740 = vmatprep.mubr.f32.mxu0 0.0
        %1741 = vmatmul.mubr.f32.gmra.mxu0 %v1671
        %v1742 = vpop.f32.mrf.mxu0
        %v1743 = vadd.f32 %v1667, %v1742
        %v1744 = vpop.f32.mrf.mxu0
        %1745 = vdwg.mxu0
        %v1746 = vadd.f32 %v1743, %v1586
        %1748 = vrot.lane.b32.xlu0 %v1746, 32
        %v1749 = vpop.permute.xlu0 %1748
        %vm1751 = vcmask 523520
        %1752 = vst.msk [vmem:[%s258] sm:$0xff] %vm1751, %v1749
        %v1753 = vld [vmem:[%s503] sm:$0xff]
        %v1754 = vld [vmem:[%s503 + $0x8] sm:$0xf]
        %v1755 = vld [vmem:[%s618] sm:$0xff]
        %v1756 = vld [vmem:[%s618 + $0x8] sm:$0xf]
        %v1758 = vsel %vm386, %v1756, 0
        %1760 = vmatprep.subr.mxu0 0.0
        %1761 = vmatpush1.msra.mxu0 0.0
        %1762 = vmatprep.subr.mxu0 0.0
        %1763 = vmatpush1.msra.mxu0 0.0
        %1764 = vmatprep.subr.mxu0 0.0
        %1765 = vmatpush1.msra.mxu0 0.0
        %1766 = vmatprep.subr.mxu0 0.0
        %1767 = vmatpush1.msra.mxu0 0.0
        %1768 = vmatprep.subr.mxu0 0.0
        %1769 = vmatpush1.msra.mxu0 0.0
        %1770 = vmatprep.subr.mxu0 0.0
        %1771 = vmatpush1.msra.mxu0 0.0
        %1772 = vmatprep.subr.mxu0 0.0
        %1773 = vmatpush1.msra.mxu0 0.0
        %1774 = vmatprep.subr.mxu0 0.0
        %1775 = vmatpush1.msra.mxu0 0.0
        %1776 = vmatprep.subr.mxu0 0.0
        %1777 = vmatpush1.msra.mxu0 0.0
        %1778 = vmatprep.subr.mxu0 0.0
        %1779 = vmatpush1.msra.mxu0 0.0
        %1780 = vmatprep.subr.mxu0 0.0
        %1781 = vmatpush1.msra.mxu0 0.0
        %1782 = vmatprep.subr.mxu0 0.0
        %1783 = vmatpush1.msra.mxu0 0.0
        %1784 = vmatprep.subr.mxu0 0.0
        %1785 = vmatpush1.msra.mxu0 0.0
        %1786 = vmatprep.subr.mxu0 0.0
        %1787 = vmatpush1.msra.mxu0 0.0
        %1788 = vmatprep.subr.mxu0 0.0
        %1789 = vmatpush1.msra.mxu0 %v1758
        %1790 = vmatprep.subr.mxu0 0.0
        %1791 = vmatpush1.msra.mxu0 %v1755
        %1792 = vmatprep.subr.mxu0 0.0
        %1793 = vmatpush2.msra.mxu0 0.0
        %1794 = vmatprep.subr.mxu0 0.0
        %1795 = vmatpush2.msra.mxu0 0.0
        %1796 = vmatprep.subr.mxu0 0.0
        %1797 = vmatpush2.msra.mxu0 0.0
        %1798 = vmatprep.subr.mxu0 0.0
        %1799 = vmatpush2.msra.mxu0 0.0
        %1800 = vmatprep.subr.mxu0 0.0
        %1801 = vmatpush2.msra.mxu0 0.0
        %1802 = vmatprep.subr.mxu0 0.0
        %1803 = vmatpush2.msra.mxu0 0.0
        %1804 = vmatprep.subr.mxu0 0.0
        %1805 = vmatpush2.msra.mxu0 0.0
        %1806 = vmatprep.subr.mxu0 0.0
        %1807 = vmatpush2.msra.mxu0 0.0
        %1808 = vmatprep.subr.mxu0 0.0
        %1809 = vmatpush2.msra.mxu0 0.0
        %1810 = vmatprep.subr.mxu0 0.0
        %1811 = vmatpush2.msra.mxu0 0.0
        %1812 = vmatprep.subr.mxu0 0.0
        %1813 = vmatpush2.msra.mxu0 0.0
        %1814 = vmatprep.subr.mxu0 0.0
        %1815 = vmatpush2.msra.mxu0 0.0
        %1816 = vmatprep.subr.mxu0 0.0
        %1817 = vmatpush2.msra.mxu0 0.0
        %1818 = vmatprep.subr.mxu0 0.0
        %1819 = vmatpush2.msra.mxu0 0.0
        %1820 = vmatprep.subr.mxu0 0.0
        %1821 = vmatpush2.msra.mxu0 0.0
        %1822 = vmatprep.subr.mxu0 0.0
        %1823 = vmatpush2.msra.mxu0 0.0
        %1824 = vmatprep.mubr.f32.mxu0 0.0
        %1825 = vmatmul.mubr.f32.gmra.mxu0 %v1432
        %v1826 = vpop.f32.mrf.mxu0
        %v1827 = vadd.f32 0.0, %v1826
        %v1828 = vpop.f32.mrf.mxu0
        %1829 = vdwg.mxu0
        %v1831 = vsel %vm386, %v1754, 0
        %1833 = vmatprep.subr.mxu0 0.0
        %1834 = vmatpush1.msra.mxu0 0.0
        %1835 = vmatprep.subr.mxu0 0.0
        %1836 = vmatpush1.msra.mxu0 0.0
        %1837 = vmatprep.subr.mxu0 0.0
        %1838 = vmatpush1.msra.mxu0 0.0
        %1839 = vmatprep.subr.mxu0 0.0
        %1840 = vmatpush1.msra.mxu0 0.0
        %1841 = vmatprep.subr.mxu0 0.0
        %1842 = vmatpush1.msra.mxu0 0.0
        %1843 = vmatprep.subr.mxu0 0.0
        %1844 = vmatpush1.msra.mxu0 0.0
        %1845 = vmatprep.subr.mxu0 0.0
        %1846 = vmatpush1.msra.mxu0 0.0
        %1847 = vmatprep.subr.mxu0 0.0
        %1848 = vmatpush1.msra.mxu0 0.0
        %1849 = vmatprep.subr.mxu0 0.0
        %1850 = vmatpush1.msra.mxu0 0.0
        %1851 = vmatprep.subr.mxu0 0.0
        %1852 = vmatpush1.msra.mxu0 0.0
        %1853 = vmatprep.subr.mxu0 0.0
        %1854 = vmatpush1.msra.mxu0 0.0
        %1855 = vmatprep.subr.mxu0 0.0
        %1856 = vmatpush1.msra.mxu0 0.0
        %1857 = vmatprep.subr.mxu0 0.0
        %1858 = vmatpush1.msra.mxu0 0.0
        %1859 = vmatprep.subr.mxu0 0.0
        %1860 = vmatpush1.msra.mxu0 0.0
        %1861 = vmatprep.subr.mxu0 0.0
        %1862 = vmatpush1.msra.mxu0 %v1831
        %1863 = vmatprep.subr.mxu0 0.0
        %1864 = vmatpush1.msra.mxu0 %v1753
        %1865 = vmatprep.subr.mxu0 0.0
        %1866 = vmatpush2.msra.mxu0 0.0
        %1867 = vmatprep.subr.mxu0 0.0
        %1868 = vmatpush2.msra.mxu0 0.0
        %1869 = vmatprep.subr.mxu0 0.0
        %1870 = vmatpush2.msra.mxu0 0.0
        %1871 = vmatprep.subr.mxu0 0.0
        %1872 = vmatpush2.msra.mxu0 0.0
        %1873 = vmatprep.subr.mxu0 0.0
        %1874 = vmatpush2.msra.mxu0 0.0
        %1875 = vmatprep.subr.mxu0 0.0
        %1876 = vmatpush2.msra.mxu0 0.0
        %1877 = vmatprep.subr.mxu0 0.0
        %1878 = vmatpush2.msra.mxu0 0.0
        %1879 = vmatprep.subr.mxu0 0.0
        %1880 = vmatpush2.msra.mxu0 0.0
        %1881 = vmatprep.subr.mxu0 0.0
        %1882 = vmatpush2.msra.mxu0 0.0
        %1883 = vmatprep.subr.mxu0 0.0
        %1884 = vmatpush2.msra.mxu0 0.0
        %1885 = vmatprep.subr.mxu0 0.0
        %1886 = vmatpush2.msra.mxu0 0.0
        %1887 = vmatprep.subr.mxu0 0.0
        %1888 = vmatpush2.msra.mxu0 0.0
        %1889 = vmatprep.subr.mxu0 0.0
        %1890 = vmatpush2.msra.mxu0 0.0
        %1891 = vmatprep.subr.mxu0 0.0
        %1892 = vmatpush2.msra.mxu0 0.0
        %1893 = vmatprep.subr.mxu0 0.0
        %1894 = vmatpush2.msra.mxu0 0.0
        %1895 = vmatprep.subr.mxu0 0.0
        %1896 = vmatpush2.msra.mxu0 0.0
        %1897 = vmatprep.mubr.f32.mxu0 0.0
        %1898 = vmatmul.mubr.f32.gmra.mxu0 %v1508
        %v1899 = vpop.f32.mrf.mxu0
        %v1900 = vadd.f32 %v1827, %v1899
        %v1901 = vpop.f32.mrf.mxu0
        %1902 = vdwg.mxu0
        %v1903 = vadd.f32 %v1900, %v1586
        %1905 = vrot.lane.b32.xlu0 %v1903, 64
        %v1906 = vpop.permute.xlu0 %1905
        %vm1908 = vcmask 785920
        %1909 = vst.msk [vmem:[%s258] sm:$0xff] %vm1908, %v1906
        %v1910 = vld [vmem:[%s618] sm:$0xff]
        %v1911 = vld [vmem:[%s618 + $0x8] sm:$0xf]
        %v1912 = vld [vmem:[%s733] sm:$0xff]
        %v1913 = vld [vmem:[%s733 + $0x8] sm:$0xf]
        %v1915 = vsel %vm386, %v1913, 0
        %1917 = vmatprep.subr.mxu0 0.0
        %1918 = vmatpush1.msra.mxu0 0.0
        %1919 = vmatprep.subr.mxu0 0.0
        %1920 = vmatpush1.msra.mxu0 0.0
        %1921 = vmatprep.subr.mxu0 0.0
        %1922 = vmatpush1.msra.mxu0 0.0
        %1923 = vmatprep.subr.mxu0 0.0
        %1924 = vmatpush1.msra.mxu0 0.0
        %1925 = vmatprep.subr.mxu0 0.0
        %1926 = vmatpush1.msra.mxu0 0.0
        %1927 = vmatprep.subr.mxu0 0.0
        %1928 = vmatpush1.msra.mxu0 0.0
        %1929 = vmatprep.subr.mxu0 0.0
        %1930 = vmatpush1.msra.mxu0 0.0
        %1931 = vmatprep.subr.mxu0 0.0
        %1932 = vmatpush1.msra.mxu0 0.0
        %1933 = vmatprep.subr.mxu0 0.0
        %1934 = vmatpush1.msra.mxu0 0.0
        %1935 = vmatprep.subr.mxu0 0.0
        %1936 = vmatpush1.msra.mxu0 0.0
        %1937 = vmatprep.subr.mxu0 0.0
        %1938 = vmatpush1.msra.mxu0 0.0
        %1939 = vmatprep.subr.mxu0 0.0
        %1940 = vmatpush1.msra.mxu0 0.0
        %1941 = vmatprep.subr.mxu0 0.0
        %1942 = vmatpush1.msra.mxu0 0.0
        %1943 = vmatprep.subr.mxu0 0.0
        %1944 = vmatpush1.msra.mxu0 0.0
        %1945 = vmatprep.subr.mxu0 0.0
        %1946 = vmatpush1.msra.mxu0 %v1915
        %1947 = vmatprep.subr.mxu0 0.0
        %1948 = vmatpush1.msra.mxu0 %v1912
        %1949 = vmatprep.subr.mxu0 0.0
        %1950 = vmatpush2.msra.mxu0 0.0
        %1951 = vmatprep.subr.mxu0 0.0
        %1952 = vmatpush2.msra.mxu0 0.0
        %1953 = vmatprep.subr.mxu0 0.0
        %1954 = vmatpush2.msra.mxu0 0.0
        %1955 = vmatprep.subr.mxu0 0.0
        %1956 = vmatpush2.msra.mxu0 0.0
        %1957 = vmatprep.subr.mxu0 0.0
        %1958 = vmatpush2.msra.mxu0 0.0
        %1959 = vmatprep.subr.mxu0 0.0
        %1960 = vmatpush2.msra.mxu0 0.0
        %1961 = vmatprep.subr.mxu0 0.0
        %1962 = vmatpush2.msra.mxu0 0.0
        %1963 = vmatprep.subr.mxu0 0.0
        %1964 = vmatpush2.msra.mxu0 0.0
        %1965 = vmatprep.subr.mxu0 0.0
        %1966 = vmatpush2.msra.mxu0 0.0
        %1967 = vmatprep.subr.mxu0 0.0
        %1968 = vmatpush2.msra.mxu0 0.0
        %1969 = vmatprep.subr.mxu0 0.0
        %1970 = vmatpush2.msra.mxu0 0.0
        %1971 = vmatprep.subr.mxu0 0.0
        %1972 = vmatpush2.msra.mxu0 0.0
        %1973 = vmatprep.subr.mxu0 0.0
        %1974 = vmatpush2.msra.mxu0 0.0
        %1975 = vmatprep.subr.mxu0 0.0
        %1976 = vmatpush2.msra.mxu0 0.0
        %1977 = vmatprep.subr.mxu0 0.0
        %1978 = vmatpush2.msra.mxu0 0.0
        %1979 = vmatprep.subr.mxu0 0.0
        %1980 = vmatpush2.msra.mxu0 0.0
        %1981 = vmatprep.mubr.f32.mxu0 0.0
        %1982 = vmatmul.mubr.f32.gmra.mxu0 %v1595
        %v1983 = vpop.f32.mrf.mxu0
        %v1984 = vadd.f32 0.0, %v1983
        %v1985 = vpop.f32.mrf.mxu0
        %1986 = vdwg.mxu0
        %v1988 = vsel %vm386, %v1911, 0
        %1990 = vmatprep.subr.mxu0 0.0
        %1991 = vmatpush1.msra.mxu0 0.0
        %1992 = vmatprep.subr.mxu0 0.0
        %1993 = vmatpush1.msra.mxu0 0.0
        %1994 = vmatprep.subr.mxu0 0.0
        %1995 = vmatpush1.msra.mxu0 0.0
        %1996 = vmatprep.subr.mxu0 0.0
        %1997 = vmatpush1.msra.mxu0 0.0
        %1998 = vmatprep.subr.mxu0 0.0
        %1999 = vmatpush1.msra.mxu0 0.0
        %2000 = vmatprep.subr.mxu0 0.0
        %2001 = vmatpush1.msra.mxu0 0.0
        %2002 = vmatprep.subr.mxu0 0.0
        %2003 = vmatpush1.msra.mxu0 0.0
        %2004 = vmatprep.subr.mxu0 0.0
        %2005 = vmatpush1.msra.mxu0 0.0
        %2006 = vmatprep.subr.mxu0 0.0
        %2007 = vmatpush1.msra.mxu0 0.0
        %2008 = vmatprep.subr.mxu0 0.0
        %2009 = vmatpush1.msra.mxu0 0.0
        %2010 = vmatprep.subr.mxu0 0.0
        %2011 = vmatpush1.msra.mxu0 0.0
        %2012 = vmatprep.subr.mxu0 0.0
        %2013 = vmatpush1.msra.mxu0 0.0
        %2014 = vmatprep.subr.mxu0 0.0
        %2015 = vmatpush1.msra.mxu0 0.0
        %2016 = vmatprep.subr.mxu0 0.0
        %2017 = vmatpush1.msra.mxu0 0.0
        %2018 = vmatprep.subr.mxu0 0.0
        %2019 = vmatpush1.msra.mxu0 %v1988
        %2020 = vmatprep.subr.mxu0 0.0
        %2021 = vmatpush1.msra.mxu0 %v1910
        %2022 = vmatprep.subr.mxu0 0.0
        %2023 = vmatpush2.msra.mxu0 0.0
        %2024 = vmatprep.subr.mxu0 0.0
        %2025 = vmatpush2.msra.mxu0 0.0
        %2026 = vmatprep.subr.mxu0 0.0
        %2027 = vmatpush2.msra.mxu0 0.0
        %2028 = vmatprep.subr.mxu0 0.0
        %2029 = vmatpush2.msra.mxu0 0.0
        %2030 = vmatprep.subr.mxu0 0.0
        %2031 = vmatpush2.msra.mxu0 0.0
        %2032 = vmatprep.subr.mxu0 0.0
        %2033 = vmatpush2.msra.mxu0 0.0
        %2034 = vmatprep.subr.mxu0 0.0
        %2035 = vmatpush2.msra.mxu0 0.0
        %2036 = vmatprep.subr.mxu0 0.0
        %2037 = vmatpush2.msra.mxu0 0.0
        %2038 = vmatprep.subr.mxu0 0.0
        %2039 = vmatpush2.msra.mxu0 0.0
        %2040 = vmatprep.subr.mxu0 0.0
        %2041 = vmatpush2.msra.mxu0 0.0
        %2042 = vmatprep.subr.mxu0 0.0
        %2043 = vmatpush2.msra.mxu0 0.0
        %2044 = vmatprep.subr.mxu0 0.0
        %2045 = vmatpush2.msra.mxu0 0.0
        %2046 = vmatprep.subr.mxu0 0.0
        %2047 = vmatpush2.msra.mxu0 0.0
        %2048 = vmatprep.subr.mxu0 0.0
        %2049 = vmatpush2.msra.mxu0 0.0
        %2050 = vmatprep.subr.mxu0 0.0
        %2051 = vmatpush2.msra.mxu0 0.0
        %2052 = vmatprep.subr.mxu0 0.0
        %2053 = vmatpush2.msra.mxu0 0.0
        %2054 = vmatprep.mubr.f32.mxu0 0.0
        %2055 = vmatmul.mubr.f32.gmra.mxu0 %v1671
        %v2056 = vpop.f32.mrf.mxu0
        %v2057 = vadd.f32 %v1984, %v2056
        %v2058 = vpop.f32.mrf.mxu0
        %2059 = vdwg.mxu0
        %v2060 = vadd.f32 %v2057, %v1586
        %2062 = vrot.lane.b32.xlu0 %v2060, 96
        %v2063 = vpop.permute.xlu0 %2062
        %vm2065 = vcmask 1048320
        %2066 = vst.msk [vmem:[%s258] sm:$0xff] %vm2065, %v2063
        %v2067 = vld [vmem:[%s618] sm:$0xff]
        %v2068 = vld [vmem:[%s618 + $0x8] sm:$0xf]
        %v2069 = vld [vmem:[%s733] sm:$0xff]
        %v2070 = vld [vmem:[%s733 + $0x8] sm:$0xf]
        %v2072 = vsel %vm386, %v2070, 0
        %2074 = vmatprep.subr.mxu0 0.0
        %2075 = vmatpush1.msra.mxu0 0.0
        %2076 = vmatprep.subr.mxu0 0.0
        %2077 = vmatpush1.msra.mxu0 0.0
        %2078 = vmatprep.subr.mxu0 0.0
        %2079 = vmatpush1.msra.mxu0 0.0
        %2080 = vmatprep.subr.mxu0 0.0
        %2081 = vmatpush1.msra.mxu0 0.0
        %2082 = vmatprep.subr.mxu0 0.0
        %2083 = vmatpush1.msra.mxu0 0.0
        %2084 = vmatprep.subr.mxu0 0.0
        %2085 = vmatpush1.msra.mxu0 0.0
        %2086 = vmatprep.subr.mxu0 0.0
        %2087 = vmatpush1.msra.mxu0 0.0
        %2088 = vmatprep.subr.mxu0 0.0
        %2089 = vmatpush1.msra.mxu0 0.0
        %2090 = vmatprep.subr.mxu0 0.0
        %2091 = vmatpush1.msra.mxu0 0.0
        %2092 = vmatprep.subr.mxu0 0.0
        %2093 = vmatpush1.msra.mxu0 0.0
        %2094 = vmatprep.subr.mxu0 0.0
        %2095 = vmatpush1.msra.mxu0 0.0
        %2096 = vmatprep.subr.mxu0 0.0
        %2097 = vmatpush1.msra.mxu0 0.0
        %2098 = vmatprep.subr.mxu0 0.0
        %2099 = vmatpush1.msra.mxu0 0.0
        %2100 = vmatprep.subr.mxu0 0.0
        %2101 = vmatpush1.msra.mxu0 0.0
        %2102 = vmatprep.subr.mxu0 0.0
        %2103 = vmatpush1.msra.mxu0 %v2072
        %2104 = vmatprep.subr.mxu0 0.0
        %2105 = vmatpush1.msra.mxu0 %v2069
        %2106 = vmatprep.subr.mxu0 0.0
        %2107 = vmatpush2.msra.mxu0 0.0
        %2108 = vmatprep.subr.mxu0 0.0
        %2109 = vmatpush2.msra.mxu0 0.0
        %2110 = vmatprep.subr.mxu0 0.0
        %2111 = vmatpush2.msra.mxu0 0.0
        %2112 = vmatprep.subr.mxu0 0.0
        %2113 = vmatpush2.msra.mxu0 0.0
        %2114 = vmatprep.subr.mxu0 0.0
        %2115 = vmatpush2.msra.mxu0 0.0
        %2116 = vmatprep.subr.mxu0 0.0
        %2117 = vmatpush2.msra.mxu0 0.0
        %2118 = vmatprep.subr.mxu0 0.0
        %2119 = vmatpush2.msra.mxu0 0.0
        %2120 = vmatprep.subr.mxu0 0.0
        %2121 = vmatpush2.msra.mxu0 0.0
        %2122 = vmatprep.subr.mxu0 0.0
        %2123 = vmatpush2.msra.mxu0 0.0
        %2124 = vmatprep.subr.mxu0 0.0
        %2125 = vmatpush2.msra.mxu0 0.0
        %2126 = vmatprep.subr.mxu0 0.0
        %2127 = vmatpush2.msra.mxu0 0.0
        %2128 = vmatprep.subr.mxu0 0.0
        %2129 = vmatpush2.msra.mxu0 0.0
        %2130 = vmatprep.subr.mxu0 0.0
        %2131 = vmatpush2.msra.mxu0 0.0
        %2132 = vmatprep.subr.mxu0 0.0
        %2133 = vmatpush2.msra.mxu0 0.0
        %2134 = vmatprep.subr.mxu0 0.0
        %2135 = vmatpush2.msra.mxu0 0.0
        %2136 = vmatprep.subr.mxu0 0.0
        %2137 = vmatpush2.msra.mxu0 0.0
        %2138 = vmatprep.mubr.f32.mxu0 0.0
        %2139 = vmatmul.mubr.f32.gmra.mxu0 %v1432
        %v2140 = vpop.f32.mrf.mxu0
        %v2141 = vadd.f32 0.0, %v2140
        %v2142 = vpop.f32.mrf.mxu0
        %2143 = vdwg.mxu0
        %v2145 = vsel %vm386, %v2068, 0
        %2147 = vmatprep.subr.mxu0 0.0
        %2148 = vmatpush1.msra.mxu0 0.0
        %2149 = vmatprep.subr.mxu0 0.0
        %2150 = vmatpush1.msra.mxu0 0.0
        %2151 = vmatprep.subr.mxu0 0.0
        %2152 = vmatpush1.msra.mxu0 0.0
        %2153 = vmatprep.subr.mxu0 0.0
        %2154 = vmatpush1.msra.mxu0 0.0
        %2155 = vmatprep.subr.mxu0 0.0
        %2156 = vmatpush1.msra.mxu0 0.0
        %2157 = vmatprep.subr.mxu0 0.0
        %2158 = vmatpush1.msra.mxu0 0.0
        %2159 = vmatprep.subr.mxu0 0.0
        %2160 = vmatpush1.msra.mxu0 0.0
        %2161 = vmatprep.subr.mxu0 0.0
        %2162 = vmatpush1.msra.mxu0 0.0
        %2163 = vmatprep.subr.mxu0 0.0
        %2164 = vmatpush1.msra.mxu0 0.0
        %2165 = vmatprep.subr.mxu0 0.0
        %2166 = vmatpush1.msra.mxu0 0.0
        %2167 = vmatprep.subr.mxu0 0.0
        %2168 = vmatpush1.msra.mxu0 0.0
        %2169 = vmatprep.subr.mxu0 0.0
        %2170 = vmatpush1.msra.mxu0 0.0
        %2171 = vmatprep.subr.mxu0 0.0
        %2172 = vmatpush1.msra.mxu0 0.0
        %2173 = vmatprep.subr.mxu0 0.0
        %2174 = vmatpush1.msra.mxu0 0.0
        %2175 = vmatprep.subr.mxu0 0.0
        %2176 = vmatpush1.msra.mxu0 %v2145
        %2177 = vmatprep.subr.mxu0 0.0
        %2178 = vmatpush1.msra.mxu0 %v2067
        %2179 = vmatprep.subr.mxu0 0.0
        %2180 = vmatpush2.msra.mxu0 0.0
        %2181 = vmatprep.subr.mxu0 0.0
        %2182 = vmatpush2.msra.mxu0 0.0
        %2183 = vmatprep.subr.mxu0 0.0
        %2184 = vmatpush2.msra.mxu0 0.0
        %2185 = vmatprep.subr.mxu0 0.0
        %2186 = vmatpush2.msra.mxu0 0.0
        %2187 = vmatprep.subr.mxu0 0.0
        %2188 = vmatpush2.msra.mxu0 0.0
        %2189 = vmatprep.subr.mxu0 0.0
        %2190 = vmatpush2.msra.mxu0 0.0
        %2191 = vmatprep.subr.mxu0 0.0
        %2192 = vmatpush2.msra.mxu0 0.0
        %2193 = vmatprep.subr.mxu0 0.0
        %2194 = vmatpush2.msra.mxu0 0.0
        %2195 = vmatprep.subr.mxu0 0.0
        %2196 = vmatpush2.msra.mxu0 0.0
        %2197 = vmatprep.subr.mxu0 0.0
        %2198 = vmatpush2.msra.mxu0 0.0
        %2199 = vmatprep.subr.mxu0 0.0
        %2200 = vmatpush2.msra.mxu0 0.0
        %2201 = vmatprep.subr.mxu0 0.0
        %2202 = vmatpush2.msra.mxu0 0.0
        %2203 = vmatprep.subr.mxu0 0.0
        %2204 = vmatpush2.msra.mxu0 0.0
        %2205 = vmatprep.subr.mxu0 0.0
        %2206 = vmatpush2.msra.mxu0 0.0
        %2207 = vmatprep.subr.mxu0 0.0
        %2208 = vmatpush2.msra.mxu0 0.0
        %2209 = vmatprep.subr.mxu0 0.0
        %2210 = vmatpush2.msra.mxu0 0.0
        %2211 = vmatprep.mubr.f32.mxu0 0.0
        %2212 = vmatmul.mubr.f32.gmra.mxu0 %v1508
        %v2213 = vpop.f32.mrf.mxu0
        %v2214 = vadd.f32 %v2141, %v2213
        %v2215 = vpop.f32.mrf.mxu0
        %2216 = vdwg.mxu0
        %v2217 = vadd.f32 %v2214, %v1586
        %2218 = vst.msk [vmem:[%s258 + $0x8] sm:$0xff] %vm388, %v2217
        %v2219 = vld [vmem:[%s733] sm:$0xff]
        %v2220 = vld [vmem:[%s733 + $0x8] sm:$0xf]
        %v2221 = vld [vmem:[%s848] sm:$0xff]
        %v2222 = vld [vmem:[%s848 + $0x8] sm:$0xf]
        %v2224 = vsel %vm386, %v2222, 0
        %2226 = vmatprep.subr.mxu0 0.0
        %2227 = vmatpush1.msra.mxu0 0.0
        %2228 = vmatprep.subr.mxu0 0.0
        %2229 = vmatpush1.msra.mxu0 0.0
        %2230 = vmatprep.subr.mxu0 0.0
        %2231 = vmatpush1.msra.mxu0 0.0
        %2232 = vmatprep.subr.mxu0 0.0
        %2233 = vmatpush1.msra.mxu0 0.0
        %2234 = vmatprep.subr.mxu0 0.0
        %2235 = vmatpush1.msra.mxu0 0.0
        %2236 = vmatprep.subr.mxu0 0.0
        %2237 = vmatpush1.msra.mxu0 0.0
        %2238 = vmatprep.subr.mxu0 0.0
        %2239 = vmatpush1.msra.mxu0 0.0
        %2240 = vmatprep.subr.mxu0 0.0
        %2241 = vmatpush1.msra.mxu0 0.0
        %2242 = vmatprep.subr.mxu0 0.0
        %2243 = vmatpush1.msra.mxu0 0.0
        %2244 = vmatprep.subr.mxu0 0.0
        %2245 = vmatpush1.msra.mxu0 0.0
        %2246 = vmatprep.subr.mxu0 0.0
        %2247 = vmatpush1.msra.mxu0 0.0
        %2248 = vmatprep.subr.mxu0 0.0
        %2249 = vmatpush1.msra.mxu0 0.0
        %2250 = vmatprep.subr.mxu0 0.0
        %2251 = vmatpush1.msra.mxu0 0.0
        %2252 = vmatprep.subr.mxu0 0.0
        %2253 = vmatpush1.msra.mxu0 0.0
        %2254 = vmatprep.subr.mxu0 0.0
        %2255 = vmatpush1.msra.mxu0 %v2224
        %2256 = vmatprep.subr.mxu0 0.0
        %2257 = vmatpush1.msra.mxu0 %v2221
        %2258 = vmatprep.subr.mxu0 0.0
        %2259 = vmatpush2.msra.mxu0 0.0
        %2260 = vmatprep.subr.mxu0 0.0
        %2261 = vmatpush2.msra.mxu0 0.0
        %2262 = vmatprep.subr.mxu0 0.0
        %2263 = vmatpush2.msra.mxu0 0.0
        %2264 = vmatprep.subr.mxu0 0.0
        %2265 = vmatpush2.msra.mxu0 0.0
        %2266 = vmatprep.subr.mxu0 0.0
        %2267 = vmatpush2.msra.mxu0 0.0
        %2268 = vmatprep.subr.mxu0 0.0
        %2269 = vmatpush2.msra.mxu0 0.0
        %2270 = vmatprep.subr.mxu0 0.0
        %2271 = vmatpush2.msra.mxu0 0.0
        %2272 = vmatprep.subr.mxu0 0.0
        %2273 = vmatpush2.msra.mxu0 0.0
        %2274 = vmatprep.subr.mxu0 0.0
        %2275 = vmatpush2.msra.mxu0 0.0
        %2276 = vmatprep.subr.mxu0 0.0
        %2277 = vmatpush2.msra.mxu0 0.0
        %2278 = vmatprep.subr.mxu0 0.0
        %2279 = vmatpush2.msra.mxu0 0.0
        %2280 = vmatprep.subr.mxu0 0.0
        %2281 = vmatpush2.msra.mxu0 0.0
        %2282 = vmatprep.subr.mxu0 0.0
        %2283 = vmatpush2.msra.mxu0 0.0
        %2284 = vmatprep.subr.mxu0 0.0
        %2285 = vmatpush2.msra.mxu0 0.0
        %2286 = vmatprep.subr.mxu0 0.0
        %2287 = vmatpush2.msra.mxu0 0.0
        %2288 = vmatprep.subr.mxu0 0.0
        %2289 = vmatpush2.msra.mxu0 0.0
        %2290 = vmatprep.mubr.f32.mxu0 0.0
        %2291 = vmatmul.mubr.f32.gmra.mxu0 %v1595
        %v2292 = vpop.f32.mrf.mxu0
        %v2293 = vadd.f32 0.0, %v2292
        %v2294 = vpop.f32.mrf.mxu0
        %2295 = vdwg.mxu0
        %v2297 = vsel %vm386, %v2220, 0
        %2299 = vmatprep.subr.mxu0 0.0
        %2300 = vmatpush1.msra.mxu0 0.0
        %2301 = vmatprep.subr.mxu0 0.0
        %2302 = vmatpush1.msra.mxu0 0.0
        %2303 = vmatprep.subr.mxu0 0.0
        %2304 = vmatpush1.msra.mxu0 0.0
        %2305 = vmatprep.subr.mxu0 0.0
        %2306 = vmatpush1.msra.mxu0 0.0
        %2307 = vmatprep.subr.mxu0 0.0
        %2308 = vmatpush1.msra.mxu0 0.0
        %2309 = vmatprep.subr.mxu0 0.0
        %2310 = vmatpush1.msra.mxu0 0.0
        %2311 = vmatprep.subr.mxu0 0.0
        %2312 = vmatpush1.msra.mxu0 0.0
        %2313 = vmatprep.subr.mxu0 0.0
        %2314 = vmatpush1.msra.mxu0 0.0
        %2315 = vmatprep.subr.mxu0 0.0
        %2316 = vmatpush1.msra.mxu0 0.0
        %2317 = vmatprep.subr.mxu0 0.0
        %2318 = vmatpush1.msra.mxu0 0.0
        %2319 = vmatprep.subr.mxu0 0.0
        %2320 = vmatpush1.msra.mxu0 0.0
        %2321 = vmatprep.subr.mxu0 0.0
        %2322 = vmatpush1.msra.mxu0 0.0
        %2323 = vmatprep.subr.mxu0 0.0
        %2324 = vmatpush1.msra.mxu0 0.0
        %2325 = vmatprep.subr.mxu0 0.0
        %2326 = vmatpush1.msra.mxu0 0.0
        %2327 = vmatprep.subr.mxu0 0.0
        %2328 = vmatpush1.msra.mxu0 %v2297
        %2329 = vmatprep.subr.mxu0 0.0
        %2330 = vmatpush1.msra.mxu0 %v2219
        %2331 = vmatprep.subr.mxu0 0.0
        %2332 = vmatpush2.msra.mxu0 0.0
        %2333 = vmatprep.subr.mxu0 0.0
        %2334 = vmatpush2.msra.mxu0 0.0
        %2335 = vmatprep.subr.mxu0 0.0
        %2336 = vmatpush2.msra.mxu0 0.0
        %2337 = vmatprep.subr.mxu0 0.0
        %2338 = vmatpush2.msra.mxu0 0.0
        %2339 = vmatprep.subr.mxu0 0.0
        %2340 = vmatpush2.msra.mxu0 0.0
        %2341 = vmatprep.subr.mxu0 0.0
        %2342 = vmatpush2.msra.mxu0 0.0
        %2343 = vmatprep.subr.mxu0 0.0
        %2344 = vmatpush2.msra.mxu0 0.0
        %2345 = vmatprep.subr.mxu0 0.0
        %2346 = vmatpush2.msra.mxu0 0.0
        %2347 = vmatprep.subr.mxu0 0.0
        %2348 = vmatpush2.msra.mxu0 0.0
        %2349 = vmatprep.subr.mxu0 0.0
        %2350 = vmatpush2.msra.mxu0 0.0
        %2351 = vmatprep.subr.mxu0 0.0
        %2352 = vmatpush2.msra.mxu0 0.0
        %2353 = vmatprep.subr.mxu0 0.0
        %2354 = vmatpush2.msra.mxu0 0.0
        %2355 = vmatprep.subr.mxu0 0.0
        %2356 = vmatpush2.msra.mxu0 0.0
        %2357 = vmatprep.subr.mxu0 0.0
        %2358 = vmatpush2.msra.mxu0 0.0
        %2359 = vmatprep.subr.mxu0 0.0
        %2360 = vmatpush2.msra.mxu0 0.0
        %2361 = vmatprep.subr.mxu0 0.0
        %2362 = vmatpush2.msra.mxu0 0.0
        %2363 = vmatprep.mubr.f32.mxu0 0.0
        %2364 = vmatmul.mubr.f32.gmra.mxu0 %v1671
        %v2365 = vpop.f32.mrf.mxu0
        %v2366 = vadd.f32 %v2293, %v2365
        %v2367 = vpop.f32.mrf.mxu0
        %2368 = vdwg.mxu0
        %v2369 = vadd.f32 %v2366, %v1586
        %2371 = vrot.lane.b32.xlu0 %v2369, 32
        %v2372 = vpop.permute.xlu0 %2371
        %2374 = vst.msk [vmem:[%s258 + $0x8] sm:$0xff] %vm1751, %v2372
        %v2375 = vld [vmem:[%s733] sm:$0xff]
        %v2376 = vld [vmem:[%s733 + $0x8] sm:$0xf]
        %v2377 = vld [vmem:[%s848] sm:$0xff]
        %v2378 = vld [vmem:[%s848 + $0x8] sm:$0xf]
        %v2380 = vsel %vm386, %v2378, 0
        %2382 = vmatprep.subr.mxu0 0.0
        %2383 = vmatpush1.msra.mxu0 0.0
        %2384 = vmatprep.subr.mxu0 0.0
        %2385 = vmatpush1.msra.mxu0 0.0
        %2386 = vmatprep.subr.mxu0 0.0
        %2387 = vmatpush1.msra.mxu0 0.0
        %2388 = vmatprep.subr.mxu0 0.0
        %2389 = vmatpush1.msra.mxu0 0.0
        %2390 = vmatprep.subr.mxu0 0.0
        %2391 = vmatpush1.msra.mxu0 0.0
        %2392 = vmatprep.subr.mxu0 0.0
        %2393 = vmatpush1.msra.mxu0 0.0
        %2394 = vmatprep.subr.mxu0 0.0
        %2395 = vmatpush1.msra.mxu0 0.0
        %2396 = vmatprep.subr.mxu0 0.0
        %2397 = vmatpush1.msra.mxu0 0.0
        %2398 = vmatprep.subr.mxu0 0.0
        %2399 = vmatpush1.msra.mxu0 0.0
        %2400 = vmatprep.subr.mxu0 0.0
        %2401 = vmatpush1.msra.mxu0 0.0
        %2402 = vmatprep.subr.mxu0 0.0
        %2403 = vmatpush1.msra.mxu0 0.0
        %2404 = vmatprep.subr.mxu0 0.0
        %2405 = vmatpush1.msra.mxu0 0.0
        %2406 = vmatprep.subr.mxu0 0.0
        %2407 = vmatpush1.msra.mxu0 0.0
        %2408 = vmatprep.subr.mxu0 0.0
        %2409 = vmatpush1.msra.mxu0 0.0
        %2410 = vmatprep.subr.mxu0 0.0
        %2411 = vmatpush1.msra.mxu0 %v2380
        %2412 = vmatprep.subr.mxu0 0.0
        %2413 = vmatpush1.msra.mxu0 %v2377
        %2414 = vmatprep.subr.mxu0 0.0
        %2415 = vmatpush2.msra.mxu0 0.0
        %2416 = vmatprep.subr.mxu0 0.0
        %2417 = vmatpush2.msra.mxu0 0.0
        %2418 = vmatprep.subr.mxu0 0.0
        %2419 = vmatpush2.msra.mxu0 0.0
        %2420 = vmatprep.subr.mxu0 0.0
        %2421 = vmatpush2.msra.mxu0 0.0
        %2422 = vmatprep.subr.mxu0 0.0
        %2423 = vmatpush2.msra.mxu0 0.0
        %2424 = vmatprep.subr.mxu0 0.0
        %2425 = vmatpush2.msra.mxu0 0.0
        %2426 = vmatprep.subr.mxu0 0.0
        %2427 = vmatpush2.msra.mxu0 0.0
        %2428 = vmatprep.subr.mxu0 0.0
        %2429 = vmatpush2.msra.mxu0 0.0
        %2430 = vmatprep.subr.mxu0 0.0
        %2431 = vmatpush2.msra.mxu0 0.0
        %2432 = vmatprep.subr.mxu0 0.0
        %2433 = vmatpush2.msra.mxu0 0.0
        %2434 = vmatprep.subr.mxu0 0.0
        %2435 = vmatpush2.msra.mxu0 0.0
        %2436 = vmatprep.subr.mxu0 0.0
        %2437 = vmatpush2.msra.mxu0 0.0
        %2438 = vmatprep.subr.mxu0 0.0
        %2439 = vmatpush2.msra.mxu0 0.0
        %2440 = vmatprep.subr.mxu0 0.0
        %2441 = vmatpush2.msra.mxu0 0.0
        %2442 = vmatprep.subr.mxu0 0.0
        %2443 = vmatpush2.msra.mxu0 0.0
        %2444 = vmatprep.subr.mxu0 0.0
        %2445 = vmatpush2.msra.mxu0 0.0
        %2446 = vmatprep.mubr.f32.mxu0 0.0
        %2447 = vmatmul.mubr.f32.gmra.mxu0 %v1432
        %v2448 = vpop.f32.mrf.mxu0
        %v2449 = vadd.f32 0.0, %v2448
        %v2450 = vpop.f32.mrf.mxu0
        %2451 = vdwg.mxu0
        %v2453 = vsel %vm386, %v2376, 0
        %2455 = vmatprep.subr.mxu0 0.0
        %2456 = vmatpush1.msra.mxu0 0.0
        %2457 = vmatprep.subr.mxu0 0.0
        %2458 = vmatpush1.msra.mxu0 0.0
        %2459 = vmatprep.subr.mxu0 0.0
        %2460 = vmatpush1.msra.mxu0 0.0
        %2461 = vmatprep.subr.mxu0 0.0
        %2462 = vmatpush1.msra.mxu0 0.0
        %2463 = vmatprep.subr.mxu0 0.0
        %2464 = vmatpush1.msra.mxu0 0.0
        %2465 = vmatprep.subr.mxu0 0.0
        %2466 = vmatpush1.msra.mxu0 0.0
        %2467 = vmatprep.subr.mxu0 0.0
        %2468 = vmatpush1.msra.mxu0 0.0
        %2469 = vmatprep.subr.mxu0 0.0
        %2470 = vmatpush1.msra.mxu0 0.0
        %2471 = vmatprep.subr.mxu0 0.0
        %2472 = vmatpush1.msra.mxu0 0.0
        %2473 = vmatprep.subr.mxu0 0.0
        %2474 = vmatpush1.msra.mxu0 0.0
        %2475 = vmatprep.subr.mxu0 0.0
        %2476 = vmatpush1.msra.mxu0 0.0
        %2477 = vmatprep.subr.mxu0 0.0
        %2478 = vmatpush1.msra.mxu0 0.0
        %2479 = vmatprep.subr.mxu0 0.0
        %2480 = vmatpush1.msra.mxu0 0.0
        %2481 = vmatprep.subr.mxu0 0.0
        %2482 = vmatpush1.msra.mxu0 0.0
        %2483 = vmatprep.subr.mxu0 0.0
        %2484 = vmatpush1.msra.mxu0 %v2453
        %2485 = vmatprep.subr.mxu0 0.0
        %2486 = vmatpush1.msra.mxu0 %v2375
        %2487 = vmatprep.subr.mxu0 0.0
        %2488 = vmatpush2.msra.mxu0 0.0
        %2489 = vmatprep.subr.mxu0 0.0
        %2490 = vmatpush2.msra.mxu0 0.0
        %2491 = vmatprep.subr.mxu0 0.0
        %2492 = vmatpush2.msra.mxu0 0.0
        %2493 = vmatprep.subr.mxu0 0.0
        %2494 = vmatpush2.msra.mxu0 0.0
        %2495 = vmatprep.subr.mxu0 0.0
        %2496 = vmatpush2.msra.mxu0 0.0
        %2497 = vmatprep.subr.mxu0 0.0
        %2498 = vmatpush2.msra.mxu0 0.0
        %2499 = vmatprep.subr.mxu0 0.0
        %2500 = vmatpush2.msra.mxu0 0.0
        %2501 = vmatprep.subr.mxu0 0.0
        %2502 = vmatpush2.msra.mxu0 0.0
        %2503 = vmatprep.subr.mxu0 0.0
        %2504 = vmatpush2.msra.mxu0 0.0
        %2505 = vmatprep.subr.mxu0 0.0
        %2506 = vmatpush2.msra.mxu0 0.0
        %2507 = vmatprep.subr.mxu0 0.0
        %2508 = vmatpush2.msra.mxu0 0.0
        %2509 = vmatprep.subr.mxu0 0.0
        %2510 = vmatpush2.msra.mxu0 0.0
        %2511 = vmatprep.subr.mxu0 0.0
        %2512 = vmatpush2.msra.mxu0 0.0
        %2513 = vmatprep.subr.mxu0 0.0
        %2514 = vmatpush2.msra.mxu0 0.0
        %2515 = vmatprep.subr.mxu0 0.0
        %2516 = vmatpush2.msra.mxu0 0.0
        %2517 = vmatprep.subr.mxu0 0.0
        %2518 = vmatpush2.msra.mxu0 0.0
        %2519 = vmatprep.mubr.f32.mxu0 0.0
        %2520 = vmatmul.mubr.f32.gmra.mxu0 %v1508
        %v2521 = vpop.f32.mrf.mxu0
        %v2522 = vadd.f32 %v2449, %v2521
        %v2523 = vpop.f32.mrf.mxu0
        %2524 = vdwg.mxu0
        %v2525 = vadd.f32 %v2522, %v1586
        %2527 = vrot.lane.b32.xlu0 %v2525, 64
        %v2528 = vpop.permute.xlu0 %2527
        %2530 = vst.msk [vmem:[%s258 + $0x8] sm:$0xff] %vm1908, %v2528
        %v2531 = vld [vmem:[%s848] sm:$0xff]
        %v2532 = vld [vmem:[%s848 + $0x8] sm:$0xf]
        %v2533 = vld [vmem:[%s963] sm:$0xff]
        %v2534 = vld [vmem:[%s963 + $0x8] sm:$0xf]
        %v2536 = vsel %vm386, %v2534, 0
        %2538 = vmatprep.subr.mxu0 0.0
        %2539 = vmatpush1.msra.mxu0 0.0
        %2540 = vmatprep.subr.mxu0 0.0
        %2541 = vmatpush1.msra.mxu0 0.0
        %2542 = vmatprep.subr.mxu0 0.0
        %2543 = vmatpush1.msra.mxu0 0.0
        %2544 = vmatprep.subr.mxu0 0.0
        %2545 = vmatpush1.msra.mxu0 0.0
        %2546 = vmatprep.subr.mxu0 0.0
        %2547 = vmatpush1.msra.mxu0 0.0
        %2548 = vmatprep.subr.mxu0 0.0
        %2549 = vmatpush1.msra.mxu0 0.0
        %2550 = vmatprep.subr.mxu0 0.0
        %2551 = vmatpush1.msra.mxu0 0.0
        %2552 = vmatprep.subr.mxu0 0.0
        %2553 = vmatpush1.msra.mxu0 0.0
        %2554 = vmatprep.subr.mxu0 0.0
        %2555 = vmatpush1.msra.mxu0 0.0
        %2556 = vmatprep.subr.mxu0 0.0
        %2557 = vmatpush1.msra.mxu0 0.0
        %2558 = vmatprep.subr.mxu0 0.0
        %2559 = vmatpush1.msra.mxu0 0.0
        %2560 = vmatprep.subr.mxu0 0.0
        %2561 = vmatpush1.msra.mxu0 0.0
        %2562 = vmatprep.subr.mxu0 0.0
        %2563 = vmatpush1.msra.mxu0 0.0
        %2564 = vmatprep.subr.mxu0 0.0
        %2565 = vmatpush1.msra.mxu0 0.0
        %2566 = vmatprep.subr.mxu0 0.0
        %2567 = vmatpush1.msra.mxu0 %v2536
        %2568 = vmatprep.subr.mxu0 0.0
        %2569 = vmatpush1.msra.mxu0 %v2533
        %2570 = vmatprep.subr.mxu0 0.0
        %2571 = vmatpush2.msra.mxu0 0.0
        %2572 = vmatprep.subr.mxu0 0.0
        %2573 = vmatpush2.msra.mxu0 0.0
        %2574 = vmatprep.subr.mxu0 0.0
        %2575 = vmatpush2.msra.mxu0 0.0
        %2576 = vmatprep.subr.mxu0 0.0
        %2577 = vmatpush2.msra.mxu0 0.0
        %2578 = vmatprep.subr.mxu0 0.0
        %2579 = vmatpush2.msra.mxu0 0.0
        %2580 = vmatprep.subr.mxu0 0.0
        %2581 = vmatpush2.msra.mxu0 0.0
        %2582 = vmatprep.subr.mxu0 0.0
        %2583 = vmatpush2.msra.mxu0 0.0
        %2584 = vmatprep.subr.mxu0 0.0
        %2585 = vmatpush2.msra.mxu0 0.0
        %2586 = vmatprep.subr.mxu0 0.0
        %2587 = vmatpush2.msra.mxu0 0.0
        %2588 = vmatprep.subr.mxu0 0.0
        %2589 = vmatpush2.msra.mxu0 0.0
        %2590 = vmatprep.subr.mxu0 0.0
        %2591 = vmatpush2.msra.mxu0 0.0
        %2592 = vmatprep.subr.mxu0 0.0
        %2593 = vmatpush2.msra.mxu0 0.0
        %2594 = vmatprep.subr.mxu0 0.0
        %2595 = vmatpush2.msra.mxu0 0.0
        %2596 = vmatprep.subr.mxu0 0.0
        %2597 = vmatpush2.msra.mxu0 0.0
        %2598 = vmatprep.subr.mxu0 0.0
        %2599 = vmatpush2.msra.mxu0 0.0
        %2600 = vmatprep.subr.mxu0 0.0
        %2601 = vmatpush2.msra.mxu0 0.0
        %2602 = vmatprep.mubr.f32.mxu0 0.0
        %2603 = vmatmul.mubr.f32.gmra.mxu0 %v1595
        %v2604 = vpop.f32.mrf.mxu0
        %v2605 = vadd.f32 0.0, %v2604
        %v2606 = vpop.f32.mrf.mxu0
        %2607 = vdwg.mxu0
        %v2609 = vsel %vm386, %v2532, 0
        %2611 = vmatprep.subr.mxu0 0.0
        %2612 = vmatpush1.msra.mxu0 0.0
        %2613 = vmatprep.subr.mxu0 0.0
        %2614 = vmatpush1.msra.mxu0 0.0
        %2615 = vmatprep.subr.mxu0 0.0
        %2616 = vmatpush1.msra.mxu0 0.0
        %2617 = vmatprep.subr.mxu0 0.0
        %2618 = vmatpush1.msra.mxu0 0.0
        %2619 = vmatprep.subr.mxu0 0.0
        %2620 = vmatpush1.msra.mxu0 0.0
        %2621 = vmatprep.subr.mxu0 0.0
        %2622 = vmatpush1.msra.mxu0 0.0
        %2623 = vmatprep.subr.mxu0 0.0
        %2624 = vmatpush1.msra.mxu0 0.0
        %2625 = vmatprep.subr.mxu0 0.0
        %2626 = vmatpush1.msra.mxu0 0.0
        %2627 = vmatprep.subr.mxu0 0.0
        %2628 = vmatpush1.msra.mxu0 0.0
        %2629 = vmatprep.subr.mxu0 0.0
        %2630 = vmatpush1.msra.mxu0 0.0
        %2631 = vmatprep.subr.mxu0 0.0
        %2632 = vmatpush1.msra.mxu0 0.0
        %2633 = vmatprep.subr.mxu0 0.0
        %2634 = vmatpush1.msra.mxu0 0.0
        %2635 = vmatprep.subr.mxu0 0.0
        %2636 = vmatpush1.msra.mxu0 0.0
        %2637 = vmatprep.subr.mxu0 0.0
        %2638 = vmatpush1.msra.mxu0 0.0
        %2639 = vmatprep.subr.mxu0 0.0
        %2640 = vmatpush1.msra.mxu0 %v2609
        %2641 = vmatprep.subr.mxu0 0.0
        %2642 = vmatpush1.msra.mxu0 %v2531
        %2643 = vmatprep.subr.mxu0 0.0
        %2644 = vmatpush2.msra.mxu0 0.0
        %2645 = vmatprep.subr.mxu0 0.0
        %2646 = vmatpush2.msra.mxu0 0.0
        %2647 = vmatprep.subr.mxu0 0.0
        %2648 = vmatpush2.msra.mxu0 0.0
        %2649 = vmatprep.subr.mxu0 0.0
        %2650 = vmatpush2.msra.mxu0 0.0
        %2651 = vmatprep.subr.mxu0 0.0
        %2652 = vmatpush2.msra.mxu0 0.0
        %2653 = vmatprep.subr.mxu0 0.0
        %2654 = vmatpush2.msra.mxu0 0.0
        %2655 = vmatprep.subr.mxu0 0.0
        %2656 = vmatpush2.msra.mxu0 0.0
        %2657 = vmatprep.subr.mxu0 0.0
        %2658 = vmatpush2.msra.mxu0 0.0
        %2659 = vmatprep.subr.mxu0 0.0
        %2660 = vmatpush2.msra.mxu0 0.0
        %2661 = vmatprep.subr.mxu0 0.0
        %2662 = vmatpush2.msra.mxu0 0.0
        %2663 = vmatprep.subr.mxu0 0.0
        %2664 = vmatpush2.msra.mxu0 0.0
        %2665 = vmatprep.subr.mxu0 0.0
        %2666 = vmatpush2.msra.mxu0 0.0
        %2667 = vmatprep.subr.mxu0 0.0
        %2668 = vmatpush2.msra.mxu0 0.0
        %2669 = vmatprep.subr.mxu0 0.0
        %2670 = vmatpush2.msra.mxu0 0.0
        %2671 = vmatprep.subr.mxu0 0.0
        %2672 = vmatpush2.msra.mxu0 0.0
        %2673 = vmatprep.subr.mxu0 0.0
        %2674 = vmatpush2.msra.mxu0 0.0
        %2675 = vmatprep.mubr.f32.mxu0 0.0
        %2676 = vmatmul.mubr.f32.gmra.mxu0 %v1671
        %v2677 = vpop.f32.mrf.mxu0
        %v2678 = vadd.f32 %v2605, %v2677
        %v2679 = vpop.f32.mrf.mxu0
        %2680 = vdwg.mxu0
        %v2681 = vadd.f32 %v2678, %v1586
        %2683 = vrot.lane.b32.xlu0 %v2681, 96
        %v2684 = vpop.permute.xlu0 %2683
        %2686 = vst.msk [vmem:[%s258 + $0x8] sm:$0xff] %vm2065, %v2684
        %v2687 = vld [vmem:[%s848] sm:$0xff]
        %v2688 = vld [vmem:[%s848 + $0x8] sm:$0xf]
        %v2689 = vld [vmem:[%s963] sm:$0xff]
        %v2690 = vld [vmem:[%s963 + $0x8] sm:$0xf]
        %v2692 = vsel %vm386, %v2690, 0
        %2694 = vmatprep.subr.mxu0 0.0
        %2695 = vmatpush1.msra.mxu0 0.0
        %2696 = vmatprep.subr.mxu0 0.0
        %2697 = vmatpush1.msra.mxu0 0.0
        %2698 = vmatprep.subr.mxu0 0.0
        %2699 = vmatpush1.msra.mxu0 0.0
        %2700 = vmatprep.subr.mxu0 0.0
        %2701 = vmatpush1.msra.mxu0 0.0
        %2702 = vmatprep.subr.mxu0 0.0
        %2703 = vmatpush1.msra.mxu0 0.0
        %2704 = vmatprep.subr.mxu0 0.0
        %2705 = vmatpush1.msra.mxu0 0.0
        %2706 = vmatprep.subr.mxu0 0.0
        %2707 = vmatpush1.msra.mxu0 0.0
        %2708 = vmatprep.subr.mxu0 0.0
        %2709 = vmatpush1.msra.mxu0 0.0
        %2710 = vmatprep.subr.mxu0 0.0
        %2711 = vmatpush1.msra.mxu0 0.0
        %2712 = vmatprep.subr.mxu0 0.0
        %2713 = vmatpush1.msra.mxu0 0.0
        %2714 = vmatprep.subr.mxu0 0.0
        %2715 = vmatpush1.msra.mxu0 0.0
        %2716 = vmatprep.subr.mxu0 0.0
        %2717 = vmatpush1.msra.mxu0 0.0
        %2718 = vmatprep.subr.mxu0 0.0
        %2719 = vmatpush1.msra.mxu0 0.0
        %2720 = vmatprep.subr.mxu0 0.0
        %2721 = vmatpush1.msra.mxu0 0.0
        %2722 = vmatprep.subr.mxu0 0.0
        %2723 = vmatpush1.msra.mxu0 %v2692
        %2724 = vmatprep.subr.mxu0 0.0
        %2725 = vmatpush1.msra.mxu0 %v2689
        %2726 = vmatprep.subr.mxu0 0.0
        %2727 = vmatpush2.msra.mxu0 0.0
        %2728 = vmatprep.subr.mxu0 0.0
        %2729 = vmatpush2.msra.mxu0 0.0
        %2730 = vmatprep.subr.mxu0 0.0
        %2731 = vmatpush2.msra.mxu0 0.0
        %2732 = vmatprep.subr.mxu0 0.0
        %2733 = vmatpush2.msra.mxu0 0.0
        %2734 = vmatprep.subr.mxu0 0.0
        %2735 = vmatpush2.msra.mxu0 0.0
        %2736 = vmatprep.subr.mxu0 0.0
        %2737 = vmatpush2.msra.mxu0 0.0
        %2738 = vmatprep.subr.mxu0 0.0
        %2739 = vmatpush2.msra.mxu0 0.0
        %2740 = vmatprep.subr.mxu0 0.0
        %2741 = vmatpush2.msra.mxu0 0.0
        %2742 = vmatprep.subr.mxu0 0.0
        %2743 = vmatpush2.msra.mxu0 0.0
        %2744 = vmatprep.subr.mxu0 0.0
        %2745 = vmatpush2.msra.mxu0 0.0
        %2746 = vmatprep.subr.mxu0 0.0
        %2747 = vmatpush2.msra.mxu0 0.0
        %2748 = vmatprep.subr.mxu0 0.0
        %2749 = vmatpush2.msra.mxu0 0.0
        %2750 = vmatprep.subr.mxu0 0.0
        %2751 = vmatpush2.msra.mxu0 0.0
        %2752 = vmatprep.subr.mxu0 0.0
        %2753 = vmatpush2.msra.mxu0 0.0
        %2754 = vmatprep.subr.mxu0 0.0
        %2755 = vmatpush2.msra.mxu0 0.0
        %2756 = vmatprep.subr.mxu0 0.0
        %2757 = vmatpush2.msra.mxu0 0.0
        %2758 = vmatprep.mubr.f32.mxu0 0.0
        %2759 = vmatmul.mubr.f32.gmra.mxu0 %v1432
        %v2760 = vpop.f32.mrf.mxu0
        %v2761 = vadd.f32 0.0, %v2760
        %v2762 = vpop.f32.mrf.mxu0
        %2763 = vdwg.mxu0
        %v2765 = vsel %vm386, %v2688, 0
        %2767 = vmatprep.subr.mxu0 0.0
        %2768 = vmatpush1.msra.mxu0 0.0
        %2769 = vmatprep.subr.mxu0 0.0
        %2770 = vmatpush1.msra.mxu0 0.0
        %2771 = vmatprep.subr.mxu0 0.0
        %2772 = vmatpush1.msra.mxu0 0.0
        %2773 = vmatprep.subr.mxu0 0.0
        %2774 = vmatpush1.msra.mxu0 0.0
        %2775 = vmatprep.subr.mxu0 0.0
        %2776 = vmatpush1.msra.mxu0 0.0
        %2777 = vmatprep.subr.mxu0 0.0
        %2778 = vmatpush1.msra.mxu0 0.0
        %2779 = vmatprep.subr.mxu0 0.0
        %2780 = vmatpush1.msra.mxu0 0.0
        %2781 = vmatprep.subr.mxu0 0.0
        %2782 = vmatpush1.msra.mxu0 0.0
        %2783 = vmatprep.subr.mxu0 0.0
        %2784 = vmatpush1.msra.mxu0 0.0
        %2785 = vmatprep.subr.mxu0 0.0
        %2786 = vmatpush1.msra.mxu0 0.0
        %2787 = vmatprep.subr.mxu0 0.0
        %2788 = vmatpush1.msra.mxu0 0.0
        %2789 = vmatprep.subr.mxu0 0.0
        %2790 = vmatpush1.msra.mxu0 0.0
        %2791 = vmatprep.subr.mxu0 0.0
        %2792 = vmatpush1.msra.mxu0 0.0
        %2793 = vmatprep.subr.mxu0 0.0
        %2794 = vmatpush1.msra.mxu0 0.0
        %2795 = vmatprep.subr.mxu0 0.0
        %2796 = vmatpush1.msra.mxu0 %v2765
        %2797 = vmatprep.subr.mxu0 0.0
        %2798 = vmatpush1.msra.mxu0 %v2687
        %2799 = vmatprep.subr.mxu0 0.0
        %2800 = vmatpush2.msra.mxu0 0.0
        %2801 = vmatprep.subr.mxu0 0.0
        %2802 = vmatpush2.msra.mxu0 0.0
        %2803 = vmatprep.subr.mxu0 0.0
        %2804 = vmatpush2.msra.mxu0 0.0
        %2805 = vmatprep.subr.mxu0 0.0
        %2806 = vmatpush2.msra.mxu0 0.0
        %2807 = vmatprep.subr.mxu0 0.0
        %2808 = vmatpush2.msra.mxu0 0.0
        %2809 = vmatprep.subr.mxu0 0.0
        %2810 = vmatpush2.msra.mxu0 0.0
        %2811 = vmatprep.subr.mxu0 0.0
        %2812 = vmatpush2.msra.mxu0 0.0
        %2813 = vmatprep.subr.mxu0 0.0
        %2814 = vmatpush2.msra.mxu0 0.0
        %2815 = vmatprep.subr.mxu0 0.0
        %2816 = vmatpush2.msra.mxu0 0.0
        %2817 = vmatprep.subr.mxu0 0.0
        %2818 = vmatpush2.msra.mxu0 0.0
        %2819 = vmatprep.subr.mxu0 0.0
        %2820 = vmatpush2.msra.mxu0 0.0
        %2821 = vmatprep.subr.mxu0 0.0
        %2822 = vmatpush2.msra.mxu0 0.0
        %2823 = vmatprep.subr.mxu0 0.0
        %2824 = vmatpush2.msra.mxu0 0.0
        %2825 = vmatprep.subr.mxu0 0.0
        %2826 = vmatpush2.msra.mxu0 0.0
        %2827 = vmatprep.subr.mxu0 0.0
        %2828 = vmatpush2.msra.mxu0 0.0
        %2829 = vmatprep.subr.mxu0 0.0
        %2830 = vmatpush2.msra.mxu0 0.0
        %2831 = vmatprep.mubr.f32.mxu0 0.0
        %2832 = vmatmul.mubr.f32.gmra.mxu0 %v1508
        %v2833 = vpop.f32.mrf.mxu0
        %v2834 = vadd.f32 %v2761, %v2833
        %v2835 = vpop.f32.mrf.mxu0
        %2836 = vdwg.mxu0
        %v2837 = vadd.f32 %v2834, %v1586
        %2838 = vst.msk [vmem:[%s258 + $0x10] sm:$0xff] %vm388, %v2837
        %v2839 = vld [vmem:[%s963] sm:$0xff]
        %v2840 = vld [vmem:[%s963 + $0x8] sm:$0xf]
        %v2841 = vld [vmem:[%s1078] sm:$0xff]
        %v2842 = vld [vmem:[%s1078 + $0x8] sm:$0xf]
        %v2844 = vsel %vm386, %v2842, 0
        %2846 = vmatprep.subr.mxu0 0.0
        %2847 = vmatpush1.msra.mxu0 0.0
        %2848 = vmatprep.subr.mxu0 0.0
        %2849 = vmatpush1.msra.mxu0 0.0
        %2850 = vmatprep.subr.mxu0 0.0
        %2851 = vmatpush1.msra.mxu0 0.0
        %2852 = vmatprep.subr.mxu0 0.0
        %2853 = vmatpush1.msra.mxu0 0.0
        %2854 = vmatprep.subr.mxu0 0.0
        %2855 = vmatpush1.msra.mxu0 0.0
        %2856 = vmatprep.subr.mxu0 0.0
        %2857 = vmatpush1.msra.mxu0 0.0
        %2858 = vmatprep.subr.mxu0 0.0
        %2859 = vmatpush1.msra.mxu0 0.0
        %2860 = vmatprep.subr.mxu0 0.0
        %2861 = vmatpush1.msra.mxu0 0.0
        %2862 = vmatprep.subr.mxu0 0.0
        %2863 = vmatpush1.msra.mxu0 0.0
        %2864 = vmatprep.subr.mxu0 0.0
        %2865 = vmatpush1.msra.mxu0 0.0
        %2866 = vmatprep.subr.mxu0 0.0
        %2867 = vmatpush1.msra.mxu0 0.0
        %2868 = vmatprep.subr.mxu0 0.0
        %2869 = vmatpush1.msra.mxu0 0.0
        %2870 = vmatprep.subr.mxu0 0.0
        %2871 = vmatpush1.msra.mxu0 0.0
        %2872 = vmatprep.subr.mxu0 0.0
        %2873 = vmatpush1.msra.mxu0 0.0
        %2874 = vmatprep.subr.mxu0 0.0
        %2875 = vmatpush1.msra.mxu0 %v2844
        %2876 = vmatprep.subr.mxu0 0.0
        %2877 = vmatpush1.msra.mxu0 %v2841
        %2878 = vmatprep.subr.mxu0 0.0
        %2879 = vmatpush2.msra.mxu0 0.0
        %2880 = vmatprep.subr.mxu0 0.0
        %2881 = vmatpush2.msra.mxu0 0.0
        %2882 = vmatprep.subr.mxu0 0.0
        %2883 = vmatpush2.msra.mxu0 0.0
        %2884 = vmatprep.subr.mxu0 0.0
        %2885 = vmatpush2.msra.mxu0 0.0
        %2886 = vmatprep.subr.mxu0 0.0
        %2887 = vmatpush2.msra.mxu0 0.0
        %2888 = vmatprep.subr.mxu0 0.0
        %2889 = vmatpush2.msra.mxu0 0.0
        %2890 = vmatprep.subr.mxu0 0.0
        %2891 = vmatpush2.msra.mxu0 0.0
        %2892 = vmatprep.subr.mxu0 0.0
        %2893 = vmatpush2.msra.mxu0 0.0
        %2894 = vmatprep.subr.mxu0 0.0
        %2895 = vmatpush2.msra.mxu0 0.0
        %2896 = vmatprep.subr.mxu0 0.0
        %2897 = vmatpush2.msra.mxu0 0.0
        %2898 = vmatprep.subr.mxu0 0.0
        %2899 = vmatpush2.msra.mxu0 0.0
        %2900 = vmatprep.subr.mxu0 0.0
        %2901 = vmatpush2.msra.mxu0 0.0
        %2902 = vmatprep.subr.mxu0 0.0
        %2903 = vmatpush2.msra.mxu0 0.0
        %2904 = vmatprep.subr.mxu0 0.0
        %2905 = vmatpush2.msra.mxu0 0.0
        %2906 = vmatprep.subr.mxu0 0.0
        %2907 = vmatpush2.msra.mxu0 0.0
        %2908 = vmatprep.subr.mxu0 0.0
        %2909 = vmatpush2.msra.mxu0 0.0
        %2910 = vmatprep.mubr.f32.mxu0 0.0
        %2911 = vmatmul.mubr.f32.gmra.mxu0 %v1595
        %v2912 = vpop.f32.mrf.mxu0
        %v2913 = vadd.f32 0.0, %v2912
        %v2914 = vpop.f32.mrf.mxu0
        %2915 = vdwg.mxu0
        %v2917 = vsel %vm386, %v2840, 0
        %2919 = vmatprep.subr.mxu0 0.0
        %2920 = vmatpush1.msra.mxu0 0.0
        %2921 = vmatprep.subr.mxu0 0.0
        %2922 = vmatpush1.msra.mxu0 0.0
        %2923 = vmatprep.subr.mxu0 0.0
        %2924 = vmatpush1.msra.mxu0 0.0
        %2925 = vmatprep.subr.mxu0 0.0
        %2926 = vmatpush1.msra.mxu0 0.0
        %2927 = vmatprep.subr.mxu0 0.0
        %2928 = vmatpush1.msra.mxu0 0.0
        %2929 = vmatprep.subr.mxu0 0.0
        %2930 = vmatpush1.msra.mxu0 0.0
        %2931 = vmatprep.subr.mxu0 0.0
        %2932 = vmatpush1.msra.mxu0 0.0
        %2933 = vmatprep.subr.mxu0 0.0
        %2934 = vmatpush1.msra.mxu0 0.0
        %2935 = vmatprep.subr.mxu0 0.0
        %2936 = vmatpush1.msra.mxu0 0.0
        %2937 = vmatprep.subr.mxu0 0.0
        %2938 = vmatpush1.msra.mxu0 0.0
        %2939 = vmatprep.subr.mxu0 0.0
        %2940 = vmatpush1.msra.mxu0 0.0
        %2941 = vmatprep.subr.mxu0 0.0
        %2942 = vmatpush1.msra.mxu0 0.0
        %2943 = vmatprep.subr.mxu0 0.0
        %2944 = vmatpush1.msra.mxu0 0.0
        %2945 = vmatprep.subr.mxu0 0.0
        %2946 = vmatpush1.msra.mxu0 0.0
        %2947 = vmatprep.subr.mxu0 0.0
        %2948 = vmatpush1.msra.mxu0 %v2917
        %2949 = vmatprep.subr.mxu0 0.0
        %2950 = vmatpush1.msra.mxu0 %v2839
        %2951 = vmatprep.subr.mxu0 0.0
        %2952 = vmatpush2.msra.mxu0 0.0
        %2953 = vmatprep.subr.mxu0 0.0
        %2954 = vmatpush2.msra.mxu0 0.0
        %2955 = vmatprep.subr.mxu0 0.0
        %2956 = vmatpush2.msra.mxu0 0.0
        %2957 = vmatprep.subr.mxu0 0.0
        %2958 = vmatpush2.msra.mxu0 0.0
        %2959 = vmatprep.subr.mxu0 0.0
        %2960 = vmatpush2.msra.mxu0 0.0
        %2961 = vmatprep.subr.mxu0 0.0
        %2962 = vmatpush2.msra.mxu0 0.0
        %2963 = vmatprep.subr.mxu0 0.0
        %2964 = vmatpush2.msra.mxu0 0.0
        %2965 = vmatprep.subr.mxu0 0.0
        %2966 = vmatpush2.msra.mxu0 0.0
        %2967 = vmatprep.subr.mxu0 0.0
        %2968 = vmatpush2.msra.mxu0 0.0
        %2969 = vmatprep.subr.mxu0 0.0
        %2970 = vmatpush2.msra.mxu0 0.0
        %2971 = vmatprep.subr.mxu0 0.0
        %2972 = vmatpush2.msra.mxu0 0.0
        %2973 = vmatprep.subr.mxu0 0.0
        %2974 = vmatpush2.msra.mxu0 0.0
        %2975 = vmatprep.subr.mxu0 0.0
        %2976 = vmatpush2.msra.mxu0 0.0
        %2977 = vmatprep.subr.mxu0 0.0
        %2978 = vmatpush2.msra.mxu0 0.0
        %2979 = vmatprep.subr.mxu0 0.0
        %2980 = vmatpush2.msra.mxu0 0.0
        %2981 = vmatprep.subr.mxu0 0.0
        %2982 = vmatpush2.msra.mxu0 0.0
        %2983 = vmatprep.mubr.f32.mxu0 0.0
        %2984 = vmatmul.mubr.f32.gmra.mxu0 %v1671
        %v2985 = vpop.f32.mrf.mxu0
        %v2986 = vadd.f32 %v2913, %v2985
        %v2987 = vpop.f32.mrf.mxu0
        %2988 = vdwg.mxu0
        %v2989 = vadd.f32 %v2986, %v1586
        %2991 = vrot.lane.b32.xlu0 %v2989, 32
        %v2992 = vpop.permute.xlu0 %2991
        %2994 = vst.msk [vmem:[%s258 + $0x10] sm:$0xff] %vm1751, %v2992
        %v2995 = vld [vmem:[%s963] sm:$0xff]
        %v2996 = vld [vmem:[%s963 + $0x8] sm:$0xf]
        %v2997 = vld [vmem:[%s1078] sm:$0xff]
        %v2998 = vld [vmem:[%s1078 + $0x8] sm:$0xf]
        %v3000 = vsel %vm386, %v2998, 0
        %3002 = vmatprep.subr.mxu0 0.0
        %3003 = vmatpush1.msra.mxu0 0.0
        %3004 = vmatprep.subr.mxu0 0.0
        %3005 = vmatpush1.msra.mxu0 0.0
        %3006 = vmatprep.subr.mxu0 0.0
        %3007 = vmatpush1.msra.mxu0 0.0
        %3008 = vmatprep.subr.mxu0 0.0
        %3009 = vmatpush1.msra.mxu0 0.0
        %3010 = vmatprep.subr.mxu0 0.0
        %3011 = vmatpush1.msra.mxu0 0.0
        %3012 = vmatprep.subr.mxu0 0.0
        %3013 = vmatpush1.msra.mxu0 0.0
        %3014 = vmatprep.subr.mxu0 0.0
        %3015 = vmatpush1.msra.mxu0 0.0
        %3016 = vmatprep.subr.mxu0 0.0
        %3017 = vmatpush1.msra.mxu0 0.0
        %3018 = vmatprep.subr.mxu0 0.0
        %3019 = vmatpush1.msra.mxu0 0.0
        %3020 = vmatprep.subr.mxu0 0.0
        %3021 = vmatpush1.msra.mxu0 0.0
        %3022 = vmatprep.subr.mxu0 0.0
        %3023 = vmatpush1.msra.mxu0 0.0
        %3024 = vmatprep.subr.mxu0 0.0
        %3025 = vmatpush1.msra.mxu0 0.0
        %3026 = vmatprep.subr.mxu0 0.0
        %3027 = vmatpush1.msra.mxu0 0.0
        %3028 = vmatprep.subr.mxu0 0.0
        %3029 = vmatpush1.msra.mxu0 0.0
        %3030 = vmatprep.subr.mxu0 0.0
        %3031 = vmatpush1.msra.mxu0 %v3000
        %3032 = vmatprep.subr.mxu0 0.0
        %3033 = vmatpush1.msra.mxu0 %v2997
        %3034 = vmatprep.subr.mxu0 0.0
        %3035 = vmatpush2.msra.mxu0 0.0
        %3036 = vmatprep.subr.mxu0 0.0
        %3037 = vmatpush2.msra.mxu0 0.0
        %3038 = vmatprep.subr.mxu0 0.0
        %3039 = vmatpush2.msra.mxu0 0.0
        %3040 = vmatprep.subr.mxu0 0.0
        %3041 = vmatpush2.msra.mxu0 0.0
        %3042 = vmatprep.subr.mxu0 0.0
        %3043 = vmatpush2.msra.mxu0 0.0
        %3044 = vmatprep.subr.mxu0 0.0
        %3045 = vmatpush2.msra.mxu0 0.0
        %3046 = vmatprep.subr.mxu0 0.0
        %3047 = vmatpush2.msra.mxu0 0.0
        %3048 = vmatprep.subr.mxu0 0.0
        %3049 = vmatpush2.msra.mxu0 0.0
        %3050 = vmatprep.subr.mxu0 0.0
        %3051 = vmatpush2.msra.mxu0 0.0
        %3052 = vmatprep.subr.mxu0 0.0
        %3053 = vmatpush2.msra.mxu0 0.0
        %3054 = vmatprep.subr.mxu0 0.0
        %3055 = vmatpush2.msra.mxu0 0.0
        %3056 = vmatprep.subr.mxu0 0.0
        %3057 = vmatpush2.msra.mxu0 0.0
        %3058 = vmatprep.subr.mxu0 0.0
        %3059 = vmatpush2.msra.mxu0 0.0
        %3060 = vmatprep.subr.mxu0 0.0
        %3061 = vmatpush2.msra.mxu0 0.0
        %3062 = vmatprep.subr.mxu0 0.0
        %3063 = vmatpush2.msra.mxu0 0.0
        %3064 = vmatprep.subr.mxu0 0.0
        %3065 = vmatpush2.msra.mxu0 0.0
        %3066 = vmatprep.mubr.f32.mxu0 0.0
        %3067 = vmatmul.mubr.f32.gmra.mxu0 %v1432
        %v3068 = vpop.f32.mrf.mxu0
        %v3069 = vadd.f32 0.0, %v3068
        %v3070 = vpop.f32.mrf.mxu0
        %3071 = vdwg.mxu0
        %v3073 = vsel %vm386, %v2996, 0
        %3075 = vmatprep.subr.mxu0 0.0
        %3076 = vmatpush1.msra.mxu0 0.0
        %3077 = vmatprep.subr.mxu0 0.0
        %3078 = vmatpush1.msra.mxu0 0.0
        %3079 = vmatprep.subr.mxu0 0.0
        %3080 = vmatpush1.msra.mxu0 0.0
        %3081 = vmatprep.subr.mxu0 0.0
        %3082 = vmatpush1.msra.mxu0 0.0
        %3083 = vmatprep.subr.mxu0 0.0
        %3084 = vmatpush1.msra.mxu0 0.0
        %3085 = vmatprep.subr.mxu0 0.0
        %3086 = vmatpush1.msra.mxu0 0.0
        %3087 = vmatprep.subr.mxu0 0.0
        %3088 = vmatpush1.msra.mxu0 0.0
        %3089 = vmatprep.subr.mxu0 0.0
        %3090 = vmatpush1.msra.mxu0 0.0
        %3091 = vmatprep.subr.mxu0 0.0
        %3092 = vmatpush1.msra.mxu0 0.0
        %3093 = vmatprep.subr.mxu0 0.0
        %3094 = vmatpush1.msra.mxu0 0.0
        %3095 = vmatprep.subr.mxu0 0.0
        %3096 = vmatpush1.msra.mxu0 0.0
        %3097 = vmatprep.subr.mxu0 0.0
        %3098 = vmatpush1.msra.mxu0 0.0
        %3099 = vmatprep.subr.mxu0 0.0
        %3100 = vmatpush1.msra.mxu0 0.0
        %3101 = vmatprep.subr.mxu0 0.0
        %3102 = vmatpush1.msra.mxu0 0.0
        %3103 = vmatprep.subr.mxu0 0.0
        %3104 = vmatpush1.msra.mxu0 %v3073
        %3105 = vmatprep.subr.mxu0 0.0
        %3106 = vmatpush1.msra.mxu0 %v2995
        %3107 = vmatprep.subr.mxu0 0.0
        %3108 = vmatpush2.msra.mxu0 0.0
        %3109 = vmatprep.subr.mxu0 0.0
        %3110 = vmatpush2.msra.mxu0 0.0
        %3111 = vmatprep.subr.mxu0 0.0
        %3112 = vmatpush2.msra.mxu0 0.0
        %3113 = vmatprep.subr.mxu0 0.0
        %3114 = vmatpush2.msra.mxu0 0.0
        %3115 = vmatprep.subr.mxu0 0.0
        %3116 = vmatpush2.msra.mxu0 0.0
        %3117 = vmatprep.subr.mxu0 0.0
        %3118 = vmatpush2.msra.mxu0 0.0
        %3119 = vmatprep.subr.mxu0 0.0
        %3120 = vmatpush2.msra.mxu0 0.0
        %3121 = vmatprep.subr.mxu0 0.0
        %3122 = vmatpush2.msra.mxu0 0.0
        %3123 = vmatprep.subr.mxu0 0.0
        %3124 = vmatpush2.msra.mxu0 0.0
        %3125 = vmatprep.subr.mxu0 0.0
        %3126 = vmatpush2.msra.mxu0 0.0
        %3127 = vmatprep.subr.mxu0 0.0
        %3128 = vmatpush2.msra.mxu0 0.0
        %3129 = vmatprep.subr.mxu0 0.0
        %3130 = vmatpush2.msra.mxu0 0.0
        %3131 = vmatprep.subr.mxu0 0.0
        %3132 = vmatpush2.msra.mxu0 0.0
        %3133 = vmatprep.subr.mxu0 0.0
        %3134 = vmatpush2.msra.mxu0 0.0
        %3135 = vmatprep.subr.mxu0 0.0
        %3136 = vmatpush2.msra.mxu0 0.0
        %3137 = vmatprep.subr.mxu0 0.0
        %3138 = vmatpush2.msra.mxu0 0.0
        %3139 = vmatprep.mubr.f32.mxu0 0.0
        %3140 = vmatmul.mubr.f32.gmra.mxu0 %v1508
        %v3141 = vpop.f32.mrf.mxu0
        %v3142 = vadd.f32 %v3069, %v3141
        %v3143 = vpop.f32.mrf.mxu0
        %3144 = vdwg.mxu0
        %v3145 = vadd.f32 %v3142, %v1586
        %3147 = vrot.lane.b32.xlu0 %v3145, 64
        %v3148 = vpop.permute.xlu0 %3147
        %3150 = vst.msk [vmem:[%s258 + $0x10] sm:$0xff] %vm1908, %v3148
        %v3151 = vld [vmem:[%s1078] sm:$0xff]
        %v3152 = vld [vmem:[%s1078 + $0x8] sm:$0xf]
        %v3153 = vld [vmem:[%s1193] sm:$0xff]
        %v3154 = vld [vmem:[%s1193 + $0x8] sm:$0xf]
        %v3156 = vsel %vm386, %v3154, 0
        %3158 = vmatprep.subr.mxu0 0.0
        %3159 = vmatpush1.msra.mxu0 0.0
        %3160 = vmatprep.subr.mxu0 0.0
        %3161 = vmatpush1.msra.mxu0 0.0
        %3162 = vmatprep.subr.mxu0 0.0
        %3163 = vmatpush1.msra.mxu0 0.0
        %3164 = vmatprep.subr.mxu0 0.0
        %3165 = vmatpush1.msra.mxu0 0.0
        %3166 = vmatprep.subr.mxu0 0.0
        %3167 = vmatpush1.msra.mxu0 0.0
        %3168 = vmatprep.subr.mxu0 0.0
        %3169 = vmatpush1.msra.mxu0 0.0
        %3170 = vmatprep.subr.mxu0 0.0
        %3171 = vmatpush1.msra.mxu0 0.0
        %3172 = vmatprep.subr.mxu0 0.0
        %3173 = vmatpush1.msra.mxu0 0.0
        %3174 = vmatprep.subr.mxu0 0.0
        %3175 = vmatpush1.msra.mxu0 0.0
        %3176 = vmatprep.subr.mxu0 0.0
        %3177 = vmatpush1.msra.mxu0 0.0
        %3178 = vmatprep.subr.mxu0 0.0
        %3179 = vmatpush1.msra.mxu0 0.0
        %3180 = vmatprep.subr.mxu0 0.0
        %3181 = vmatpush1.msra.mxu0 0.0
        %3182 = vmatprep.subr.mxu0 0.0
        %3183 = vmatpush1.msra.mxu0 0.0
        %3184 = vmatprep.subr.mxu0 0.0
        %3185 = vmatpush1.msra.mxu0 0.0
        %3186 = vmatprep.subr.mxu0 0.0
        %3187 = vmatpush1.msra.mxu0 %v3156
        %3188 = vmatprep.subr.mxu0 0.0
        %3189 = vmatpush1.msra.mxu0 %v3153
        %3190 = vmatprep.subr.mxu0 0.0
        %3191 = vmatpush2.msra.mxu0 0.0
        %3192 = vmatprep.subr.mxu0 0.0
        %3193 = vmatpush2.msra.mxu0 0.0
        %3194 = vmatprep.subr.mxu0 0.0
        %3195 = vmatpush2.msra.mxu0 0.0
        %3196 = vmatprep.subr.mxu0 0.0
        %3197 = vmatpush2.msra.mxu0 0.0
        %3198 = vmatprep.subr.mxu0 0.0
        %3199 = vmatpush2.msra.mxu0 0.0
        %3200 = vmatprep.subr.mxu0 0.0
        %3201 = vmatpush2.msra.mxu0 0.0
        %3202 = vmatprep.subr.mxu0 0.0
        %3203 = vmatpush2.msra.mxu0 0.0
        %3204 = vmatprep.subr.mxu0 0.0
        %3205 = vmatpush2.msra.mxu0 0.0
        %3206 = vmatprep.subr.mxu0 0.0
        %3207 = vmatpush2.msra.mxu0 0.0
        %3208 = vmatprep.subr.mxu0 0.0
        %3209 = vmatpush2.msra.mxu0 0.0
        %3210 = vmatprep.subr.mxu0 0.0
        %3211 = vmatpush2.msra.mxu0 0.0
        %3212 = vmatprep.subr.mxu0 0.0
        %3213 = vmatpush2.msra.mxu0 0.0
        %3214 = vmatprep.subr.mxu0 0.0
        %3215 = vmatpush2.msra.mxu0 0.0
        %3216 = vmatprep.subr.mxu0 0.0
        %3217 = vmatpush2.msra.mxu0 0.0
        %3218 = vmatprep.subr.mxu0 0.0
        %3219 = vmatpush2.msra.mxu0 0.0
        %3220 = vmatprep.subr.mxu0 0.0
        %3221 = vmatpush2.msra.mxu0 0.0
        %3222 = vmatprep.mubr.f32.mxu0 0.0
        %3223 = vmatmul.mubr.f32.gmra.mxu0 %v1595
        %v3224 = vpop.f32.mrf.mxu0
        %v3225 = vadd.f32 0.0, %v3224
        %v3226 = vpop.f32.mrf.mxu0
        %3227 = vdwg.mxu0
        %v3229 = vsel %vm386, %v3152, 0
        %3231 = vmatprep.subr.mxu0 0.0
        %3232 = vmatpush1.msra.mxu0 0.0
        %3233 = vmatprep.subr.mxu0 0.0
        %3234 = vmatpush1.msra.mxu0 0.0
        %3235 = vmatprep.subr.mxu0 0.0
        %3236 = vmatpush1.msra.mxu0 0.0
        %3237 = vmatprep.subr.mxu0 0.0
        %3238 = vmatpush1.msra.mxu0 0.0
        %3239 = vmatprep.subr.mxu0 0.0
        %3240 = vmatpush1.msra.mxu0 0.0
        %3241 = vmatprep.subr.mxu0 0.0
        %3242 = vmatpush1.msra.mxu0 0.0
        %3243 = vmatprep.subr.mxu0 0.0
        %3244 = vmatpush1.msra.mxu0 0.0
        %3245 = vmatprep.subr.mxu0 0.0
        %3246 = vmatpush1.msra.mxu0 0.0
        %3247 = vmatprep.subr.mxu0 0.0
        %3248 = vmatpush1.msra.mxu0 0.0
        %3249 = vmatprep.subr.mxu0 0.0
        %3250 = vmatpush1.msra.mxu0 0.0
        %3251 = vmatprep.subr.mxu0 0.0
        %3252 = vmatpush1.msra.mxu0 0.0
        %3253 = vmatprep.subr.mxu0 0.0
        %3254 = vmatpush1.msra.mxu0 0.0
        %3255 = vmatprep.subr.mxu0 0.0
        %3256 = vmatpush1.msra.mxu0 0.0
        %3257 = vmatprep.subr.mxu0 0.0
        %3258 = vmatpush1.msra.mxu0 0.0
        %3259 = vmatprep.subr.mxu0 0.0
        %3260 = vmatpush1.msra.mxu0 %v3229
        %3261 = vmatprep.subr.mxu0 0.0
        %3262 = vmatpush1.msra.mxu0 %v3151
        %3263 = vmatprep.subr.mxu0 0.0
        %3264 = vmatpush2.msra.mxu0 0.0
        %3265 = vmatprep.subr.mxu0 0.0
        %3266 = vmatpush2.msra.mxu0 0.0
        %3267 = vmatprep.subr.mxu0 0.0
        %3268 = vmatpush2.msra.mxu0 0.0
        %3269 = vmatprep.subr.mxu0 0.0
        %3270 = vmatpush2.msra.mxu0 0.0
        %3271 = vmatprep.subr.mxu0 0.0
        %3272 = vmatpush2.msra.mxu0 0.0
        %3273 = vmatprep.subr.mxu0 0.0
        %3274 = vmatpush2.msra.mxu0 0.0
        %3275 = vmatprep.subr.mxu0 0.0
        %3276 = vmatpush2.msra.mxu0 0.0
        %3277 = vmatprep.subr.mxu0 0.0
        %3278 = vmatpush2.msra.mxu0 0.0
        %3279 = vmatprep.subr.mxu0 0.0
        %3280 = vmatpush2.msra.mxu0 0.0
        %3281 = vmatprep.subr.mxu0 0.0
        %3282 = vmatpush2.msra.mxu0 0.0
        %3283 = vmatprep.subr.mxu0 0.0
        %3284 = vmatpush2.msra.mxu0 0.0
        %3285 = vmatprep.subr.mxu0 0.0
        %3286 = vmatpush2.msra.mxu0 0.0
        %3287 = vmatprep.subr.mxu0 0.0
        %3288 = vmatpush2.msra.mxu0 0.0
        %3289 = vmatprep.subr.mxu0 0.0
        %3290 = vmatpush2.msra.mxu0 0.0
        %3291 = vmatprep.subr.mxu0 0.0
        %3292 = vmatpush2.msra.mxu0 0.0
        %3293 = vmatprep.subr.mxu0 0.0
        %3294 = vmatpush2.msra.mxu0 0.0
        %3295 = vmatprep.mubr.f32.mxu0 0.0
        %3296 = vmatmul.mubr.f32.gmra.mxu0 %v1671
        %v3297 = vpop.f32.mrf.mxu0
        %v3298 = vadd.f32 %v3225, %v3297
        %v3299 = vpop.f32.mrf.mxu0
        %3300 = vdwg.mxu0
        %v3301 = vadd.f32 %v3298, %v1586
        %3303 = vrot.lane.b32.xlu0 %v3301, 96
        %v3304 = vpop.permute.xlu0 %3303
        %3306 = vst.msk [vmem:[%s258 + $0x10] sm:$0xff] %vm2065, %v3304
        %v3307 = vld [vmem:[%s1078] sm:$0xff]
        %v3308 = vld [vmem:[%s1078 + $0x8] sm:$0xf]
        %v3309 = vld [vmem:[%s1193] sm:$0xff]
        %v3310 = vld [vmem:[%s1193 + $0x8] sm:$0xf]
        %v3312 = vsel %vm386, %v3310, 0
        %3314 = vmatprep.subr.mxu0 0.0
        %3315 = vmatpush1.msra.mxu0 0.0
        %3316 = vmatprep.subr.mxu0 0.0
        %3317 = vmatpush1.msra.mxu0 0.0
        %3318 = vmatprep.subr.mxu0 0.0
        %3319 = vmatpush1.msra.mxu0 0.0
        %3320 = vmatprep.subr.mxu0 0.0
        %3321 = vmatpush1.msra.mxu0 0.0
        %3322 = vmatprep.subr.mxu0 0.0
        %3323 = vmatpush1.msra.mxu0 0.0
        %3324 = vmatprep.subr.mxu0 0.0
        %3325 = vmatpush1.msra.mxu0 0.0
        %3326 = vmatprep.subr.mxu0 0.0
        %3327 = vmatpush1.msra.mxu0 0.0
        %3328 = vmatprep.subr.mxu0 0.0
        %3329 = vmatpush1.msra.mxu0 0.0
        %3330 = vmatprep.subr.mxu0 0.0
        %3331 = vmatpush1.msra.mxu0 0.0
        %3332 = vmatprep.subr.mxu0 0.0
        %3333 = vmatpush1.msra.mxu0 0.0
        %3334 = vmatprep.subr.mxu0 0.0
        %3335 = vmatpush1.msra.mxu0 0.0
        %3336 = vmatprep.subr.mxu0 0.0
        %3337 = vmatpush1.msra.mxu0 0.0
        %3338 = vmatprep.subr.mxu0 0.0
        %3339 = vmatpush1.msra.mxu0 0.0
        %3340 = vmatprep.subr.mxu0 0.0
        %3341 = vmatpush1.msra.mxu0 0.0
        %3342 = vmatprep.subr.mxu0 0.0
        %3343 = vmatpush1.msra.mxu0 %v3312
        %3344 = vmatprep.subr.mxu0 0.0
        %3345 = vmatpush1.msra.mxu0 %v3309
        %3346 = vmatprep.subr.mxu0 0.0
        %3347 = vmatpush2.msra.mxu0 0.0
        %3348 = vmatprep.subr.mxu0 0.0
        %3349 = vmatpush2.msra.mxu0 0.0
        %3350 = vmatprep.subr.mxu0 0.0
        %3351 = vmatpush2.msra.mxu0 0.0
        %3352 = vmatprep.subr.mxu0 0.0
        %3353 = vmatpush2.msra.mxu0 0.0
        %3354 = vmatprep.subr.mxu0 0.0
        %3355 = vmatpush2.msra.mxu0 0.0
        %3356 = vmatprep.subr.mxu0 0.0
        %3357 = vmatpush2.msra.mxu0 0.0
        %3358 = vmatprep.subr.mxu0 0.0
        %3359 = vmatpush2.msra.mxu0 0.0
        %3360 = vmatprep.subr.mxu0 0.0
        %3361 = vmatpush2.msra.mxu0 0.0
        %3362 = vmatprep.subr.mxu0 0.0
        %3363 = vmatpush2.msra.mxu0 0.0
        %3364 = vmatprep.subr.mxu0 0.0
        %3365 = vmatpush2.msra.mxu0 0.0
        %3366 = vmatprep.subr.mxu0 0.0
        %3367 = vmatpush2.msra.mxu0 0.0
        %3368 = vmatprep.subr.mxu0 0.0
        %3369 = vmatpush2.msra.mxu0 0.0
        %3370 = vmatprep.subr.mxu0 0.0
        %3371 = vmatpush2.msra.mxu0 0.0
        %3372 = vmatprep.subr.mxu0 0.0
        %3373 = vmatpush2.msra.mxu0 0.0
        %3374 = vmatprep.subr.mxu0 0.0
        %3375 = vmatpush2.msra.mxu0 0.0
        %3376 = vmatprep.subr.mxu0 0.0
        %3377 = vmatpush2.msra.mxu0 0.0
        %3378 = vmatprep.mubr.f32.mxu0 0.0
        %3379 = vmatmul.mubr.f32.gmra.mxu0 %v1432
        %v3380 = vpop.f32.mrf.mxu0
        %v3381 = vadd.f32 0.0, %v3380
        %v3382 = vpop.f32.mrf.mxu0
        %3383 = vdwg.mxu0
        %v3385 = vsel %vm386, %v3308, 0
        %3387 = vmatprep.subr.mxu0 0.0
        %3388 = vmatpush1.msra.mxu0 0.0
        %3389 = vmatprep.subr.mxu0 0.0
        %3390 = vmatpush1.msra.mxu0 0.0
        %3391 = vmatprep.subr.mxu0 0.0
        %3392 = vmatpush1.msra.mxu0 0.0
        %3393 = vmatprep.subr.mxu0 0.0
        %3394 = vmatpush1.msra.mxu0 0.0
        %3395 = vmatprep.subr.mxu0 0.0
        %3396 = vmatpush1.msra.mxu0 0.0
        %3397 = vmatprep.subr.mxu0 0.0
        %3398 = vmatpush1.msra.mxu0 0.0
        %3399 = vmatprep.subr.mxu0 0.0
        %3400 = vmatpush1.msra.mxu0 0.0
        %3401 = vmatprep.subr.mxu0 0.0
        %3402 = vmatpush1.msra.mxu0 0.0
        %3403 = vmatprep.subr.mxu0 0.0
        %3404 = vmatpush1.msra.mxu0 0.0
        %3405 = vmatprep.subr.mxu0 0.0
        %3406 = vmatpush1.msra.mxu0 0.0
        %3407 = vmatprep.subr.mxu0 0.0
        %3408 = vmatpush1.msra.mxu0 0.0
        %3409 = vmatprep.subr.mxu0 0.0
        %3410 = vmatpush1.msra.mxu0 0.0
        %3411 = vmatprep.subr.mxu0 0.0
        %3412 = vmatpush1.msra.mxu0 0.0
        %3413 = vmatprep.subr.mxu0 0.0
        %3414 = vmatpush1.msra.mxu0 0.0
        %3415 = vmatprep.subr.mxu0 0.0
        %3416 = vmatpush1.msra.mxu0 %v3385
        %3417 = vmatprep.subr.mxu0 0.0
        %3418 = vmatpush1.msra.mxu0 %v3307
        %3419 = vmatprep.subr.mxu0 0.0
        %3420 = vmatpush2.msra.mxu0 0.0
        %3421 = vmatprep.subr.mxu0 0.0
        %3422 = vmatpush2.msra.mxu0 0.0
        %3423 = vmatprep.subr.mxu0 0.0
        %3424 = vmatpush2.msra.mxu0 0.0
        %3425 = vmatprep.subr.mxu0 0.0
        %3426 = vmatpush2.msra.mxu0 0.0
        %3427 = vmatprep.subr.mxu0 0.0
        %3428 = vmatpush2.msra.mxu0 0.0
        %3429 = vmatprep.subr.mxu0 0.0
        %3430 = vmatpush2.msra.mxu0 0.0
        %3431 = vmatprep.subr.mxu0 0.0
        %3432 = vmatpush2.msra.mxu0 0.0
        %3433 = vmatprep.subr.mxu0 0.0
        %3434 = vmatpush2.msra.mxu0 0.0
        %3435 = vmatprep.subr.mxu0 0.0
        %3436 = vmatpush2.msra.mxu0 0.0
        %3437 = vmatprep.subr.mxu0 0.0
        %3438 = vmatpush2.msra.mxu0 0.0
        %3439 = vmatprep.subr.mxu0 0.0
        %3440 = vmatpush2.msra.mxu0 0.0
        %3441 = vmatprep.subr.mxu0 0.0
        %3442 = vmatpush2.msra.mxu0 0.0
        %3443 = vmatprep.subr.mxu0 0.0
        %3444 = vmatpush2.msra.mxu0 0.0
        %3445 = vmatprep.subr.mxu0 0.0
        %3446 = vmatpush2.msra.mxu0 0.0
        %3447 = vmatprep.subr.mxu0 0.0
        %3448 = vmatpush2.msra.mxu0 0.0
        %3449 = vmatprep.subr.mxu0 0.0
        %3450 = vmatpush2.msra.mxu0 0.0
        %3451 = vmatprep.mubr.f32.mxu0 0.0
        %3452 = vmatmul.mubr.f32.gmra.mxu0 %v1508
        %v3453 = vpop.f32.mrf.mxu0
        %v3454 = vadd.f32 %v3381, %v3453
        %v3455 = vpop.f32.mrf.mxu0
        %3456 = vdwg.mxu0
        %v3457 = vadd.f32 %v3454, %v1586
        %3458 = vst.msk [vmem:[%s258 + $0x18] sm:$0xff] %vm388, %v3457
        %v3459 = vld [vmem:[%s1193] sm:$0xff]
        %v3460 = vld [vmem:[%s1193 + $0x8] sm:$0xf]
        %v3461 = vld [vmem:[%s1308] sm:$0xff]
        %v3462 = vld [vmem:[%s1308 + $0x8] sm:$0xf]
        %v3464 = vsel %vm386, %v3462, 0
        %3466 = vmatprep.subr.mxu0 0.0
        %3467 = vmatpush1.msra.mxu0 0.0
        %3468 = vmatprep.subr.mxu0 0.0
        %3469 = vmatpush1.msra.mxu0 0.0
        %3470 = vmatprep.subr.mxu0 0.0
        %3471 = vmatpush1.msra.mxu0 0.0
        %3472 = vmatprep.subr.mxu0 0.0
        %3473 = vmatpush1.msra.mxu0 0.0
        %3474 = vmatprep.subr.mxu0 0.0
        %3475 = vmatpush1.msra.mxu0 0.0
        %3476 = vmatprep.subr.mxu0 0.0
        %3477 = vmatpush1.msra.mxu0 0.0
        %3478 = vmatprep.subr.mxu0 0.0
        %3479 = vmatpush1.msra.mxu0 0.0
        %3480 = vmatprep.subr.mxu0 0.0
        %3481 = vmatpush1.msra.mxu0 0.0
        %3482 = vmatprep.subr.mxu0 0.0
        %3483 = vmatpush1.msra.mxu0 0.0
        %3484 = vmatprep.subr.mxu0 0.0
        %3485 = vmatpush1.msra.mxu0 0.0
        %3486 = vmatprep.subr.mxu0 0.0
        %3487 = vmatpush1.msra.mxu0 0.0
        %3488 = vmatprep.subr.mxu0 0.0
        %3489 = vmatpush1.msra.mxu0 0.0
        %3490 = vmatprep.subr.mxu0 0.0
        %3491 = vmatpush1.msra.mxu0 0.0
        %3492 = vmatprep.subr.mxu0 0.0
        %3493 = vmatpush1.msra.mxu0 0.0
        %3494 = vmatprep.subr.mxu0 0.0
        %3495 = vmatpush1.msra.mxu0 %v3464
        %3496 = vmatprep.subr.mxu0 0.0
        %3497 = vmatpush1.msra.mxu0 %v3461
        %3498 = vmatprep.subr.mxu0 0.0
        %3499 = vmatpush2.msra.mxu0 0.0
        %3500 = vmatprep.subr.mxu0 0.0
        %3501 = vmatpush2.msra.mxu0 0.0
        %3502 = vmatprep.subr.mxu0 0.0
        %3503 = vmatpush2.msra.mxu0 0.0
        %3504 = vmatprep.subr.mxu0 0.0
        %3505 = vmatpush2.msra.mxu0 0.0
        %3506 = vmatprep.subr.mxu0 0.0
        %3507 = vmatpush2.msra.mxu0 0.0
        %3508 = vmatprep.subr.mxu0 0.0
        %3509 = vmatpush2.msra.mxu0 0.0
        %3510 = vmatprep.subr.mxu0 0.0
        %3511 = vmatpush2.msra.mxu0 0.0
        %3512 = vmatprep.subr.mxu0 0.0
        %3513 = vmatpush2.msra.mxu0 0.0
        %3514 = vmatprep.subr.mxu0 0.0
        %3515 = vmatpush2.msra.mxu0 0.0
        %3516 = vmatprep.subr.mxu0 0.0
        %3517 = vmatpush2.msra.mxu0 0.0
        %3518 = vmatprep.subr.mxu0 0.0
        %3519 = vmatpush2.msra.mxu0 0.0
        %3520 = vmatprep.subr.mxu0 0.0
        %3521 = vmatpush2.msra.mxu0 0.0
        %3522 = vmatprep.subr.mxu0 0.0
        %3523 = vmatpush2.msra.mxu0 0.0
        %3524 = vmatprep.subr.mxu0 0.0
        %3525 = vmatpush2.msra.mxu0 0.0
        %3526 = vmatprep.subr.mxu0 0.0
        %3527 = vmatpush2.msra.mxu0 0.0
        %3528 = vmatprep.subr.mxu0 0.0
        %3529 = vmatpush2.msra.mxu0 0.0
        %3530 = vmatprep.mubr.f32.mxu0 0.0
        %3531 = vmatmul.mubr.f32.gmra.mxu0 %v1595
        %v3532 = vpop.f32.mrf.mxu0
        %v3533 = vadd.f32 0.0, %v3532
        %v3534 = vpop.f32.mrf.mxu0
        %3535 = vdwg.mxu0
        %v3537 = vsel %vm386, %v3460, 0
        %3539 = vmatprep.subr.mxu0 0.0
        %3540 = vmatpush1.msra.mxu0 0.0
        %3541 = vmatprep.subr.mxu0 0.0
        %3542 = vmatpush1.msra.mxu0 0.0
        %3543 = vmatprep.subr.mxu0 0.0
        %3544 = vmatpush1.msra.mxu0 0.0
        %3545 = vmatprep.subr.mxu0 0.0
        %3546 = vmatpush1.msra.mxu0 0.0
        %3547 = vmatprep.subr.mxu0 0.0
        %3548 = vmatpush1.msra.mxu0 0.0
        %3549 = vmatprep.subr.mxu0 0.0
        %3550 = vmatpush1.msra.mxu0 0.0
        %3551 = vmatprep.subr.mxu0 0.0
        %3552 = vmatpush1.msra.mxu0 0.0
        %3553 = vmatprep.subr.mxu0 0.0
        %3554 = vmatpush1.msra.mxu0 0.0
        %3555 = vmatprep.subr.mxu0 0.0
        %3556 = vmatpush1.msra.mxu0 0.0
        %3557 = vmatprep.subr.mxu0 0.0
        %3558 = vmatpush1.msra.mxu0 0.0
        %3559 = vmatprep.subr.mxu0 0.0
        %3560 = vmatpush1.msra.mxu0 0.0
        %3561 = vmatprep.subr.mxu0 0.0
        %3562 = vmatpush1.msra.mxu0 0.0
        %3563 = vmatprep.subr.mxu0 0.0
        %3564 = vmatpush1.msra.mxu0 0.0
        %3565 = vmatprep.subr.mxu0 0.0
        %3566 = vmatpush1.msra.mxu0 0.0
        %3567 = vmatprep.subr.mxu0 0.0
        %3568 = vmatpush1.msra.mxu0 %v3537
        %3569 = vmatprep.subr.mxu0 0.0
        %3570 = vmatpush1.msra.mxu0 %v3459
        %3571 = vmatprep.subr.mxu0 0.0
        %3572 = vmatpush2.msra.mxu0 0.0
        %3573 = vmatprep.subr.mxu0 0.0
        %3574 = vmatpush2.msra.mxu0 0.0
        %3575 = vmatprep.subr.mxu0 0.0
        %3576 = vmatpush2.msra.mxu0 0.0
        %3577 = vmatprep.subr.mxu0 0.0
        %3578 = vmatpush2.msra.mxu0 0.0
        %3579 = vmatprep.subr.mxu0 0.0
        %3580 = vmatpush2.msra.mxu0 0.0
        %3581 = vmatprep.subr.mxu0 0.0
        %3582 = vmatpush2.msra.mxu0 0.0
        %3583 = vmatprep.subr.mxu0 0.0
        %3584 = vmatpush2.msra.mxu0 0.0
        %3585 = vmatprep.subr.mxu0 0.0
        %3586 = vmatpush2.msra.mxu0 0.0
        %3587 = vmatprep.subr.mxu0 0.0
        %3588 = vmatpush2.msra.mxu0 0.0
        %3589 = vmatprep.subr.mxu0 0.0
        %3590 = vmatpush2.msra.mxu0 0.0
        %3591 = vmatprep.subr.mxu0 0.0
        %3592 = vmatpush2.msra.mxu0 0.0
        %3593 = vmatprep.subr.mxu0 0.0
        %3594 = vmatpush2.msra.mxu0 0.0
        %3595 = vmatprep.subr.mxu0 0.0
        %3596 = vmatpush2.msra.mxu0 0.0
        %3597 = vmatprep.subr.mxu0 0.0
        %3598 = vmatpush2.msra.mxu0 0.0
        %3599 = vmatprep.subr.mxu0 0.0
        %3600 = vmatpush2.msra.mxu0 0.0
        %3601 = vmatprep.subr.mxu0 0.0
        %3602 = vmatpush2.msra.mxu0 0.0
        %3603 = vmatprep.mubr.f32.mxu0 0.0
        %3604 = vmatmul.mubr.f32.gmra.mxu0 %v1671
        %v3605 = vpop.f32.mrf.mxu0
        %v3606 = vadd.f32 %v3533, %v3605
        %v3607 = vpop.f32.mrf.mxu0
        %3608 = vdwg.mxu0
        %v3609 = vadd.f32 %v3606, %v1586
        %3611 = vrot.lane.b32.xlu0 %v3609, 32
        %v3612 = vpop.permute.xlu0 %3611
        %3614 = vst.msk [vmem:[%s258 + $0x18] sm:$0xff] %vm1751, %v3612
        %v3615 = vld [vmem:[%s1193] sm:$0xff]
        %v3616 = vld [vmem:[%s1193 + $0x8] sm:$0xf]
        %v3617 = vld [vmem:[%s1308] sm:$0xff]
        %v3618 = vld [vmem:[%s1308 + $0x8] sm:$0xf]
        %v3620 = vsel %vm386, %v3618, 0
        %3622 = vmatprep.subr.mxu0 0.0
        %3623 = vmatpush1.msra.mxu0 0.0
        %3624 = vmatprep.subr.mxu0 0.0
        %3625 = vmatpush1.msra.mxu0 0.0
        %3626 = vmatprep.subr.mxu0 0.0
        %3627 = vmatpush1.msra.mxu0 0.0
        %3628 = vmatprep.subr.mxu0 0.0
        %3629 = vmatpush1.msra.mxu0 0.0
        %3630 = vmatprep.subr.mxu0 0.0
        %3631 = vmatpush1.msra.mxu0 0.0
        %3632 = vmatprep.subr.mxu0 0.0
        %3633 = vmatpush1.msra.mxu0 0.0
        %3634 = vmatprep.subr.mxu0 0.0
        %3635 = vmatpush1.msra.mxu0 0.0
        %3636 = vmatprep.subr.mxu0 0.0
        %3637 = vmatpush1.msra.mxu0 0.0
        %3638 = vmatprep.subr.mxu0 0.0
        %3639 = vmatpush1.msra.mxu0 0.0
        %3640 = vmatprep.subr.mxu0 0.0
        %3641 = vmatpush1.msra.mxu0 0.0
        %3642 = vmatprep.subr.mxu0 0.0
        %3643 = vmatpush1.msra.mxu0 0.0
        %3644 = vmatprep.subr.mxu0 0.0
        %3645 = vmatpush1.msra.mxu0 0.0
        %3646 = vmatprep.subr.mxu0 0.0
        %3647 = vmatpush1.msra.mxu0 0.0
        %3648 = vmatprep.subr.mxu0 0.0
        %3649 = vmatpush1.msra.mxu0 0.0
        %3650 = vmatprep.subr.mxu0 0.0
        %3651 = vmatpush1.msra.mxu0 %v3620
        %3652 = vmatprep.subr.mxu0 0.0
        %3653 = vmatpush1.msra.mxu0 %v3617
        %3654 = vmatprep.subr.mxu0 0.0
        %3655 = vmatpush2.msra.mxu0 0.0
        %3656 = vmatprep.subr.mxu0 0.0
        %3657 = vmatpush2.msra.mxu0 0.0
        %3658 = vmatprep.subr.mxu0 0.0
        %3659 = vmatpush2.msra.mxu0 0.0
        %3660 = vmatprep.subr.mxu0 0.0
        %3661 = vmatpush2.msra.mxu0 0.0
        %3662 = vmatprep.subr.mxu0 0.0
        %3663 = vmatpush2.msra.mxu0 0.0
        %3664 = vmatprep.subr.mxu0 0.0
        %3665 = vmatpush2.msra.mxu0 0.0
        %3666 = vmatprep.subr.mxu0 0.0
        %3667 = vmatpush2.msra.mxu0 0.0
        %3668 = vmatprep.subr.mxu0 0.0
        %3669 = vmatpush2.msra.mxu0 0.0
        %3670 = vmatprep.subr.mxu0 0.0
        %3671 = vmatpush2.msra.mxu0 0.0
        %3672 = vmatprep.subr.mxu0 0.0
        %3673 = vmatpush2.msra.mxu0 0.0
        %3674 = vmatprep.subr.mxu0 0.0
        %3675 = vmatpush2.msra.mxu0 0.0
        %3676 = vmatprep.subr.mxu0 0.0
        %3677 = vmatpush2.msra.mxu0 0.0
        %3678 = vmatprep.subr.mxu0 0.0
        %3679 = vmatpush2.msra.mxu0 0.0
        %3680 = vmatprep.subr.mxu0 0.0
        %3681 = vmatpush2.msra.mxu0 0.0
        %3682 = vmatprep.subr.mxu0 0.0
        %3683 = vmatpush2.msra.mxu0 0.0
        %3684 = vmatprep.subr.mxu0 0.0
        %3685 = vmatpush2.msra.mxu0 0.0
        %3686 = vmatprep.mubr.f32.mxu0 0.0
        %3687 = vmatmul.mubr.f32.gmra.mxu0 %v1432
        %v3688 = vpop.f32.mrf.mxu0
        %v3689 = vadd.f32 0.0, %v3688
        %v3690 = vpop.f32.mrf.mxu0
        %3691 = vdwg.mxu0
        %v3693 = vsel %vm386, %v3616, 0
        %3695 = vmatprep.subr.mxu0 0.0
        %3696 = vmatpush1.msra.mxu0 0.0
        %3697 = vmatprep.subr.mxu0 0.0
        %3698 = vmatpush1.msra.mxu0 0.0
        %3699 = vmatprep.subr.mxu0 0.0
        %3700 = vmatpush1.msra.mxu0 0.0
        %3701 = vmatprep.subr.mxu0 0.0
        %3702 = vmatpush1.msra.mxu0 0.0
        %3703 = vmatprep.subr.mxu0 0.0
        %3704 = vmatpush1.msra.mxu0 0.0
        %3705 = vmatprep.subr.mxu0 0.0
        %3706 = vmatpush1.msra.mxu0 0.0
        %3707 = vmatprep.subr.mxu0 0.0
        %3708 = vmatpush1.msra.mxu0 0.0
        %3709 = vmatprep.subr.mxu0 0.0
        %3710 = vmatpush1.msra.mxu0 0.0
        %3711 = vmatprep.subr.mxu0 0.0
        %3712 = vmatpush1.msra.mxu0 0.0
        %3713 = vmatprep.subr.mxu0 0.0
        %3714 = vmatpush1.msra.mxu0 0.0
        %3715 = vmatprep.subr.mxu0 0.0
        %3716 = vmatpush1.msra.mxu0 0.0
        %3717 = vmatprep.subr.mxu0 0.0
        %3718 = vmatpush1.msra.mxu0 0.0
        %3719 = vmatprep.subr.mxu0 0.0
        %3720 = vmatpush1.msra.mxu0 0.0
        %3721 = vmatprep.subr.mxu0 0.0
        %3722 = vmatpush1.msra.mxu0 0.0
        %3723 = vmatprep.subr.mxu0 0.0
        %3724 = vmatpush1.msra.mxu0 %v3693
        %3725 = vmatprep.subr.mxu0 0.0
        %3726 = vmatpush1.msra.mxu0 %v3615
        %3727 = vmatprep.subr.mxu0 0.0
        %3728 = vmatpush2.msra.mxu0 0.0
        %3729 = vmatprep.subr.mxu0 0.0
        %3730 = vmatpush2.msra.mxu0 0.0
        %3731 = vmatprep.subr.mxu0 0.0
        %3732 = vmatpush2.msra.mxu0 0.0
        %3733 = vmatprep.subr.mxu0 0.0
        %3734 = vmatpush2.msra.mxu0 0.0
        %3735 = vmatprep.subr.mxu0 0.0
        %3736 = vmatpush2.msra.mxu0 0.0
        %3737 = vmatprep.subr.mxu0 0.0
        %3738 = vmatpush2.msra.mxu0 0.0
        %3739 = vmatprep.subr.mxu0 0.0
        %3740 = vmatpush2.msra.mxu0 0.0
        %3741 = vmatprep.subr.mxu0 0.0
        %3742 = vmatpush2.msra.mxu0 0.0
        %3743 = vmatprep.subr.mxu0 0.0
        %3744 = vmatpush2.msra.mxu0 0.0
        %3745 = vmatprep.subr.mxu0 0.0
        %3746 = vmatpush2.msra.mxu0 0.0
        %3747 = vmatprep.subr.mxu0 0.0
        %3748 = vmatpush2.msra.mxu0 0.0
        %3749 = vmatprep.subr.mxu0 0.0
        %3750 = vmatpush2.msra.mxu0 0.0
        %3751 = vmatprep.subr.mxu0 0.0
        %3752 = vmatpush2.msra.mxu0 0.0
        %3753 = vmatprep.subr.mxu0 0.0
        %3754 = vmatpush2.msra.mxu0 0.0
        %3755 = vmatprep.subr.mxu0 0.0
        %3756 = vmatpush2.msra.mxu0 0.0
        %3757 = vmatprep.subr.mxu0 0.0
        %3758 = vmatpush2.msra.mxu0 0.0
        %3759 = vmatprep.mubr.f32.mxu0 0.0
        %3760 = vmatmul.mubr.f32.gmra.mxu0 %v1508
        %v3761 = vpop.f32.mrf.mxu0
        %v3762 = vadd.f32 %v3689, %v3761
        %v3763 = vpop.f32.mrf.mxu0
        %3764 = vdwg.mxu0
        %v3765 = vadd.f32 %v3762, %v1586
        %3767 = vrot.lane.b32.xlu0 %v3765, 64
        %v3768 = vpop.permute.xlu0 %3767
        %3770 = vst.msk [vmem:[%s258 + $0x18] sm:$0xff] %vm1908, %v3768
        %v3771 = vld [vmem:[%s1308] sm:$0xff]
        %v3772 = vld [vmem:[%s1308 + $0x8] sm:$0xf]
        %v3773 = vld [vmem:[%s1423] sm:$0xff]
        %v3774 = vld [vmem:[%s1423 + $0x8] sm:$0xf]
        %v3776 = vsel %vm386, %v3774, 0
        %3778 = vmatprep.subr.mxu0 0.0
        %3779 = vmatpush1.msra.mxu0 0.0
        %3780 = vmatprep.subr.mxu0 0.0
        %3781 = vmatpush1.msra.mxu0 0.0
        %3782 = vmatprep.subr.mxu0 0.0
        %3783 = vmatpush1.msra.mxu0 0.0
        %3784 = vmatprep.subr.mxu0 0.0
        %3785 = vmatpush1.msra.mxu0 0.0
        %3786 = vmatprep.subr.mxu0 0.0
        %3787 = vmatpush1.msra.mxu0 0.0
        %3788 = vmatprep.subr.mxu0 0.0
        %3789 = vmatpush1.msra.mxu0 0.0
        %3790 = vmatprep.subr.mxu0 0.0
        %3791 = vmatpush1.msra.mxu0 0.0
        %3792 = vmatprep.subr.mxu0 0.0
        %3793 = vmatpush1.msra.mxu0 0.0
        %3794 = vmatprep.subr.mxu0 0.0
        %3795 = vmatpush1.msra.mxu0 0.0
        %3796 = vmatprep.subr.mxu0 0.0
        %3797 = vmatpush1.msra.mxu0 0.0
        %3798 = vmatprep.subr.mxu0 0.0
        %3799 = vmatpush1.msra.mxu0 0.0
        %3800 = vmatprep.subr.mxu0 0.0
        %3801 = vmatpush1.msra.mxu0 0.0
        %3802 = vmatprep.subr.mxu0 0.0
        %3803 = vmatpush1.msra.mxu0 0.0
        %3804 = vmatprep.subr.mxu0 0.0
        %3805 = vmatpush1.msra.mxu0 0.0
        %3806 = vmatprep.subr.mxu0 0.0
        %3807 = vmatpush1.msra.mxu0 %v3776
        %3808 = vmatprep.subr.mxu0 0.0
        %3809 = vmatpush1.msra.mxu0 %v3773
        %3810 = vmatprep.subr.mxu0 0.0
        %3811 = vmatpush2.msra.mxu0 0.0
        %3812 = vmatprep.subr.mxu0 0.0
        %3813 = vmatpush2.msra.mxu0 0.0
        %3814 = vmatprep.subr.mxu0 0.0
        %3815 = vmatpush2.msra.mxu0 0.0
        %3816 = vmatprep.subr.mxu0 0.0
        %3817 = vmatpush2.msra.mxu0 0.0
        %3818 = vmatprep.subr.mxu0 0.0
        %3819 = vmatpush2.msra.mxu0 0.0
        %3820 = vmatprep.subr.mxu0 0.0
        %3821 = vmatpush2.msra.mxu0 0.0
        %3822 = vmatprep.subr.mxu0 0.0
        %3823 = vmatpush2.msra.mxu0 0.0
        %3824 = vmatprep.subr.mxu0 0.0
        %3825 = vmatpush2.msra.mxu0 0.0
        %3826 = vmatprep.subr.mxu0 0.0
        %3827 = vmatpush2.msra.mxu0 0.0
        %3828 = vmatprep.subr.mxu0 0.0
        %3829 = vmatpush2.msra.mxu0 0.0
        %3830 = vmatprep.subr.mxu0 0.0
        %3831 = vmatpush2.msra.mxu0 0.0
        %3832 = vmatprep.subr.mxu0 0.0
        %3833 = vmatpush2.msra.mxu0 0.0
        %3834 = vmatprep.subr.mxu0 0.0
        %3835 = vmatpush2.msra.mxu0 0.0
        %3836 = vmatprep.subr.mxu0 0.0
        %3837 = vmatpush2.msra.mxu0 0.0
        %3838 = vmatprep.subr.mxu0 0.0
        %3839 = vmatpush2.msra.mxu0 0.0
        %3840 = vmatprep.subr.mxu0 0.0
        %3841 = vmatpush2.msra.mxu0 0.0
        %3842 = vmatprep.mubr.f32.mxu0 0.0
        %3843 = vmatmul.mubr.f32.gmra.mxu0 %v1595
        %v3844 = vpop.f32.mrf.mxu0
        %v3845 = vadd.f32 0.0, %v3844
        %v3846 = vpop.f32.mrf.mxu0
        %3847 = vdwg.mxu0
        %v3849 = vsel %vm386, %v3772, 0
        %3851 = vmatprep.subr.mxu0 0.0
        %3852 = vmatpush1.msra.mxu0 0.0
        %3853 = vmatprep.subr.mxu0 0.0
        %3854 = vmatpush1.msra.mxu0 0.0
        %3855 = vmatprep.subr.mxu0 0.0
        %3856 = vmatpush1.msra.mxu0 0.0
        %3857 = vmatprep.subr.mxu0 0.0
        %3858 = vmatpush1.msra.mxu0 0.0
        %3859 = vmatprep.subr.mxu0 0.0
        %3860 = vmatpush1.msra.mxu0 0.0
        %3861 = vmatprep.subr.mxu0 0.0
        %3862 = vmatpush1.msra.mxu0 0.0
        %3863 = vmatprep.subr.mxu0 0.0
        %3864 = vmatpush1.msra.mxu0 0.0
        %3865 = vmatprep.subr.mxu0 0.0
        %3866 = vmatpush1.msra.mxu0 0.0
        %3867 = vmatprep.subr.mxu0 0.0
        %3868 = vmatpush1.msra.mxu0 0.0
        %3869 = vmatprep.subr.mxu0 0.0
        %3870 = vmatpush1.msra.mxu0 0.0
        %3871 = vmatprep.subr.mxu0 0.0
        %3872 = vmatpush1.msra.mxu0 0.0
        %3873 = vmatprep.subr.mxu0 0.0
        %3874 = vmatpush1.msra.mxu0 0.0
        %3875 = vmatprep.subr.mxu0 0.0
        %3876 = vmatpush1.msra.mxu0 0.0
        %3877 = vmatprep.subr.mxu0 0.0
        %3878 = vmatpush1.msra.mxu0 0.0
        %3879 = vmatprep.subr.mxu0 0.0
        %3880 = vmatpush1.msra.mxu0 %v3849
        %3881 = vmatprep.subr.mxu0 0.0
        %3882 = vmatpush1.msra.mxu0 %v3771
        %3883 = vmatprep.subr.mxu0 0.0
        %3884 = vmatpush2.msra.mxu0 0.0
        %3885 = vmatprep.subr.mxu0 0.0
        %3886 = vmatpush2.msra.mxu0 0.0
        %3887 = vmatprep.subr.mxu0 0.0
        %3888 = vmatpush2.msra.mxu0 0.0
        %3889 = vmatprep.subr.mxu0 0.0
        %3890 = vmatpush2.msra.mxu0 0.0
        %3891 = vmatprep.subr.mxu0 0.0
        %3892 = vmatpush2.msra.mxu0 0.0
        %3893 = vmatprep.subr.mxu0 0.0
        %3894 = vmatpush2.msra.mxu0 0.0
        %3895 = vmatprep.subr.mxu0 0.0
        %3896 = vmatpush2.msra.mxu0 0.0
        %3897 = vmatprep.subr.mxu0 0.0
        %3898 = vmatpush2.msra.mxu0 0.0
        %3899 = vmatprep.subr.mxu0 0.0
        %3900 = vmatpush2.msra.mxu0 0.0
        %3901 = vmatprep.subr.mxu0 0.0
        %3902 = vmatpush2.msra.mxu0 0.0
        %3903 = vmatprep.subr.mxu0 0.0
        %3904 = vmatpush2.msra.mxu0 0.0
        %3905 = vmatprep.subr.mxu0 0.0
        %3906 = vmatpush2.msra.mxu0 0.0
        %3907 = vmatprep.subr.mxu0 0.0
        %3908 = vmatpush2.msra.mxu0 0.0
        %3909 = vmatprep.subr.mxu0 0.0
        %3910 = vmatpush2.msra.mxu0 0.0
        %3911 = vmatprep.subr.mxu0 0.0
        %3912 = vmatpush2.msra.mxu0 0.0
        %3913 = vmatprep.subr.mxu0 0.0
        %3914 = vmatpush2.msra.mxu0 0.0
        %3915 = vmatprep.mubr.f32.mxu0 0.0
        %3916 = vmatmul.mubr.f32.gmra.mxu0 %v1671
        %v3917 = vpop.f32.mrf.mxu0
        %v3918 = vadd.f32 %v3845, %v3917
        %v3919 = vpop.f32.mrf.mxu0
        %3920 = vdwg.mxu0
        %v3921 = vadd.f32 %v3918, %v1586
        %3923 = vrot.lane.b32.xlu0 %v3921, 96
        %v3924 = vpop.permute.xlu0 %3923
        %3926 = vst.msk [vmem:[%s258 + $0x18] sm:$0xff] %vm2065, %v3924
        %s3927 = sand.u32 %s133, 1
        %s3928 = scalar_lea.sflag [#allocation5], %s3927
        %s3929 = sand.u32 %s133, 1
        %s3930 = smul.addr %s3929, 32
        %s3931 = scalar_lea.vmem [#allocation9], %s3930
        // Predicated region
        $region49: #{tpu_custom_call.1} parent=35 // pred_check
          %p3932 = pneg %p143
        $region50: #{tpu_custom_call.1} parent=35 // pred_check_branch
          %3934 = sbr.rel (%p3932) target = $region52
        $region51: #{tpu_custom_call.1} parent=35 // pred_region
          %s3935 = smul.u32 4, %s27
          %s3937 = ssub.s32 512, 512
          %3938 = vsyncadd %s3928, %s3937
          %s3939 = smul.addr %s26, 8
          %s3940 = sadd.s32 %s3935, %s3939
          %s3941 = smul.addr %s3940, 128
          %s3942 = scalar_lea.hbm %s4, %s3941
          %s3944 = sshll.u32 %s3931, 4
          %s3945 = int_to_ptr.vmem [resolvable:$true] %s3944
          %3947 = dma.vmem_to_hbm [thread:$0]  %s3945, 512, %s3942, %s3928
        $region52: #{tpu_custom_call.1} parent=35 // pred_fallthru
          _
      $region36: #{tpu_custom_call.1} parent=5 // pred_fallthru
        _
      %p3948 = scmp.le.s32.totalorder 2, %s17
      // Predicated region
      $region53: #{tpu_custom_call.1} parent=5 // pred_check
        %p3949 = pneg %p3948
      $region54: #{tpu_custom_call.1} parent=5 // pred_check_branch
        %3951 = sbr.rel (%p3949) target = $region56
      $region55: #{tpu_custom_call.1} parent=5 // pred_region
        %s3952 = ssub.s32 %s17, 2
        // Predicated region
        $region57: #{tpu_custom_call.1} parent=55 // pred_check
          %p3953 = pneg %p149
        $region58: #{tpu_custom_call.1} parent=55 // pred_check_branch
          %3955 = sbr.rel (%p3953) target = $region60
        $region59: #{tpu_custom_call.1} parent=55 // pred_region
          %s3956 = sand.u32 %s134, 1
          %s3957 = scalar_lea.sflag [#allocation5], %s3956
          %s3958 = sand.u32 %s134, 1
          %s3959 = smul.addr %s3958, 32
          %s3960 = scalar_lea.vmem [#allocation9], %s3959
          %3961 = dma.done %s3957, 512
        $region60: #{tpu_custom_call.1} parent=55 // pred_fallthru
          _
      $region56: #{tpu_custom_call.1} parent=5 // pred_fallthru
        _
    $region6: #{tpu_custom_call.1} parent=1 // loop_footer
      %s21 = sadd.s32 1, %s17
    $region7: #{tpu_custom_call.1} parent=1 // loop_footer_branch
      %16 = sbr.rel target = $region3
    $region8: #{tpu_custom_call.1} parent=1 // loop_exit
      _
    %3962 = vsyncpa [#allocation4], 1
    %s3963 = scalar_lea.sflag [#allocation4], 1
    %3964 = vsyncpa %s3963, 1
    %3965 = vsyncpa [#allocation7], 1
    %3966 = vsyncpa [#allocation5], 1
    %s3967 = scalar_lea.sflag [#allocation5], 1
    %3968 = vsyncpa %s3967, 1

</llo_original>
